<compile_context>
chip_gen: v5e
topology: v5e:2x2
jax: 0.10.0
libtpu: 0.0.40
codegen_flags: <defaults>
</compile_context>

<pallas_src>
import jax
import jax.numpy as jnp
from jax.experimental import pallas as pl
from jax.experimental.pallas import tpu as pltpu


# ---------------------------------------------------------------------------
# Kernel
# ---------------------------------------------------------------------------
def lstm_trading_kernel(xg_ref, whh1_ref, w2_ref, b2_ref, fcw_ref, fcb_ref, out_ref):
    """Serial 2-layer LSTM recurrence + final linear layer.

    xg_ref  : (T, B, 4Hp) f32   precomputed layer-1 input gates:  x @ Wih1 + b1
                                (i/f/o columns pre-scaled by 0.5, see below)
    whh1_ref: (Hp, 4Hp)   bf16  layer-1 hidden->gates  (i/f/o cols pre-scaled 0.5)
    w2_ref  : (2Hp, 4Hp)  bf16  layer-2 stacked [Wih2; Whh2] (i/f/o pre-scaled 0.5)
    b2_ref  : (1, 4Hp)    f32   layer-2 bias (b_ih + b_hh, i/f/o pre-scaled 0.5)
    fcw_ref : (Hp, Op)    bf16  final linear weight (padded rows/cols = 0)
    fcb_ref : (1, Op)     f32   final linear bias (padded cols = 0)
    out_ref : (B, Op)     f32   output (wrapper slices back to the true O columns)

    Gate order along the 4Hp axis: i, f, g, o (each block width Hp, lane-aligned).
    Padded lanes (H..Hp) of h/c stay exactly zero because their weights/biases are
    zero AND the initial hidden/cell states are zero (as in the PyTorch module);
    tanh(0)=0 keeps h's padded lanes at 0 and c's padded lanes at 0 every step.
    """
    T, B, G = xg_ref.shape
    Hp = G // 4
    cdt = whh1_ref.dtype

    # Hoisted broadcast: JAX does not CSE broadcast_in_dim inside the unrolled loop.
    b2 = jnp.broadcast_to(b2_ref[...], (B, G))

    def gates_to_hc(g, c):
        # i/f/o pre-activations arrive pre-scaled by 0.5, so a single tanh over
        # the whole (B, 4Hp) block yields:
        #   sigmoid(x) = 0.5 * tanh(x/2) + 0.5    (i, f, o gates)
        #   tanh(x)                                (g gate, unscaled)
        # One EUP pass instead of 3 sigmoids + 1 tanh; the 0.5*t + 0.5 recovery
        # runs on the 4-slot VPU (free filler next to the EUP/MXU work).
        t = jnp.tanh(g)
        i_g = 0.5 * t[:, 0 * Hp:1 * Hp] + 0.5
        f_g = 0.5 * t[:, 1 * Hp:2 * Hp] + 0.5
        g_g = t[:, 2 * Hp:3 * Hp]
        o_g = 0.5 * t[:, 3 * Hp:4 * Hp] + 0.5
        c_new = f_g * c + i_g * g_g
        h_new = o_g * jnp.tanh(c_new)
        # Cast h to the MXU compute dtype exactly once per step; this value feeds
        # both the next step's whh1 dot and the layer-2 hcat.  c stays f32.
        return h_new.astype(cdt), c_new

    h1 = jnp.zeros((B, Hp), cdt)
    c1 = jnp.zeros((B, Hp), jnp.float32)
    h2 = jnp.zeros((B, Hp), cdt)
    c2 = jnp.zeros((B, Hp), jnp.float32)

    # Fully unrolled time loop (T is static and small) — the LLO scheduler can
    # overlap step t's elementwise/EUP tail with step t+1's MXU push.
    # Weight refs are read at the dot call sites (NOT materialized once up top):
    # materializing w2 (64 bf16 vregs) + whh1 (32 vregs) as live values across the
    # whole unrolled body would exceed the 64-vreg file and spill to VMEM anyway.
    for t in range(T):
        # Layer 1: only the hidden matmul remains on the serial chain.
        g1 = xg_ref[t] + jnp.dot(h1, whh1_ref[...],
                                 preferred_element_type=jnp.float32)
        h1, c1 = gates_to_hc(g1, c1)

        # Layer 2: fused input+hidden matmul via pre-stacked [Wih2; Whh2].
        # (Inter-layer dropout = identity at inference.)
        hcat = jnp.concatenate([h1, h2], axis=-1)                  # (B, 2Hp) bf16
        g2 = jnp.dot(hcat, w2_ref[...],
                     preferred_element_type=jnp.float32) + b2
        h2, c2 = gates_to_hc(g2, c2)

    # Final linear on the last-step layer-2 hidden state (nn.Dropout = identity).
    # Output columns are padded O=1 -> Op=128 so this is a lane-dense store.
    out_ref[...] = (jnp.dot(h2, fcw_ref[...], preferred_element_type=jnp.float32)
                    + fcb_ref[...]).astype(out_ref.dtype)


# ---------------------------------------------------------------------------
# Wrapper
# ---------------------------------------------------------------------------
def lstm_trading_forward(x, prep):
    """x: (B, T, I) batch_first, like the PyTorch module. Returns (B, O)."""
    B, T, I = x.shape
    Op = prep["fcw"].shape[1]
    O = prep["out_size"]

    # Hoisted layer-1 input projection: one (T*B, I)x(I, 4Hp) matmul for all
    # timesteps, with b1 folded in.  Output is time-major (T, B, 4Hp) so the
    # kernel's sequential loop indexes the leading axis.
    # NOTE: at this toy size the einsum could be fused into the kernel to save one
    # HLO op + one HBM round-trip of xg; at production B the hoist is the right
    # call (see review) so it is kept here.
    xg = (jnp.einsum("bti,ig->tbg", x.astype(jnp.float32), prep["wih1"],
                     preferred_element_type=jnp.float32)
          + prep["b1"])

    out_padded = pl.pallas_call(
        lstm_trading_kernel,
        out_shape=jax.ShapeDtypeStruct((B, Op), jnp.float32),
        in_specs=[pl.BlockSpec(memory_space=pltpu.MemorySpace.VMEM)] * 6,
        out_specs=pl.BlockSpec(memory_space=pltpu.MemorySpace.VMEM),
    )(xg, prep["whh1"], prep["w2"], prep["b2"], prep["fcw"], prep["fcb"])
    return out_padded[:, :O]


# ---------------------------------------------------------------------------
# Parameter construction / one-time preparation
# ---------------------------------------------------------------------------
def init_params(key, input_size=16, hidden_size=50, output_size=1):
    """Deterministic synthetic parameters with the shapes nn.LSTM/nn.Linear imply
    (weights pre-transposed to (in_dim, 4H); per-layer biases b_ih+b_hh pre-summed)."""
    ks = jax.random.split(key, 10)
    s = 0.1
    H, I, O = hidden_size, input_size, output_size
    return {
        "wih1": jax.random.normal(ks[0], (I, 4 * H), jnp.float32) * s,
        "whh1": jax.random.normal(ks[1], (H, 4 * H), jnp.float32) * s,
        "b1":   jax.random.normal(ks[2], (1, 4 * H), jnp.float32) * s,
        "wih2": jax.random.normal(ks[3], (H, 4 * H), jnp.float32) * s,
        "whh2": jax.random.normal(ks[4], (H, 4 * H), jnp.float32) * s,
        "b2":   jax.random.normal(ks[5], (1, 4 * H), jnp.float32) * s,
        "fcw":  jax.random.normal(ks[6], (H, O), jnp.float32) * s,
        "fcb":  jax.random.normal(ks[7], (1, O), jnp.float32) * s,
    }


def prepare_params(params, hidden_pad=128, out_pad=128, compute_dtype=jnp.bfloat16):
    """One-time (outside the hot path) weight prep:
      * zero-pad hidden size H -> Hp=128 so gate slices are lane-aligned,
      * pre-scale the i/f/o gate columns of every weight/bias by 0.5 so the kernel
        can use a single tanh per layer-step (sigmoid(x) = 0.5*tanh(x/2) + 0.5),
      * stack layer-2 [Wih2; Whh2] into a single (2Hp, 4Hp) matrix,
      * cast MXU operands to bf16 (accumulation stays f32 in the kernel),
      * keep biases in f32,
      * zero-pad the final linear output O -> Op=128 for a lane-dense store.
    Padded weight rows/columns are zero, so results match the unpadded model."""
    H = params["whh1"].shape[0]
    I = params["wih1"].shape[0]
    O = params["fcw"].shape[1]
    Hp = hidden_pad
    Op = out_pad
    assert Hp >= H and Op >= O

    # sigmoid-as-tanh rewrite: scale i, f, o gate blocks by 0.5; leave g unscaled.
    gate_scale = jnp.array([0.5, 0.5, 1.0, 0.5], jnp.float32).reshape(1, 4, 1)

    def pad_gates(w, row_pad):
        # (rows, 4H) -> (row_pad, 4Hp): each i/f/g/o block padded H -> Hp with
        # zeros, i/f/o blocks pre-scaled by 0.5.
        r = w.shape[0]
        w4 = w.reshape(r, 4, H) * gate_scale
        out = jnp.zeros((row_pad, 4, Hp), jnp.float32).at[:r, :, :H].set(w4)
        return out.reshape(row_pad, 4 * Hp)

    wih1_p = pad_gates(params["wih1"], I)             # (I, 4Hp)  used wrapper-side
    b1_p = pad_gates(params["b1"], 1)                 # (1, 4Hp)
    whh1_p = pad_gates(params["whh1"], Hp)            # (Hp, 4Hp)
    wih2_p = pad_gates(params["wih2"], Hp)            # (Hp, 4Hp)
    whh2_p = pad_gates(params["whh2"], Hp)            # (Hp, 4Hp)
    b2_p = pad_gates(params["b2"], 1)                 # (1, 4Hp)
    w2_p = jnp.concatenate([wih2_p, whh2_p], axis=0)  # (2Hp, 4Hp)
    fcw_p = jnp.zeros((Hp, Op), jnp.float32).at[:H, :O].set(params["fcw"])
    fcb_p = jnp.zeros((1, Op), jnp.float32).at[:, :O].set(params["fcb"])

    return {
        "wih1": wih1_p,                               # f32 (big hoisted matmul)
        "b1":   b1_p,                                 # f32
        "whh1": whh1_p.astype(compute_dtype),         # bf16 MXU operand
        "w2":   w2_p.astype(compute_dtype),           # bf16 MXU operand
        "b2":   b2_p,                                 # f32
        "fcw":  fcw_p.astype(compute_dtype),          # bf16 MXU operand
        "fcb":  fcb_p,                                # f32
        "out_size": O,
    }


# ---------------------------------------------------------------------------
# Pure-JAX reference (original, unpadded f32 math; eval-mode dropout)
# ---------------------------------------------------------------------------
def reference_forward(x, params):
    B, T, I = x.shape
    H = params["whh1"].shape[0]

    def cell(xt, h, c, wih, whh, b):
        g = xt @ wih + h @ whh + b
        i = jax.nn.sigmoid(g[:, 0 * H:1 * H])
        f = jax.nn.sigmoid(g[:, 1 * H:2 * H])
        gg = jnp.tanh(g[:, 2 * H:3 * H])
        o = jax.nn.sigmoid(g[:, 3 * H:4 * H])
        c = f * c + i * gg
        return o * jnp.tanh(c), c

    h1 = c1 = h2 = c2 = jnp.zeros((B, H), jnp.float32)
    for t in range(T):
        xt = x[:, t, :]
        h1, c1 = cell(xt, h1, c1, params["wih1"], params["whh1"], params["b1"])
        h2, c2 = cell(h1, h2, c2, params["wih2"], params["whh2"], params["b2"])
    return h2 @ params["fcw"] + params["fcb"]


if __name__ == "__main__":
    key = jax.random.PRNGKey(0)
    k_x, k_p = jax.random.split(key)

    batch, seq, input_size, hidden_size, output_size = 2, 8, 16, 50, 1
    x = jax.random.normal(k_x, (batch, seq, input_size), jnp.float32)
    params = init_params(k_p, input_size, hidden_size, output_size)
    prep = prepare_params(params)          # one-time weight prep (pad/scale/stack/bf16)

    out = lstm_trading_forward(x, prep)
    out = jax.block_until_ready(out)

    ref = reference_forward(x, params)
    assert out.shape == (batch, output_size)
    # Tolerance accounts for bf16 MXU operands vs the f32 reference (the
    # sigmoid-as-tanh rewrite is mathematically exact; only ULP-level changes).
    assert jnp.allclose(out, ref, rtol=2e-2, atol=2e-2), (out, ref)

    print("KERNEL_OK")
</pallas_src>

<mosaic_0001>
module attributes {stable_mosaic.version = 11 : i64} {
  func.func @lstm_trading_kernel(%arg0: memref<8x2x512xf32, #tpu.memory_space<vmem>>, %arg1: memref<128x512xbf16, #tpu.memory_space<vmem>>, %arg2: memref<256x512xbf16, #tpu.memory_space<vmem>>, %arg3: memref<1x512xf32, #tpu.memory_space<vmem>>, %arg4: memref<128x128xbf16, #tpu.memory_space<vmem>>, %arg5: memref<1x128xf32, #tpu.memory_space<vmem>>, %arg6: memref<2x128xf32, #tpu.memory_space<vmem>>) attributes {dimension_semantics = [], scalar_prefetch = 0 : i64, scratch_operands = 0 : i64, tpu.core_type = #tpu.core_type<tc>} {
    %c0 = arith.constant 0 : index
    %c0_0 = arith.constant 0 : index
    %0 = vector.load %arg3[%c0, %c0_0] : memref<1x512xf32, #tpu.memory_space<vmem>>, vector<1x512xf32>
    %1 = vector.shape_cast %0 : vector<1x512xf32> to vector<1x512xf32>
    %2 = vector.broadcast %1 : vector<1x512xf32> to vector<2x512xf32>
    %cst = arith.constant 0.000000e+00 : bf16
    %3 = vector.broadcast %cst : bf16 to vector<2x128xbf16>
    %cst_1 = arith.constant 0.000000e+00 : f32
    %4 = vector.broadcast %cst_1 : f32 to vector<2x128xf32>
    %cst_2 = arith.constant 0.000000e+00 : bf16
    %5 = vector.broadcast %cst_2 : bf16 to vector<2x128xbf16>
    %cst_3 = arith.constant 0.000000e+00 : f32
    %6 = vector.broadcast %cst_3 : f32 to vector<2x128xf32>
    %c0_4 = arith.constant 0 : index
    %c0_5 = arith.constant 0 : index
    %c0_6 = arith.constant 0 : index
    %7 = vector.load %arg0[%c0_4, %c0_5, %c0_6] : memref<8x2x512xf32, #tpu.memory_space<vmem>>, vector<1x2x512xf32>
    %8 = vector.shape_cast %7 : vector<1x2x512xf32> to vector<2x512xf32>
    %c0_7 = arith.constant 0 : index
    %c0_8 = arith.constant 0 : index
    %9 = vector.load %arg1[%c0_7, %c0_8] : memref<128x512xbf16, #tpu.memory_space<vmem>>, vector<128x512xbf16>
    %cst_9 = arith.constant dense<0.000000e+00> : vector<2x512xf32>
    %10 = tpu.matmul %3, %9, %cst_9 {dimension_numbers = #tpu.dot_dimension_numbers<[1], [0], [0], [1], [0, 0, 1, 1], [], []>} : vector<2x128xbf16>, vector<128x512xbf16>, vector<2x512xf32> -> vector<2x512xf32>
    %11 = arith.addf %8, %10 : vector<2x512xf32>
    %12 = math.tanh %11 : vector<2x512xf32>
    %13 = vector.extract_strided_slice %12 {offsets = [0, 0], sizes = [2, 128], strides = [1, 1]} : vector<2x512xf32> to vector<2x128xf32>
    %cst_10 = arith.constant 5.000000e-01 : f32
    %14 = vector.broadcast %cst_10 : f32 to vector<2x128xf32>
    %15 = arith.mulf %14, %13 : vector<2x128xf32>
    %cst_11 = arith.constant 5.000000e-01 : f32
    %16 = vector.broadcast %cst_11 : f32 to vector<2x128xf32>
    %17 = arith.addf %15, %16 : vector<2x128xf32>
    %18 = vector.extract_strided_slice %12 {offsets = [0, 128], sizes = [2, 128], strides = [1, 1]} : vector<2x512xf32> to vector<2x128xf32>
    %cst_12 = arith.constant 5.000000e-01 : f32
    %19 = vector.broadcast %cst_12 : f32 to vector<2x128xf32>
    %20 = arith.mulf %19, %18 : vector<2x128xf32>
    %cst_13 = arith.constant 5.000000e-01 : f32
    %21 = vector.broadcast %cst_13 : f32 to vector<2x128xf32>
    %22 = arith.addf %20, %21 : vector<2x128xf32>
    %23 = vector.extract_strided_slice %12 {offsets = [0, 256], sizes = [2, 128], strides = [1, 1]} : vector<2x512xf32> to vector<2x128xf32>
    %24 = vector.extract_strided_slice %12 {offsets = [0, 384], sizes = [2, 128], strides = [1, 1]} : vector<2x512xf32> to vector<2x128xf32>
    %cst_14 = arith.constant 5.000000e-01 : f32
    %25 = vector.broadcast %cst_14 : f32 to vector<2x128xf32>
    %26 = arith.mulf %25, %24 : vector<2x128xf32>
    %cst_15 = arith.constant 5.000000e-01 : f32
    %27 = vector.broadcast %cst_15 : f32 to vector<2x128xf32>
    %28 = arith.addf %26, %27 : vector<2x128xf32>
    %29 = arith.mulf %22, %4 : vector<2x128xf32>
    %30 = arith.mulf %17, %23 : vector<2x128xf32>
    %31 = arith.addf %29, %30 : vector<2x128xf32>
    %32 = math.tanh %31 : vector<2x128xf32>
    %33 = arith.mulf %28, %32 : vector<2x128xf32>
    %34 = arith.truncf %33 : vector<2x128xf32> to vector<2x128xbf16>
    %35 = tpu.concatenate %34, %5 in 1 : vector<2x128xbf16>, vector<2x128xbf16> -> vector<2x256xbf16>
    %c0_16 = arith.constant 0 : index
    %c0_17 = arith.constant 0 : index
    %36 = vector.load %arg2[%c0_16, %c0_17] : memref<256x512xbf16, #tpu.memory_space<vmem>>, vector<256x512xbf16>
    %cst_18 = arith.constant dense<0.000000e+00> : vector<2x512xf32>
    %37 = tpu.matmul %35, %36, %cst_18 {dimension_numbers = #tpu.dot_dimension_numbers<[1], [0], [0], [1], [0, 0, 1, 1], [], []>} : vector<2x256xbf16>, vector<256x512xbf16>, vector<2x512xf32> -> vector<2x512xf32>
    %38 = arith.addf %37, %2 : vector<2x512xf32>
    %39 = math.tanh %38 : vector<2x512xf32>
    %40 = vector.extract_strided_slice %39 {offsets = [0, 0], sizes = [2, 128], strides = [1, 1]} : vector<2x512xf32> to vector<2x128xf32>
    %cst_19 = arith.constant 5.000000e-01 : f32
    %41 = vector.broadcast %cst_19 : f32 to vector<2x128xf32>
    %42 = arith.mulf %41, %40 : vector<2x128xf32>
    %cst_20 = arith.constant 5.000000e-01 : f32
    %43 = vector.broadcast %cst_20 : f32 to vector<2x128xf32>
    %44 = arith.addf %42, %43 : vector<2x128xf32>
    %45 = vector.extract_strided_slice %39 {offsets = [0, 128], sizes = [2, 128], strides = [1, 1]} : vector<2x512xf32> to vector<2x128xf32>
    %cst_21 = arith.constant 5.000000e-01 : f32
    %46 = vector.broadcast %cst_21 : f32 to vector<2x128xf32>
    %47 = arith.mulf %46, %45 : vector<2x128xf32>
    %cst_22 = arith.constant 5.000000e-01 : f32
    %48 = vector.broadcast %cst_22 : f32 to vector<2x128xf32>
    %49 = arith.addf %47, %48 : vector<2x128xf32>
    %50 = vector.extract_strided_slice %39 {offsets = [0, 256], sizes = [2, 128], strides = [1, 1]} : vector<2x512xf32> to vector<2x128xf32>
    %51 = vector.extract_strided_slice %39 {offsets = [0, 384], sizes = [2, 128], strides = [1, 1]} : vector<2x512xf32> to vector<2x128xf32>
    %cst_23 = arith.constant 5.000000e-01 : f32
    %52 = vector.broadcast %cst_23 : f32 to vector<2x128xf32>
    %53 = arith.mulf %52, %51 : vector<2x128xf32>
    %cst_24 = arith.constant 5.000000e-01 : f32
    %54 = vector.broadcast %cst_24 : f32 to vector<2x128xf32>
    %55 = arith.addf %53, %54 : vector<2x128xf32>
    %56 = arith.mulf %49, %6 : vector<2x128xf32>
    %57 = arith.mulf %44, %50 : vector<2x128xf32>
    %58 = arith.addf %56, %57 : vector<2x128xf32>
    %59 = math.tanh %58 : vector<2x128xf32>
    %60 = arith.mulf %55, %59 : vector<2x128xf32>
    %61 = arith.truncf %60 : vector<2x128xf32> to vector<2x128xbf16>
    %c1 = arith.constant 1 : index
    %c0_25 = arith.constant 0 : index
    %c0_26 = arith.constant 0 : index
    %62 = vector.load %arg0[%c1, %c0_25, %c0_26] : memref<8x2x512xf32, #tpu.memory_space<vmem>>, vector<1x2x512xf32>
    %63 = vector.shape_cast %62 : vector<1x2x512xf32> to vector<2x512xf32>
    %c0_27 = arith.constant 0 : index
    %c0_28 = arith.constant 0 : index
    %64 = vector.load %arg1[%c0_27, %c0_28] : memref<128x512xbf16, #tpu.memory_space<vmem>>, vector<128x512xbf16>
    %cst_29 = arith.constant dense<0.000000e+00> : vector<2x512xf32>
    %65 = tpu.matmul %34, %64, %cst_29 {dimension_numbers = #tpu.dot_dimension_numbers<[1], [0], [0], [1], [0, 0, 1, 1], [], []>} : vector<2x128xbf16>, vector<128x512xbf16>, vector<2x512xf32> -> vector<2x512xf32>
    %66 = arith.addf %63, %65 : vector<2x512xf32>
    %67 = math.tanh %66 : vector<2x512xf32>
    %68 = vector.extract_strided_slice %67 {offsets = [0, 0], sizes = [2, 128], strides = [1, 1]} : vector<2x512xf32> to vector<2x128xf32>
    %cst_30 = arith.constant 5.000000e-01 : f32
    %69 = vector.broadcast %cst_30 : f32 to vector<2x128xf32>
    %70 = arith.mulf %69, %68 : vector<2x128xf32>
    %cst_31 = arith.constant 5.000000e-01 : f32
    %71 = vector.broadcast %cst_31 : f32 to vector<2x128xf32>
    %72 = arith.addf %70, %71 : vector<2x128xf32>
    %73 = vector.extract_strided_slice %67 {offsets = [0, 128], sizes = [2, 128], strides = [1, 1]} : vector<2x512xf32> to vector<2x128xf32>
    %cst_32 = arith.constant 5.000000e-01 : f32
    %74 = vector.broadcast %cst_32 : f32 to vector<2x128xf32>
    %75 = arith.mulf %74, %73 : vector<2x128xf32>
    %cst_33 = arith.constant 5.000000e-01 : f32
    %76 = vector.broadcast %cst_33 : f32 to vector<2x128xf32>
    %77 = arith.addf %75, %76 : vector<2x128xf32>
    %78 = vector.extract_strided_slice %67 {offsets = [0, 256], sizes = [2, 128], strides = [1, 1]} : vector<2x512xf32> to vector<2x128xf32>
    %79 = vector.extract_strided_slice %67 {offsets = [0, 384], sizes = [2, 128], strides = [1, 1]} : vector<2x512xf32> to vector<2x128xf32>
    %cst_34 = arith.constant 5.000000e-01 : f32
    %80 = vector.broadcast %cst_34 : f32 to vector<2x128xf32>
    %81 = arith.mulf %80, %79 : vector<2x128xf32>
    %cst_35 = arith.constant 5.000000e-01 : f32
    %82 = vector.broadcast %cst_35 : f32 to vector<2x128xf32>
    %83 = arith.addf %81, %82 : vector<2x128xf32>
    %84 = arith.mulf %77, %31 : vector<2x128xf32>
    %85 = arith.mulf %72, %78 : vector<2x128xf32>
    %86 = arith.addf %84, %85 : vector<2x128xf32>
    %87 = math.tanh %86 : vector<2x128xf32>
    %88 = arith.mulf %83, %87 : vector<2x128xf32>
    %89 = arith.truncf %88 : vector<2x128xf32> to vector<2x128xbf16>
    %90 = tpu.concatenate %89, %61 in 1 : vector<2x128xbf16>, vector<2x128xbf16> -> vector<2x256xbf16>
    %c0_36 = arith.constant 0 : index
    %c0_37 = arith.constant 0 : index
    %91 = vector.load %arg2[%c0_36, %c0_37] : memref<256x512xbf16, #tpu.memory_space<vmem>>, vector<256x512xbf16>
    %cst_38 = arith.constant dense<0.000000e+00> : vector<2x512xf32>
    %92 = tpu.matmul %90, %91, %cst_38 {dimension_numbers = #tpu.dot_dimension_numbers<[1], [0], [0], [1], [0, 0, 1, 1], [], []>} : vector<2x256xbf16>, vector<256x512xbf16>, vector<2x512xf32> -> vector<2x512xf32>
    %93 = arith.addf %92, %2 : vector<2x512xf32>
    %94 = math.tanh %93 : vector<2x512xf32>
    %95 = vector.extract_strided_slice %94 {offsets = [0, 0], sizes = [2, 128], strides = [1, 1]} : vector<2x512xf32> to vector<2x128xf32>
    %cst_39 = arith.constant 5.000000e-01 : f32
    %96 = vector.broadcast %cst_39 : f32 to vector<2x128xf32>
    %97 = arith.mulf %96, %95 : vector<2x128xf32>
    %cst_40 = arith.constant 5.000000e-01 : f32
    %98 = vector.broadcast %cst_40 : f32 to vector<2x128xf32>
    %99 = arith.addf %97, %98 : vector<2x128xf32>
    %100 = vector.extract_strided_slice %94 {offsets = [0, 128], sizes = [2, 128], strides = [1, 1]} : vector<2x512xf32> to vector<2x128xf32>
    %cst_41 = arith.constant 5.000000e-01 : f32
    %101 = vector.broadcast %cst_41 : f32 to vector<2x128xf32>
    %102 = arith.mulf %101, %100 : vector<2x128xf32>
    %cst_42 = arith.constant 5.000000e-01 : f32
    %103 = vector.broadcast %cst_42 : f32 to vector<2x128xf32>
    %104 = arith.addf %102, %103 : vector<2x128xf32>
    %105 = vector.extract_strided_slice %94 {offsets = [0, 256], sizes = [2, 128], strides = [1, 1]} : vector<2x512xf32> to vector<2x128xf32>
    %106 = vector.extract_strided_slice %94 {offsets = [0, 384], sizes = [2, 128], strides = [1, 1]} : vector<2x512xf32> to vector<2x128xf32>
    %cst_43 = arith.constant 5.000000e-01 : f32
    %107 = vector.broadcast %cst_43 : f32 to vector<2x128xf32>
    %108 = arith.mulf %107, %106 : vector<2x128xf32>
    %cst_44 = arith.constant 5.000000e-01 : f32
    %109 = vector.broadcast %cst_44 : f32 to vector<2x128xf32>
    %110 = arith.addf %108, %109 : vector<2x128xf32>
    %111 = arith.mulf %104, %58 : vector<2x128xf32>
    %112 = arith.mulf %99, %105 : vector<2x128xf32>
    %113 = arith.addf %111, %112 : vector<2x128xf32>
    %114 = math.tanh %113 : vector<2x128xf32>
    %115 = arith.mulf %110, %114 : vector<2x128xf32>
    %116 = arith.truncf %115 : vector<2x128xf32> to vector<2x128xbf16>
    %c2 = arith.constant 2 : index
    %c0_45 = arith.constant 0 : index
    %c0_46 = arith.constant 0 : index
    %117 = vector.load %arg0[%c2, %c0_45, %c0_46] : memref<8x2x512xf32, #tpu.memory_space<vmem>>, vector<1x2x512xf32>
    %118 = vector.shape_cast %117 : vector<1x2x512xf32> to vector<2x512xf32>
    %c0_47 = arith.constant 0 : index
    %c0_48 = arith.constant 0 : index
    %119 = vector.load %arg1[%c0_47, %c0_48] : memref<128x512xbf16, #tpu.memory_space<vmem>>, vector<128x512xbf16>
    %cst_49 = arith.constant dense<0.000000e+00> : vector<2x512xf32>
    %120 = tpu.matmul %89, %119, %cst_49 {dimension_numbers = #tpu.dot_dimension_numbers<[1], [0], [0], [1], [0, 0, 1, 1], [], []>} : vector<2x128xbf16>, vector<128x512xbf16>, vector<2x512xf32> -> vector<2x512xf32>
    %121 = arith.addf %118, %120 : vector<2x512xf32>
    %122 = math.tanh %121 : vector<2x512xf32>
    %123 = vector.extract_strided_slice %122 {offsets = [0, 0], sizes = [2, 128], strides = [1, 1]} : vector<2x512xf32> to vector<2x128xf32>
    %cst_50 = arith.constant 5.000000e-01 : f32
    %124 = vector.broadcast %cst_50 : f32 to vector<2x128xf32>
    %125 = arith.mulf %124, %123 : vector<2x128xf32>
    %cst_51 = arith.constant 5.000000e-01 : f32
    %126 = vector.broadcast %cst_51 : f32 to vector<2x128xf32>
    %127 = arith.addf %125, %126 : vector<2x128xf32>
    %128 = vector.extract_strided_slice %122 {offsets = [0, 128], sizes = [2, 128], strides = [1, 1]} : vector<2x512xf32> to vector<2x128xf32>
    %cst_52 = arith.constant 5.000000e-01 : f32
    %129 = vector.broadcast %cst_52 : f32 to vector<2x128xf32>
    %130 = arith.mulf %129, %128 : vector<2x128xf32>
    %cst_53 = arith.constant 5.000000e-01 : f32
    %131 = vector.broadcast %cst_53 : f32 to vector<2x128xf32>
    %132 = arith.addf %130, %131 : vector<2x128xf32>
    %133 = vector.extract_strided_slice %122 {offsets = [0, 256], sizes = [2, 128], strides = [1, 1]} : vector<2x512xf32> to vector<2x128xf32>
    %134 = vector.extract_strided_slice %122 {offsets = [0, 384], sizes = [2, 128], strides = [1, 1]} : vector<2x512xf32> to vector<2x128xf32>
    %cst_54 = arith.constant 5.000000e-01 : f32
    %135 = vector.broadcast %cst_54 : f32 to vector<2x128xf32>
    %136 = arith.mulf %135, %134 : vector<2x128xf32>
    %cst_55 = arith.constant 5.000000e-01 : f32
    %137 = vector.broadcast %cst_55 : f32 to vector<2x128xf32>
    %138 = arith.addf %136, %137 : vector<2x128xf32>
    %139 = arith.mulf %132, %86 : vector<2x128xf32>
    %140 = arith.mulf %127, %133 : vector<2x128xf32>
    %141 = arith.addf %139, %140 : vector<2x128xf32>
    %142 = math.tanh %141 : vector<2x128xf32>
    %143 = arith.mulf %138, %142 : vector<2x128xf32>
    %144 = arith.truncf %143 : vector<2x128xf32> to vector<2x128xbf16>
    %145 = tpu.concatenate %144, %116 in 1 : vector<2x128xbf16>, vector<2x128xbf16> -> vector<2x256xbf16>
    %c0_56 = arith.constant 0 : index
    %c0_57 = arith.constant 0 : index
    %146 = vector.load %arg2[%c0_56, %c0_57] : memref<256x512xbf16, #tpu.memory_space<vmem>>, vector<256x512xbf16>
    %cst_58 = arith.constant dense<0.000000e+00> : vector<2x512xf32>
    %147 = tpu.matmul %145, %146, %cst_58 {dimension_numbers = #tpu.dot_dimension_numbers<[1], [0], [0], [1], [0, 0, 1, 1], [], []>} : vector<2x256xbf16>, vector<256x512xbf16>, vector<2x512xf32> -> vector<2x512xf32>
    %148 = arith.addf %147, %2 : vector<2x512xf32>
    %149 = math.tanh %148 : vector<2x512xf32>
    %150 = vector.extract_strided_slice %149 {offsets = [0, 0], sizes = [2, 128], strides = [1, 1]} : vector<2x512xf32> to vector<2x128xf32>
    %cst_59 = arith.constant 5.000000e-01 : f32
    %151 = vector.broadcast %cst_59 : f32 to vector<2x128xf32>
    %152 = arith.mulf %151, %150 : vector<2x128xf32>
    %cst_60 = arith.constant 5.000000e-01 : f32
    %153 = vector.broadcast %cst_60 : f32 to vector<2x128xf32>
    %154 = arith.addf %152, %153 : vector<2x128xf32>
    %155 = vector.extract_strided_slice %149 {offsets = [0, 128], sizes = [2, 128], strides = [1, 1]} : vector<2x512xf32> to vector<2x128xf32>
    %cst_61 = arith.constant 5.000000e-01 : f32
    %156 = vector.broadcast %cst_61 : f32 to vector<2x128xf32>
    %157 = arith.mulf %156, %155 : vector<2x128xf32>
    %cst_62 = arith.constant 5.000000e-01 : f32
    %158 = vector.broadcast %cst_62 : f32 to vector<2x128xf32>
    %159 = arith.addf %157, %158 : vector<2x128xf32>
    %160 = vector.extract_strided_slice %149 {offsets = [0, 256], sizes = [2, 128], strides = [1, 1]} : vector<2x512xf32> to vector<2x128xf32>
    %161 = vector.extract_strided_slice %149 {offsets = [0, 384], sizes = [2, 128], strides = [1, 1]} : vector<2x512xf32> to vector<2x128xf32>
    %cst_63 = arith.constant 5.000000e-01 : f32
    %162 = vector.broadcast %cst_63 : f32 to vector<2x128xf32>
    %163 = arith.mulf %162, %161 : vector<2x128xf32>
    %cst_64 = arith.constant 5.000000e-01 : f32
    %164 = vector.broadcast %cst_64 : f32 to vector<2x128xf32>
    %165 = arith.addf %163, %164 : vector<2x128xf32>
    %166 = arith.mulf %159, %113 : vector<2x128xf32>
    %167 = arith.mulf %154, %160 : vector<2x128xf32>
    %168 = arith.addf %166, %167 : vector<2x128xf32>
    %169 = math.tanh %168 : vector<2x128xf32>
    %170 = arith.mulf %165, %169 : vector<2x128xf32>
    %171 = arith.truncf %170 : vector<2x128xf32> to vector<2x128xbf16>
    %c3 = arith.constant 3 : index
    %c0_65 = arith.constant 0 : index
    %c0_66 = arith.constant 0 : index
    %172 = vector.load %arg0[%c3, %c0_65, %c0_66] : memref<8x2x512xf32, #tpu.memory_space<vmem>>, vector<1x2x512xf32>
    %173 = vector.shape_cast %172 : vector<1x2x512xf32> to vector<2x512xf32>
    %c0_67 = arith.constant 0 : index
    %c0_68 = arith.constant 0 : index
    %174 = vector.load %arg1[%c0_67, %c0_68] : memref<128x512xbf16, #tpu.memory_space<vmem>>, vector<128x512xbf16>
    %cst_69 = arith.constant dense<0.000000e+00> : vector<2x512xf32>
    %175 = tpu.matmul %144, %174, %cst_69 {dimension_numbers = #tpu.dot_dimension_numbers<[1], [0], [0], [1], [0, 0, 1, 1], [], []>} : vector<2x128xbf16>, vector<128x512xbf16>, vector<2x512xf32> -> vector<2x512xf32>
    %176 = arith.addf %173, %175 : vector<2x512xf32>
    %177 = math.tanh %176 : vector<2x512xf32>
    %178 = vector.extract_strided_slice %177 {offsets = [0, 0], sizes = [2, 128], strides = [1, 1]} : vector<2x512xf32> to vector<2x128xf32>
    %cst_70 = arith.constant 5.000000e-01 : f32
    %179 = vector.broadcast %cst_70 : f32 to vector<2x128xf32>
    %180 = arith.mulf %179, %178 : vector<2x128xf32>
    %cst_71 = arith.constant 5.000000e-01 : f32
    %181 = vector.broadcast %cst_71 : f32 to vector<2x128xf32>
    %182 = arith.addf %180, %181 : vector<2x128xf32>
    %183 = vector.extract_strided_slice %177 {offsets = [0, 128], sizes = [2, 128], strides = [1, 1]} : vector<2x512xf32> to vector<2x128xf32>
    %cst_72 = arith.constant 5.000000e-01 : f32
    %184 = vector.broadcast %cst_72 : f32 to vector<2x128xf32>
    %185 = arith.mulf %184, %183 : vector<2x128xf32>
    %cst_73 = arith.constant 5.000000e-01 : f32
    %186 = vector.broadcast %cst_73 : f32 to vector<2x128xf32>
    %187 = arith.addf %185, %186 : vector<2x128xf32>
    %188 = vector.extract_strided_slice %177 {offsets = [0, 256], sizes = [2, 128], strides = [1, 1]} : vector<2x512xf32> to vector<2x128xf32>
    %189 = vector.extract_strided_slice %177 {offsets = [0, 384], sizes = [2, 128], strides = [1, 1]} : vector<2x512xf32> to vector<2x128xf32>
    %cst_74 = arith.constant 5.000000e-01 : f32
    %190 = vector.broadcast %cst_74 : f32 to vector<2x128xf32>
    %191 = arith.mulf %190, %189 : vector<2x128xf32>
    %cst_75 = arith.constant 5.000000e-01 : f32
    %192 = vector.broadcast %cst_75 : f32 to vector<2x128xf32>
    %193 = arith.addf %191, %192 : vector<2x128xf32>
    %194 = arith.mulf %187, %141 : vector<2x128xf32>
    %195 = arith.mulf %182, %188 : vector<2x128xf32>
    %196 = arith.addf %194, %195 : vector<2x128xf32>
    %197 = math.tanh %196 : vector<2x128xf32>
    %198 = arith.mulf %193, %197 : vector<2x128xf32>
    %199 = arith.truncf %198 : vector<2x128xf32> to vector<2x128xbf16>
    %200 = tpu.concatenate %199, %171 in 1 : vector<2x128xbf16>, vector<2x128xbf16> -> vector<2x256xbf16>
    %c0_76 = arith.constant 0 : index
    %c0_77 = arith.constant 0 : index
    %201 = vector.load %arg2[%c0_76, %c0_77] : memref<256x512xbf16, #tpu.memory_space<vmem>>, vector<256x512xbf16>
    %cst_78 = arith.constant dense<0.000000e+00> : vector<2x512xf32>
    %202 = tpu.matmul %200, %201, %cst_78 {dimension_numbers = #tpu.dot_dimension_numbers<[1], [0], [0], [1], [0, 0, 1, 1], [], []>} : vector<2x256xbf16>, vector<256x512xbf16>, vector<2x512xf32> -> vector<2x512xf32>
    %203 = arith.addf %202, %2 : vector<2x512xf32>
    %204 = math.tanh %203 : vector<2x512xf32>
    %205 = vector.extract_strided_slice %204 {offsets = [0, 0], sizes = [2, 128], strides = [1, 1]} : vector<2x512xf32> to vector<2x128xf32>
    %cst_79 = arith.constant 5.000000e-01 : f32
    %206 = vector.broadcast %cst_79 : f32 to vector<2x128xf32>
    %207 = arith.mulf %206, %205 : vector<2x128xf32>
    %cst_80 = arith.constant 5.000000e-01 : f32
    %208 = vector.broadcast %cst_80 : f32 to vector<2x128xf32>
    %209 = arith.addf %207, %208 : vector<2x128xf32>
    %210 = vector.extract_strided_slice %204 {offsets = [0, 128], sizes = [2, 128], strides = [1, 1]} : vector<2x512xf32> to vector<2x128xf32>
    %cst_81 = arith.constant 5.000000e-01 : f32
    %211 = vector.broadcast %cst_81 : f32 to vector<2x128xf32>
    %212 = arith.mulf %211, %210 : vector<2x128xf32>
    %cst_82 = arith.constant 5.000000e-01 : f32
    %213 = vector.broadcast %cst_82 : f32 to vector<2x128xf32>
    %214 = arith.addf %212, %213 : vector<2x128xf32>
    %215 = vector.extract_strided_slice %204 {offsets = [0, 256], sizes = [2, 128], strides = [1, 1]} : vector<2x512xf32> to vector<2x128xf32>
    %216 = vector.extract_strided_slice %204 {offsets = [0, 384], sizes = [2, 128], strides = [1, 1]} : vector<2x512xf32> to vector<2x128xf32>
    %cst_83 = arith.constant 5.000000e-01 : f32
    %217 = vector.broadcast %cst_83 : f32 to vector<2x128xf32>
    %218 = arith.mulf %217, %216 : vector<2x128xf32>
    %cst_84 = arith.constant 5.000000e-01 : f32
    %219 = vector.broadcast %cst_84 : f32 to vector<2x128xf32>
    %220 = arith.addf %218, %219 : vector<2x128xf32>
    %221 = arith.mulf %214, %168 : vector<2x128xf32>
    %222 = arith.mulf %209, %215 : vector<2x128xf32>
    %223 = arith.addf %221, %222 : vector<2x128xf32>
    %224 = math.tanh %223 : vector<2x128xf32>
    %225 = arith.mulf %220, %224 : vector<2x128xf32>
    %226 = arith.truncf %225 : vector<2x128xf32> to vector<2x128xbf16>
    %c4 = arith.constant 4 : index
    %c0_85 = arith.constant 0 : index
    %c0_86 = arith.constant 0 : index
    %227 = vector.load %arg0[%c4, %c0_85, %c0_86] : memref<8x2x512xf32, #tpu.memory_space<vmem>>, vector<1x2x512xf32>
    %228 = vector.shape_cast %227 : vector<1x2x512xf32> to vector<2x512xf32>
    %c0_87 = arith.constant 0 : index
    %c0_88 = arith.constant 0 : index
    %229 = vector.load %arg1[%c0_87, %c0_88] : memref<128x512xbf16, #tpu.memory_space<vmem>>, vector<128x512xbf16>
    %cst_89 = arith.constant dense<0.000000e+00> : vector<2x512xf32>
    %230 = tpu.matmul %199, %229, %cst_89 {dimension_numbers = #tpu.dot_dimension_numbers<[1], [0], [0], [1], [0, 0, 1, 1], [], []>} : vector<2x128xbf16>, vector<128x512xbf16>, vector<2x512xf32> -> vector<2x512xf32>
    %231 = arith.addf %228, %230 : vector<2x512xf32>
    %232 = math.tanh %231 : vector<2x512xf32>
    %233 = vector.extract_strided_slice %232 {offsets = [0, 0], sizes = [2, 128], strides = [1, 1]} : vector<2x512xf32> to vector<2x128xf32>
    %cst_90 = arith.constant 5.000000e-01 : f32
    %234 = vector.broadcast %cst_90 : f32 to vector<2x128xf32>
    %235 = arith.mulf %234, %233 : vector<2x128xf32>
    %cst_91 = arith.constant 5.000000e-01 : f32
    %236 = vector.broadcast %cst_91 : f32 to vector<2x128xf32>
    %237 = arith.addf %235, %236 : vector<2x128xf32>
    %238 = vector.extract_strided_slice %232 {offsets = [0, 128], sizes = [2, 128], strides = [1, 1]} : vector<2x512xf32> to vector<2x128xf32>
    %cst_92 = arith.constant 5.000000e-01 : f32
    %239 = vector.broadcast %cst_92 : f32 to vector<2x128xf32>
    %240 = arith.mulf %239, %238 : vector<2x128xf32>
    %cst_93 = arith.constant 5.000000e-01 : f32
    %241 = vector.broadcast %cst_93 : f32 to vector<2x128xf32>
    %242 = arith.addf %240, %241 : vector<2x128xf32>
    %243 = vector.extract_strided_slice %232 {offsets = [0, 256], sizes = [2, 128], strides = [1, 1]} : vector<2x512xf32> to vector<2x128xf32>
    %244 = vector.extract_strided_slice %232 {offsets = [0, 384], sizes = [2, 128], strides = [1, 1]} : vector<2x512xf32> to vector<2x128xf32>
    %cst_94 = arith.constant 5.000000e-01 : f32
    %245 = vector.broadcast %cst_94 : f32 to vector<2x128xf32>
    %246 = arith.mulf %245, %244 : vector<2x128xf32>
    %cst_95 = arith.constant 5.000000e-01 : f32
    %247 = vector.broadcast %cst_95 : f32 to vector<2x128xf32>
    %248 = arith.addf %246, %247 : vector<2x128xf32>
    %249 = arith.mulf %242, %196 : vector<2x128xf32>
    %250 = arith.mulf %237, %243 : vector<2x128xf32>
    %251 = arith.addf %249, %250 : vector<2x128xf32>
    %252 = math.tanh %251 : vector<2x128xf32>
    %253 = arith.mulf %248, %252 : vector<2x128xf32>
    %254 = arith.truncf %253 : vector<2x128xf32> to vector<2x128xbf16>
    %255 = tpu.concatenate %254, %226 in 1 : vector<2x128xbf16>, vector<2x128xbf16> -> vector<2x256xbf16>
    %c0_96 = arith.constant 0 : index
    %c0_97 = arith.constant 0 : index
    %256 = vector.load %arg2[%c0_96, %c0_97] : memref<256x512xbf16, #tpu.memory_space<vmem>>, vector<256x512xbf16>
    %cst_98 = arith.constant dense<0.000000e+00> : vector<2x512xf32>
    %257 = tpu.matmul %255, %256, %cst_98 {dimension_numbers = #tpu.dot_dimension_numbers<[1], [0], [0], [1], [0, 0, 1, 1], [], []>} : vector<2x256xbf16>, vector<256x512xbf16>, vector<2x512xf32> -> vector<2x512xf32>
    %258 = arith.addf %257, %2 : vector<2x512xf32>
    %259 = math.tanh %258 : vector<2x512xf32>
    %260 = vector.extract_strided_slice %259 {offsets = [0, 0], sizes = [2, 128], strides = [1, 1]} : vector<2x512xf32> to vector<2x128xf32>
    %cst_99 = arith.constant 5.000000e-01 : f32
    %261 = vector.broadcast %cst_99 : f32 to vector<2x128xf32>
    %262 = arith.mulf %261, %260 : vector<2x128xf32>
    %cst_100 = arith.constant 5.000000e-01 : f32
    %263 = vector.broadcast %cst_100 : f32 to vector<2x128xf32>
    %264 = arith.addf %262, %263 : vector<2x128xf32>
    %265 = vector.extract_strided_slice %259 {offsets = [0, 128], sizes = [2, 128], strides = [1, 1]} : vector<2x512xf32> to vector<2x128xf32>
    %cst_101 = arith.constant 5.000000e-01 : f32
    %266 = vector.broadcast %cst_101 : f32 to vector<2x128xf32>
    %267 = arith.mulf %266, %265 : vector<2x128xf32>
    %cst_102 = arith.constant 5.000000e-01 : f32
    %268 = vector.broadcast %cst_102 : f32 to vector<2x128xf32>
    %269 = arith.addf %267, %268 : vector<2x128xf32>
    %270 = vector.extract_strided_slice %259 {offsets = [0, 256], sizes = [2, 128], strides = [1, 1]} : vector<2x512xf32> to vector<2x128xf32>
    %271 = vector.extract_strided_slice %259 {offsets = [0, 384], sizes = [2, 128], strides = [1, 1]} : vector<2x512xf32> to vector<2x128xf32>
    %cst_103 = arith.constant 5.000000e-01 : f32
    %272 = vector.broadcast %cst_103 : f32 to vector<2x128xf32>
    %273 = arith.mulf %272, %271 : vector<2x128xf32>
    %cst_104 = arith.constant 5.000000e-01 : f32
    %274 = vector.broadcast %cst_104 : f32 to vector<2x128xf32>
    %275 = arith.addf %273, %274 : vector<2x128xf32>
    %276 = arith.mulf %269, %223 : vector<2x128xf32>
    %277 = arith.mulf %264, %270 : vector<2x128xf32>
    %278 = arith.addf %276, %277 : vector<2x128xf32>
    %279 = math.tanh %278 : vector<2x128xf32>
    %280 = arith.mulf %275, %279 : vector<2x128xf32>
    %281 = arith.truncf %280 : vector<2x128xf32> to vector<2x128xbf16>
    %c5 = arith.constant 5 : index
    %c0_105 = arith.constant 0 : index
    %c0_106 = arith.constant 0 : index
    %282 = vector.load %arg0[%c5, %c0_105, %c0_106] : memref<8x2x512xf32, #tpu.memory_space<vmem>>, vector<1x2x512xf32>
    %283 = vector.shape_cast %282 : vector<1x2x512xf32> to vector<2x512xf32>
    %c0_107 = arith.constant 0 : index
    %c0_108 = arith.constant 0 : index
    %284 = vector.load %arg1[%c0_107, %c0_108] : memref<128x512xbf16, #tpu.memory_space<vmem>>, vector<128x512xbf16>
    %cst_109 = arith.constant dense<0.000000e+00> : vector<2x512xf32>
    %285 = tpu.matmul %254, %284, %cst_109 {dimension_numbers = #tpu.dot_dimension_numbers<[1], [0], [0], [1], [0, 0, 1, 1], [], []>} : vector<2x128xbf16>, vector<128x512xbf16>, vector<2x512xf32> -> vector<2x512xf32>
    %286 = arith.addf %283, %285 : vector<2x512xf32>
    %287 = math.tanh %286 : vector<2x512xf32>
    %288 = vector.extract_strided_slice %287 {offsets = [0, 0], sizes = [2, 128], strides = [1, 1]} : vector<2x512xf32> to vector<2x128xf32>
    %cst_110 = arith.constant 5.000000e-01 : f32
    %289 = vector.broadcast %cst_110 : f32 to vector<2x128xf32>
    %290 = arith.mulf %289, %288 : vector<2x128xf32>
    %cst_111 = arith.constant 5.000000e-01 : f32
    %291 = vector.broadcast %cst_111 : f32 to vector<2x128xf32>
    %292 = arith.addf %290, %291 : vector<2x128xf32>
    %293 = vector.extract_strided_slice %287 {offsets = [0, 128], sizes = [2, 128], strides = [1, 1]} : vector<2x512xf32> to vector<2x128xf32>
    %cst_112 = arith.constant 5.000000e-01 : f32
    %294 = vector.broadcast %cst_112 : f32 to vector<2x128xf32>
    %295 = arith.mulf %294, %293 : vector<2x128xf32>
    %cst_113 = arith.constant 5.000000e-01 : f32
    %296 = vector.broadcast %cst_113 : f32 to vector<2x128xf32>
    %297 = arith.addf %295, %296 : vector<2x128xf32>
    %298 = vector.extract_strided_slice %287 {offsets = [0, 256], sizes = [2, 128], strides = [1, 1]} : vector<2x512xf32> to vector<2x128xf32>
    %299 = vector.extract_strided_slice %287 {offsets = [0, 384], sizes = [2, 128], strides = [1, 1]} : vector<2x512xf32> to vector<2x128xf32>
    %cst_114 = arith.constant 5.000000e-01 : f32
    %300 = vector.broadcast %cst_114 : f32 to vector<2x128xf32>
    %301 = arith.mulf %300, %299 : vector<2x128xf32>
    %cst_115 = arith.constant 5.000000e-01 : f32
    %302 = vector.broadcast %cst_115 : f32 to vector<2x128xf32>
    %303 = arith.addf %301, %302 : vector<2x128xf32>
    %304 = arith.mulf %297, %251 : vector<2x128xf32>
    %305 = arith.mulf %292, %298 : vector<2x128xf32>
    %306 = arith.addf %304, %305 : vector<2x128xf32>
    %307 = math.tanh %306 : vector<2x128xf32>
    %308 = arith.mulf %303, %307 : vector<2x128xf32>
    %309 = arith.truncf %308 : vector<2x128xf32> to vector<2x128xbf16>
    %310 = tpu.concatenate %309, %281 in 1 : vector<2x128xbf16>, vector<2x128xbf16> -> vector<2x256xbf16>
    %c0_116 = arith.constant 0 : index
    %c0_117 = arith.constant 0 : index
    %311 = vector.load %arg2[%c0_116, %c0_117] : memref<256x512xbf16, #tpu.memory_space<vmem>>, vector<256x512xbf16>
    %cst_118 = arith.constant dense<0.000000e+00> : vector<2x512xf32>
    %312 = tpu.matmul %310, %311, %cst_118 {dimension_numbers = #tpu.dot_dimension_numbers<[1], [0], [0], [1], [0, 0, 1, 1], [], []>} : vector<2x256xbf16>, vector<256x512xbf16>, vector<2x512xf32> -> vector<2x512xf32>
    %313 = arith.addf %312, %2 : vector<2x512xf32>
    %314 = math.tanh %313 : vector<2x512xf32>
    %315 = vector.extract_strided_slice %314 {offsets = [0, 0], sizes = [2, 128], strides = [1, 1]} : vector<2x512xf32> to vector<2x128xf32>
    %cst_119 = arith.constant 5.000000e-01 : f32
    %316 = vector.broadcast %cst_119 : f32 to vector<2x128xf32>
    %317 = arith.mulf %316, %315 : vector<2x128xf32>
    %cst_120 = arith.constant 5.000000e-01 : f32
    %318 = vector.broadcast %cst_120 : f32 to vector<2x128xf32>
    %319 = arith.addf %317, %318 : vector<2x128xf32>
    %320 = vector.extract_strided_slice %314 {offsets = [0, 128], sizes = [2, 128], strides = [1, 1]} : vector<2x512xf32> to vector<2x128xf32>
    %cst_121 = arith.constant 5.000000e-01 : f32
    %321 = vector.broadcast %cst_121 : f32 to vector<2x128xf32>
    %322 = arith.mulf %321, %320 : vector<2x128xf32>
    %cst_122 = arith.constant 5.000000e-01 : f32
    %323 = vector.broadcast %cst_122 : f32 to vector<2x128xf32>
    %324 = arith.addf %322, %323 : vector<2x128xf32>
    %325 = vector.extract_strided_slice %314 {offsets = [0, 256], sizes = [2, 128], strides = [1, 1]} : vector<2x512xf32> to vector<2x128xf32>
    %326 = vector.extract_strided_slice %314 {offsets = [0, 384], sizes = [2, 128], strides = [1, 1]} : vector<2x512xf32> to vector<2x128xf32>
    %cst_123 = arith.constant 5.000000e-01 : f32
    %327 = vector.broadcast %cst_123 : f32 to vector<2x128xf32>
    %328 = arith.mulf %327, %326 : vector<2x128xf32>
    %cst_124 = arith.constant 5.000000e-01 : f32
    %329 = vector.broadcast %cst_124 : f32 to vector<2x128xf32>
    %330 = arith.addf %328, %329 : vector<2x128xf32>
    %331 = arith.mulf %324, %278 : vector<2x128xf32>
    %332 = arith.mulf %319, %325 : vector<2x128xf32>
    %333 = arith.addf %331, %332 : vector<2x128xf32>
    %334 = math.tanh %333 : vector<2x128xf32>
    %335 = arith.mulf %330, %334 : vector<2x128xf32>
    %336 = arith.truncf %335 : vector<2x128xf32> to vector<2x128xbf16>
    %c6 = arith.constant 6 : index
    %c0_125 = arith.constant 0 : index
    %c0_126 = arith.constant 0 : index
    %337 = vector.load %arg0[%c6, %c0_125, %c0_126] : memref<8x2x512xf32, #tpu.memory_space<vmem>>, vector<1x2x512xf32>
    %338 = vector.shape_cast %337 : vector<1x2x512xf32> to vector<2x512xf32>
    %c0_127 = arith.constant 0 : index
    %c0_128 = arith.constant 0 : index
    %339 = vector.load %arg1[%c0_127, %c0_128] : memref<128x512xbf16, #tpu.memory_space<vmem>>, vector<128x512xbf16>
    %cst_129 = arith.constant dense<0.000000e+00> : vector<2x512xf32>
    %340 = tpu.matmul %309, %339, %cst_129 {dimension_numbers = #tpu.dot_dimension_numbers<[1], [0], [0], [1], [0, 0, 1, 1], [], []>} : vector<2x128xbf16>, vector<128x512xbf16>, vector<2x512xf32> -> vector<2x512xf32>
    %341 = arith.addf %338, %340 : vector<2x512xf32>
    %342 = math.tanh %341 : vector<2x512xf32>
    %343 = vector.extract_strided_slice %342 {offsets = [0, 0], sizes = [2, 128], strides = [1, 1]} : vector<2x512xf32> to vector<2x128xf32>
    %cst_130 = arith.constant 5.000000e-01 : f32
    %344 = vector.broadcast %cst_130 : f32 to vector<2x128xf32>
    %345 = arith.mulf %344, %343 : vector<2x128xf32>
    %cst_131 = arith.constant 5.000000e-01 : f32
    %346 = vector.broadcast %cst_131 : f32 to vector<2x128xf32>
    %347 = arith.addf %345, %346 : vector<2x128xf32>
    %348 = vector.extract_strided_slice %342 {offsets = [0, 128], sizes = [2, 128], strides = [1, 1]} : vector<2x512xf32> to vector<2x128xf32>
    %cst_132 = arith.constant 5.000000e-01 : f32
    %349 = vector.broadcast %cst_132 : f32 to vector<2x128xf32>
    %350 = arith.mulf %349, %348 : vector<2x128xf32>
    %cst_133 = arith.constant 5.000000e-01 : f32
    %351 = vector.broadcast %cst_133 : f32 to vector<2x128xf32>
    %352 = arith.addf %350, %351 : vector<2x128xf32>
    %353 = vector.extract_strided_slice %342 {offsets = [0, 256], sizes = [2, 128], strides = [1, 1]} : vector<2x512xf32> to vector<2x128xf32>
    %354 = vector.extract_strided_slice %342 {offsets = [0, 384], sizes = [2, 128], strides = [1, 1]} : vector<2x512xf32> to vector<2x128xf32>
    %cst_134 = arith.constant 5.000000e-01 : f32
    %355 = vector.broadcast %cst_134 : f32 to vector<2x128xf32>
    %356 = arith.mulf %355, %354 : vector<2x128xf32>
    %cst_135 = arith.constant 5.000000e-01 : f32
    %357 = vector.broadcast %cst_135 : f32 to vector<2x128xf32>
    %358 = arith.addf %356, %357 : vector<2x128xf32>
    %359 = arith.mulf %352, %306 : vector<2x128xf32>
    %360 = arith.mulf %347, %353 : vector<2x128xf32>
    %361 = arith.addf %359, %360 : vector<2x128xf32>
    %362 = math.tanh %361 : vector<2x128xf32>
    %363 = arith.mulf %358, %362 : vector<2x128xf32>
    %364 = arith.truncf %363 : vector<2x128xf32> to vector<2x128xbf16>
    %365 = tpu.concatenate %364, %336 in 1 : vector<2x128xbf16>, vector<2x128xbf16> -> vector<2x256xbf16>
    %c0_136 = arith.constant 0 : index
    %c0_137 = arith.constant 0 : index
    %366 = vector.load %arg2[%c0_136, %c0_137] : memref<256x512xbf16, #tpu.memory_space<vmem>>, vector<256x512xbf16>
    %cst_138 = arith.constant dense<0.000000e+00> : vector<2x512xf32>
    %367 = tpu.matmul %365, %366, %cst_138 {dimension_numbers = #tpu.dot_dimension_numbers<[1], [0], [0], [1], [0, 0, 1, 1], [], []>} : vector<2x256xbf16>, vector<256x512xbf16>, vector<2x512xf32> -> vector<2x512xf32>
    %368 = arith.addf %367, %2 : vector<2x512xf32>
    %369 = math.tanh %368 : vector<2x512xf32>
    %370 = vector.extract_strided_slice %369 {offsets = [0, 0], sizes = [2, 128], strides = [1, 1]} : vector<2x512xf32> to vector<2x128xf32>
    %cst_139 = arith.constant 5.000000e-01 : f32
    %371 = vector.broadcast %cst_139 : f32 to vector<2x128xf32>
    %372 = arith.mulf %371, %370 : vector<2x128xf32>
    %cst_140 = arith.constant 5.000000e-01 : f32
    %373 = vector.broadcast %cst_140 : f32 to vector<2x128xf32>
    %374 = arith.addf %372, %373 : vector<2x128xf32>
    %375 = vector.extract_strided_slice %369 {offsets = [0, 128], sizes = [2, 128], strides = [1, 1]} : vector<2x512xf32> to vector<2x128xf32>
    %cst_141 = arith.constant 5.000000e-01 : f32
    %376 = vector.broadcast %cst_141 : f32 to vector<2x128xf32>
    %377 = arith.mulf %376, %375 : vector<2x128xf32>
    %cst_142 = arith.constant 5.000000e-01 : f32
    %378 = vector.broadcast %cst_142 : f32 to vector<2x128xf32>
    %379 = arith.addf %377, %378 : vector<2x128xf32>
    %380 = vector.extract_strided_slice %369 {offsets = [0, 256], sizes = [2, 128], strides = [1, 1]} : vector<2x512xf32> to vector<2x128xf32>
    %381 = vector.extract_strided_slice %369 {offsets = [0, 384], sizes = [2, 128], strides = [1, 1]} : vector<2x512xf32> to vector<2x128xf32>
    %cst_143 = arith.constant 5.000000e-01 : f32
    %382 = vector.broadcast %cst_143 : f32 to vector<2x128xf32>
    %383 = arith.mulf %382, %381 : vector<2x128xf32>
    %cst_144 = arith.constant 5.000000e-01 : f32
    %384 = vector.broadcast %cst_144 : f32 to vector<2x128xf32>
    %385 = arith.addf %383, %384 : vector<2x128xf32>
    %386 = arith.mulf %379, %333 : vector<2x128xf32>
    %387 = arith.mulf %374, %380 : vector<2x128xf32>
    %388 = arith.addf %386, %387 : vector<2x128xf32>
    %389 = math.tanh %388 : vector<2x128xf32>
    %390 = arith.mulf %385, %389 : vector<2x128xf32>
    %391 = arith.truncf %390 : vector<2x128xf32> to vector<2x128xbf16>
    %c7 = arith.constant 7 : index
    %c0_145 = arith.constant 0 : index
    %c0_146 = arith.constant 0 : index
    %392 = vector.load %arg0[%c7, %c0_145, %c0_146] : memref<8x2x512xf32, #tpu.memory_space<vmem>>, vector<1x2x512xf32>
    %393 = vector.shape_cast %392 : vector<1x2x512xf32> to vector<2x512xf32>
    %c0_147 = arith.constant 0 : index
    %c0_148 = arith.constant 0 : index
    %394 = vector.load %arg1[%c0_147, %c0_148] : memref<128x512xbf16, #tpu.memory_space<vmem>>, vector<128x512xbf16>
    %cst_149 = arith.constant dense<0.000000e+00> : vector<2x512xf32>
    %395 = tpu.matmul %364, %394, %cst_149 {dimension_numbers = #tpu.dot_dimension_numbers<[1], [0], [0], [1], [0, 0, 1, 1], [], []>} : vector<2x128xbf16>, vector<128x512xbf16>, vector<2x512xf32> -> vector<2x512xf32>
    %396 = arith.addf %393, %395 : vector<2x512xf32>
    %397 = math.tanh %396 : vector<2x512xf32>
    %398 = vector.extract_strided_slice %397 {offsets = [0, 0], sizes = [2, 128], strides = [1, 1]} : vector<2x512xf32> to vector<2x128xf32>
    %cst_150 = arith.constant 5.000000e-01 : f32
    %399 = vector.broadcast %cst_150 : f32 to vector<2x128xf32>
    %400 = arith.mulf %399, %398 : vector<2x128xf32>
    %cst_151 = arith.constant 5.000000e-01 : f32
    %401 = vector.broadcast %cst_151 : f32 to vector<2x128xf32>
    %402 = arith.addf %400, %401 : vector<2x128xf32>
    %403 = vector.extract_strided_slice %397 {offsets = [0, 128], sizes = [2, 128], strides = [1, 1]} : vector<2x512xf32> to vector<2x128xf32>
    %cst_152 = arith.constant 5.000000e-01 : f32
    %404 = vector.broadcast %cst_152 : f32 to vector<2x128xf32>
    %405 = arith.mulf %404, %403 : vector<2x128xf32>
    %cst_153 = arith.constant 5.000000e-01 : f32
    %406 = vector.broadcast %cst_153 : f32 to vector<2x128xf32>
    %407 = arith.addf %405, %406 : vector<2x128xf32>
    %408 = vector.extract_strided_slice %397 {offsets = [0, 256], sizes = [2, 128], strides = [1, 1]} : vector<2x512xf32> to vector<2x128xf32>
    %409 = vector.extract_strided_slice %397 {offsets = [0, 384], sizes = [2, 128], strides = [1, 1]} : vector<2x512xf32> to vector<2x128xf32>
    %cst_154 = arith.constant 5.000000e-01 : f32
    %410 = vector.broadcast %cst_154 : f32 to vector<2x128xf32>
    %411 = arith.mulf %410, %409 : vector<2x128xf32>
    %cst_155 = arith.constant 5.000000e-01 : f32
    %412 = vector.broadcast %cst_155 : f32 to vector<2x128xf32>
    %413 = arith.addf %411, %412 : vector<2x128xf32>
    %414 = arith.mulf %407, %361 : vector<2x128xf32>
    %415 = arith.mulf %402, %408 : vector<2x128xf32>
    %416 = arith.addf %414, %415 : vector<2x128xf32>
    %417 = math.tanh %416 : vector<2x128xf32>
    %418 = arith.mulf %413, %417 : vector<2x128xf32>
    %419 = arith.truncf %418 : vector<2x128xf32> to vector<2x128xbf16>
    %420 = tpu.concatenate %419, %391 in 1 : vector<2x128xbf16>, vector<2x128xbf16> -> vector<2x256xbf16>
    %c0_156 = arith.constant 0 : index
    %c0_157 = arith.constant 0 : index
    %421 = vector.load %arg2[%c0_156, %c0_157] : memref<256x512xbf16, #tpu.memory_space<vmem>>, vector<256x512xbf16>
    %cst_158 = arith.constant dense<0.000000e+00> : vector<2x512xf32>
    %422 = tpu.matmul %420, %421, %cst_158 {dimension_numbers = #tpu.dot_dimension_numbers<[1], [0], [0], [1], [0, 0, 1, 1], [], []>} : vector<2x256xbf16>, vector<256x512xbf16>, vector<2x512xf32> -> vector<2x512xf32>
    %423 = arith.addf %422, %2 : vector<2x512xf32>
    %424 = math.tanh %423 : vector<2x512xf32>
    %425 = vector.extract_strided_slice %424 {offsets = [0, 0], sizes = [2, 128], strides = [1, 1]} : vector<2x512xf32> to vector<2x128xf32>
    %cst_159 = arith.constant 5.000000e-01 : f32
    %426 = vector.broadcast %cst_159 : f32 to vector<2x128xf32>
    %427 = arith.mulf %426, %425 : vector<2x128xf32>
    %cst_160 = arith.constant 5.000000e-01 : f32
    %428 = vector.broadcast %cst_160 : f32 to vector<2x128xf32>
    %429 = arith.addf %427, %428 : vector<2x128xf32>
    %430 = vector.extract_strided_slice %424 {offsets = [0, 128], sizes = [2, 128], strides = [1, 1]} : vector<2x512xf32> to vector<2x128xf32>
    %cst_161 = arith.constant 5.000000e-01 : f32
    %431 = vector.broadcast %cst_161 : f32 to vector<2x128xf32>
    %432 = arith.mulf %431, %430 : vector<2x128xf32>
    %cst_162 = arith.constant 5.000000e-01 : f32
    %433 = vector.broadcast %cst_162 : f32 to vector<2x128xf32>
    %434 = arith.addf %432, %433 : vector<2x128xf32>
    %435 = vector.extract_strided_slice %424 {offsets = [0, 256], sizes = [2, 128], strides = [1, 1]} : vector<2x512xf32> to vector<2x128xf32>
    %436 = vector.extract_strided_slice %424 {offsets = [0, 384], sizes = [2, 128], strides = [1, 1]} : vector<2x512xf32> to vector<2x128xf32>
    %cst_163 = arith.constant 5.000000e-01 : f32
    %437 = vector.broadcast %cst_163 : f32 to vector<2x128xf32>
    %438 = arith.mulf %437, %436 : vector<2x128xf32>
    %cst_164 = arith.constant 5.000000e-01 : f32
    %439 = vector.broadcast %cst_164 : f32 to vector<2x128xf32>
    %440 = arith.addf %438, %439 : vector<2x128xf32>
    %441 = arith.mulf %434, %388 : vector<2x128xf32>
    %442 = arith.mulf %429, %435 : vector<2x128xf32>
    %443 = arith.addf %441, %442 : vector<2x128xf32>
    %444 = math.tanh %443 : vector<2x128xf32>
    %445 = arith.mulf %440, %444 : vector<2x128xf32>
    %446 = arith.truncf %445 : vector<2x128xf32> to vector<2x128xbf16>
    %c0_165 = arith.constant 0 : index
    %c0_166 = arith.constant 0 : index
    %447 = vector.load %arg4[%c0_165, %c0_166] : memref<128x128xbf16, #tpu.memory_space<vmem>>, vector<128x128xbf16>
    %cst_167 = arith.constant dense<0.000000e+00> : vector<2x128xf32>
    %448 = tpu.matmul %446, %447, %cst_167 {dimension_numbers = #tpu.dot_dimension_numbers<[1], [0], [0], [1], [0, 0, 1, 1], [], []>} : vector<2x128xbf16>, vector<128x128xbf16>, vector<2x128xf32> -> vector<2x128xf32>
    %c0_168 = arith.constant 0 : index
    %c0_169 = arith.constant 0 : index
    %449 = vector.load %arg5[%c0_168, %c0_169] : memref<1x128xf32, #tpu.memory_space<vmem>>, vector<1x128xf32>
    %450 = vector.broadcast %449 : vector<1x128xf32> to vector<2x128xf32>
    %451 = arith.addf %448, %450 : vector<2x128xf32>
    %c0_170 = arith.constant 0 : index
    %c0_171 = arith.constant 0 : index
    %452 = vector.load %arg6[%c0_170, %c0_171] : memref<2x128xf32, #tpu.memory_space<vmem>>, vector<2x128xf32>
    tpu.vector_store %arg6[%c0_170, %c0_171], %451 {strides = array<i32>} : memref<2x128xf32, #tpu.memory_space<vmem>>, vector<2x128xf32>,
    return
  }
}

</mosaic_0001>

<llo_original>
// kernel: tpu_custom_call.1
$region0: #{tpu_custom_call.1}
  #allocation0 [shape = 'u32[]', space=smem, size = 0x4, offset = 0x4, fixed_abs, tag = 'smem constant byte address 0x4 - core index']
  #allocation1 [shape = 'u32[72,128]{1,0:T(1,128)}', space=vmem, size = 0x9000, scoped, tag = 'internal scratch']
  %s0 = inlined_call_operand.hbm [shape: f32[8,2,512], index: 0, kind: input, shape index: {}]
  %s1 = inlined_call_operand.hbm [shape: bf16[128,512], index: 1, kind: input, shape index: {}]
  %s2 = inlined_call_operand.hbm [shape: bf16[256,512], index: 2, kind: input, shape index: {}]
  %s3 = inlined_call_operand.hbm [shape: f32[1,512], index: 3, kind: input, shape index: {}]
  %s4 = inlined_call_operand.hbm [shape: bf16[128,128], index: 4, kind: input, shape index: {}]
  %s5 = inlined_call_operand.vmem [shape: f32[1,128], index: 5, kind: input, shape index: {}]
  %s6 = inlined_call_operand.hbm [shape: f32[2,128], index: 6, kind: output, shape index: {}]
  %s7 = sld [smem:[#allocation0]]
  $region54: #{tpu_custom_call.1} parent=0
    _
  %s9 = ssub.s32 1, %s7
  %s10 = scalar_select 0, %s9, %s7
  $region1: #{tpu_custom_call.1} parent=0
    #allocation2 [shape = 'u8[32768]{0}', space=vmem, size = 0x8000, scoped, tag = 'input window, operand 0, single buffered']
    #allocation3 [shape = 's32[1]{0}', space=sflag, size = 0x4, scoped, tag = 'scoped memory for tpu_custom_call.1']
    #allocation4 [shape = 's32[1]{0}', space=sflag, size = 0x4, scoped, tag = 'scoped memory for tpu_custom_call.1']
    #allocation5 [shape = 'u8[131072]{0}', space=vmem, size = 0x20000, scoped, tag = 'input window, operand 1, single buffered']
    #allocation6 [shape = 's32[1]{0}', space=sflag, size = 0x4, scoped, tag = 'scoped memory for tpu_custom_call.1']
    #allocation7 [shape = 'u8[262144]{0}', space=vmem, size = 0x40000, scoped, tag = 'input window, operand 2, single buffered']
    #allocation8 [shape = 'u8[2048]{0}', space=vmem, size = 0x800, scoped, tag = 'input window, operand 3, single buffered']
    #allocation9 [shape = 's32[1]{0}', space=sflag, size = 0x4, scoped, tag = 'scoped memory for tpu_custom_call.1']
    #allocation10 [shape = 'u8[32768]{0}', space=vmem, size = 0x8000, scoped, tag = 'input window, operand 4, single buffered']
    #allocation11 [shape = 'u8[1024]{0}', space=vmem, size = 0x400, scoped, tag = 'output window, operand 0, single buffered']
    %11 = vsyncpa [#allocation3], 0
    %12 = vsyncpa [#allocation6], 0
    %13 = vsyncpa [#allocation9], 0
    %14 = vsyncpa [#allocation4], 0
    // Predicated region
    $region2: #{tpu_custom_call.1} parent=1 // pred_check
      _
    $region3: #{tpu_custom_call.1} parent=1 // pred_check_branch
      %16 = sbr.rel (0) target = $region5
    $region4: #{tpu_custom_call.1} parent=1 // pred_region
      %18 = vsyncadd [#allocation3], 0
      %s19 = sshll.u32 %s0, 4
      %s20 = int_to_ptr.hbm [resolvable:$true] %s19
      %s21 = sshll.u32 [#allocation2], 4
      %s22 = int_to_ptr.vmem [resolvable:$true] %s21
      %27 = dma.hbm_to_vmem [thread:$0]  %s20, 1024, %s22, [#allocation3], 128, 128, 8
    $region5: #{tpu_custom_call.1} parent=1 // pred_fallthru
      _
    // Predicated region
    $region6: #{tpu_custom_call.1} parent=1 // pred_check
      _
    $region7: #{tpu_custom_call.1} parent=1 // pred_check_branch
      %29 = sbr.rel (0) target = $region9
    $region8: #{tpu_custom_call.1} parent=1 // pred_region
      %31 = vsyncadd [#allocation6], 0
      %s32 = sshll.u32 %s1, 4
      %s33 = int_to_ptr.hbm [resolvable:$true] %s32
      %s34 = sshll.u32 [#allocation5], 4
      %s35 = int_to_ptr.vmem [resolvable:$true] %s34
      %40 = dma.hbm_to_vmem [thread:$0]  %s33, 4096, %s35, [#allocation6], 256, 256, 16
    $region9: #{tpu_custom_call.1} parent=1 // pred_fallthru
      _
    // Predicated region
    $region10: #{tpu_custom_call.1} parent=1 // pred_check
      _
    $region11: #{tpu_custom_call.1} parent=1 // pred_check_branch
      %42 = sbr.rel (0) target = $region13
    $region12: #{tpu_custom_call.1} parent=1 // pred_region
      %44 = vsyncadd [#allocation6], 0
      %s45 = sshll.u32 %s2, 4
      %s46 = int_to_ptr.hbm [resolvable:$true] %s45
      %s47 = sshll.u32 [#allocation7], 4
      %s48 = int_to_ptr.vmem [resolvable:$true] %s47
      %53 = dma.hbm_to_vmem [thread:$0]  %s46, 8192, %s48, [#allocation6], 256, 256, 16
    $region13: #{tpu_custom_call.1} parent=1 // pred_fallthru
      _
    // Predicated region
    $region14: #{tpu_custom_call.1} parent=1 // pred_check
      _
    $region15: #{tpu_custom_call.1} parent=1 // pred_check_branch
      %55 = sbr.rel (0) target = $region17
    $region16: #{tpu_custom_call.1} parent=1 // pred_region
      %57 = vsyncadd [#allocation9], 0
      %s59 = sshll.u32 %s3, 4
      %s60 = int_to_ptr.hbm [resolvable:$true] %s59
      %s61 = sshll.u32 [#allocation8], 4
      %s62 = int_to_ptr.vmem [resolvable:$true] %s61
      %64 = dma.hbm_to_vmem [thread:$0]  %s60, 64, %s62, [#allocation9]
    $region17: #{tpu_custom_call.1} parent=1 // pred_fallthru
      _
    // Predicated region
    $region18: #{tpu_custom_call.1} parent=1 // pred_check
      _
    $region19: #{tpu_custom_call.1} parent=1 // pred_check_branch
      %66 = sbr.rel (0) target = $region21
    $region20: #{tpu_custom_call.1} parent=1 // pred_region
      %68 = vsyncadd [#allocation9], 0
      %s69 = sshll.u32 %s4, 4
      %s70 = int_to_ptr.hbm [resolvable:$true] %s69
      %s71 = sshll.u32 [#allocation10], 4
      %s72 = int_to_ptr.vmem [resolvable:$true] %s71
      %77 = dma.hbm_to_vmem [thread:$0]  %s70, 1024, %s72, [#allocation9], 64, 64, 4
    $region21: #{tpu_custom_call.1} parent=1 // pred_fallthru
      _
    // Predicated region
    $region22: #{tpu_custom_call.1} parent=1 // pred_check
      _
    $region23: #{tpu_custom_call.1} parent=1 // pred_check_branch
      %79 = sbr.rel (0) target = $region25
    $region24: #{tpu_custom_call.1} parent=1 // pred_region
      _
    $region25: #{tpu_custom_call.1} parent=1 // pred_fallthru
      _
    // Predicated region
    $region26: #{tpu_custom_call.1} parent=1 // pred_check
      _
    $region27: #{tpu_custom_call.1} parent=1 // pred_check_branch
      %81 = sbr.rel (0) target = $region29
    $region28: #{tpu_custom_call.1} parent=1 // pred_region
      %83 = dma.done [#allocation3], 1024
    $region29: #{tpu_custom_call.1} parent=1 // pred_fallthru
      _
    // Predicated region
    $region30: #{tpu_custom_call.1} parent=1 // pred_check
      _
    $region31: #{tpu_custom_call.1} parent=1 // pred_check_branch
      %85 = sbr.rel (0) target = $region33
    $region32: #{tpu_custom_call.1} parent=1 // pred_region
      %87 = dma.done [#allocation6], 4096
    $region33: #{tpu_custom_call.1} parent=1 // pred_fallthru
      _
    // Predicated region
    $region34: #{tpu_custom_call.1} parent=1 // pred_check
      _
    $region35: #{tpu_custom_call.1} parent=1 // pred_check_branch
      %89 = sbr.rel (0) target = $region37
    $region36: #{tpu_custom_call.1} parent=1 // pred_region
      %91 = dma.done [#allocation6], 8192
    $region37: #{tpu_custom_call.1} parent=1 // pred_fallthru
      _
    // Predicated region
    $region38: #{tpu_custom_call.1} parent=1 // pred_check
      _
    $region39: #{tpu_custom_call.1} parent=1 // pred_check_branch
      %93 = sbr.rel (0) target = $region41
    $region40: #{tpu_custom_call.1} parent=1 // pred_region
      %95 = dma.done [#allocation9], 64
    $region41: #{tpu_custom_call.1} parent=1 // pred_fallthru
      _
    // Predicated region
    $region42: #{tpu_custom_call.1} parent=1 // pred_check
      _
    $region43: #{tpu_custom_call.1} parent=1 // pred_check_branch
      %97 = sbr.rel (0) target = $region45
    $region44: #{tpu_custom_call.1} parent=1 // pred_region
      %99 = dma.done [#allocation9], 1024
    $region45: #{tpu_custom_call.1} parent=1 // pred_fallthru
      _
    %v101 = vld [vmem:[#allocation8] sm:$0xf]
    %v103 = vperm.slane %v101, 0
    %v104 = vperm.slane %v101, 1
    %v105 = vperm.slane %v101, 2
    %v106 = vperm.slane %v101, 3
    %v111 = vld [vmem:[#allocation2] sm:$0xff]
    %v112 = vld [vmem:[#allocation5] sm:$0xff]
    %v113 = vld [vmem:[#allocation5 + $0x8] sm:$0xff]
    %v114 = vld [vmem:[#allocation5 + $0x10] sm:$0xff]
    %v115 = vld [vmem:[#allocation5 + $0x18] sm:$0xff]
    %v116 = vld [vmem:[#allocation5 + $0x20] sm:$0xff]
    %v117 = vld [vmem:[#allocation5 + $0x28] sm:$0xff]
    %v118 = vld [vmem:[#allocation5 + $0x30] sm:$0xff]
    %v119 = vld [vmem:[#allocation5 + $0x38] sm:$0xff]
    %v120 = vld [vmem:[#allocation5 + $0x40] sm:$0xff]
    %v121 = vld [vmem:[#allocation5 + $0x48] sm:$0xff]
    %v122 = vld [vmem:[#allocation5 + $0x50] sm:$0xff]
    %v123 = vld [vmem:[#allocation5 + $0x58] sm:$0xff]
    %v124 = vld [vmem:[#allocation5 + $0x60] sm:$0xff]
    %v125 = vld [vmem:[#allocation5 + $0x68] sm:$0xff]
    %v126 = vld [vmem:[#allocation5 + $0x70] sm:$0xff]
    %v127 = vld [vmem:[#allocation5 + $0x78] sm:$0xff]
    %v128 = vld [vmem:[#allocation5 + $0x80] sm:$0xff]
    %v129 = vld [vmem:[#allocation5 + $0x88] sm:$0xff]
    %v130 = vld [vmem:[#allocation5 + $0x90] sm:$0xff]
    %v131 = vld [vmem:[#allocation5 + $0x98] sm:$0xff]
    %v132 = vld [vmem:[#allocation5 + $0xa0] sm:$0xff]
    %v133 = vld [vmem:[#allocation5 + $0xa8] sm:$0xff]
    %v134 = vld [vmem:[#allocation5 + $0xb0] sm:$0xff]
    %v135 = vld [vmem:[#allocation5 + $0xb8] sm:$0xff]
    %v136 = vld [vmem:[#allocation5 + $0xc0] sm:$0xff]
    %v137 = vld [vmem:[#allocation5 + $0xc8] sm:$0xff]
    %v138 = vld [vmem:[#allocation5 + $0xd0] sm:$0xff]
    %v139 = vld [vmem:[#allocation5 + $0xd8] sm:$0xff]
    %v140 = vld [vmem:[#allocation5 + $0xe0] sm:$0xff]
    %v141 = vld [vmem:[#allocation5 + $0xe8] sm:$0xff]
    %v142 = vld [vmem:[#allocation5 + $0xf0] sm:$0xff]
    %v143 = vld [vmem:[#allocation5 + $0xf8] sm:$0xff]
    %v176 = vunpack.c.l.b16 %v112
    %v177 = vunpack.c.h.b16 %v112
    %v178 = vunpack.c.l.b16 %v113
    %v179 = vunpack.c.h.b16 %v113
    %v180 = vunpack.c.l.b16 %v114
    %v181 = vunpack.c.h.b16 %v114
    %v182 = vunpack.c.l.b16 %v115
    %v183 = vunpack.c.h.b16 %v115
    %v184 = vunpack.c.l.b16 %v116
    %v185 = vunpack.c.h.b16 %v116
    %v186 = vunpack.c.l.b16 %v117
    %v187 = vunpack.c.h.b16 %v117
    %v188 = vunpack.c.l.b16 %v118
    %v189 = vunpack.c.h.b16 %v118
    %v190 = vunpack.c.l.b16 %v119
    %v191 = vunpack.c.h.b16 %v119
    %v192 = vunpack.c.l.b16 %v120
    %v193 = vunpack.c.h.b16 %v120
    %v194 = vunpack.c.l.b16 %v121
    %v195 = vunpack.c.h.b16 %v121
    %v196 = vunpack.c.l.b16 %v122
    %v197 = vunpack.c.h.b16 %v122
    %v198 = vunpack.c.l.b16 %v123
    %v199 = vunpack.c.h.b16 %v123
    %v200 = vunpack.c.l.b16 %v124
    %v201 = vunpack.c.h.b16 %v124
    %v202 = vunpack.c.l.b16 %v125
    %v203 = vunpack.c.h.b16 %v125
    %v204 = vunpack.c.l.b16 %v126
    %v205 = vunpack.c.h.b16 %v126
    %v206 = vunpack.c.l.b16 %v127
    %v207 = vunpack.c.h.b16 %v127
    %v208 = vunpack.c.l.b16 %v128
    %v209 = vunpack.c.h.b16 %v128
    %v210 = vunpack.c.l.b16 %v129
    %v211 = vunpack.c.h.b16 %v129
    %v212 = vunpack.c.l.b16 %v130
    %v213 = vunpack.c.h.b16 %v130
    %v214 = vunpack.c.l.b16 %v131
    %v215 = vunpack.c.h.b16 %v131
    %v216 = vunpack.c.l.b16 %v132
    %v217 = vunpack.c.h.b16 %v132
    %v218 = vunpack.c.l.b16 %v133
    %v219 = vunpack.c.h.b16 %v133
    %v220 = vunpack.c.l.b16 %v134
    %v221 = vunpack.c.h.b16 %v134
    %v222 = vunpack.c.l.b16 %v135
    %v223 = vunpack.c.h.b16 %v135
    %v224 = vunpack.c.l.b16 %v136
    %v225 = vunpack.c.h.b16 %v136
    %v226 = vunpack.c.l.b16 %v137
    %v227 = vunpack.c.h.b16 %v137
    %v228 = vunpack.c.l.b16 %v138
    %v229 = vunpack.c.h.b16 %v138
    %v230 = vunpack.c.l.b16 %v139
    %v231 = vunpack.c.h.b16 %v139
    %v232 = vunpack.c.l.b16 %v140
    %v233 = vunpack.c.h.b16 %v140
    %v234 = vunpack.c.l.b16 %v141
    %v235 = vunpack.c.h.b16 %v141
    %v236 = vunpack.c.l.b16 %v142
    %v237 = vunpack.c.h.b16 %v142
    %v238 = vunpack.c.l.b16 %v143
    %v239 = vunpack.c.h.b16 %v143
    %v240 = vpack.c.b16 %v180, %v176
    %v241 = vpack.c.b16 %v181, %v177
    %v242 = vpack.c.b16 %v182, %v178
    %v243 = vpack.c.b16 %v183, %v179
    %v244 = vpack.c.b16 %v188, %v184
    %v245 = vpack.c.b16 %v189, %v185
    %v246 = vpack.c.b16 %v190, %v186
    %v247 = vpack.c.b16 %v191, %v187
    %v248 = vpack.c.b16 %v196, %v192
    %v249 = vpack.c.b16 %v197, %v193
    %v250 = vpack.c.b16 %v198, %v194
    %v251 = vpack.c.b16 %v199, %v195
    %v252 = vpack.c.b16 %v204, %v200
    %v253 = vpack.c.b16 %v205, %v201
    %v254 = vpack.c.b16 %v206, %v202
    %v255 = vpack.c.b16 %v207, %v203
    %v256 = vpack.c.b16 %v212, %v208
    %v257 = vpack.c.b16 %v213, %v209
    %v258 = vpack.c.b16 %v214, %v210
    %v259 = vpack.c.b16 %v215, %v211
    %v260 = vpack.c.b16 %v220, %v216
    %v261 = vpack.c.b16 %v221, %v217
    %v262 = vpack.c.b16 %v222, %v218
    %v263 = vpack.c.b16 %v223, %v219
    %v264 = vpack.c.b16 %v228, %v224
    %v265 = vpack.c.b16 %v229, %v225
    %v266 = vpack.c.b16 %v230, %v226
    %v267 = vpack.c.b16 %v231, %v227
    %v268 = vpack.c.b16 %v236, %v232
    %v269 = vpack.c.b16 %v237, %v233
    %v270 = vpack.c.b16 %v238, %v234
    %v271 = vpack.c.b16 %v239, %v235
    %304 = vmatpush.bf16.msra.mxu0 %v268
    %305 = vmatpush.bf16.msra.mxu0 %v264
    %306 = vmatpush.bf16.msra.mxu0 %v260
    %307 = vmatpush.bf16.msra.mxu0 %v256
    %308 = vmatpush.bf16.msra.mxu0 %v252
    %309 = vmatpush.bf16.msra.mxu0 %v248
    %310 = vmatpush.bf16.msra.mxu0 %v244
    %311 = vmatpush.bf16.msra.mxu0 %v240
    %312 = vmatmul.bf16.gmra.mxu0 0
    %v313 = vpop.f32.mrf.mxu0
    %v314 = vadd.f32 0.0, %v313
    %v315 = vpop.f32.mrf.mxu0
    %316 = vdwg.mxu0
    %317 = vmatpush.bf16.msra.mxu0 %v269
    %318 = vmatpush.bf16.msra.mxu0 %v265
    %319 = vmatpush.bf16.msra.mxu0 %v261
    %320 = vmatpush.bf16.msra.mxu0 %v257
    %321 = vmatpush.bf16.msra.mxu0 %v253
    %322 = vmatpush.bf16.msra.mxu0 %v249
    %323 = vmatpush.bf16.msra.mxu0 %v245
    %324 = vmatpush.bf16.msra.mxu0 %v241
    %325 = vmatmul.bf16.gmra.mxu0 0
    %v326 = vpop.f32.mrf.mxu0
    %v327 = vadd.f32 0.0, %v326
    %v328 = vpop.f32.mrf.mxu0
    %329 = vdwg.mxu0
    %330 = vmatpush.bf16.msra.mxu0 %v270
    %331 = vmatpush.bf16.msra.mxu0 %v266
    %332 = vmatpush.bf16.msra.mxu0 %v262
    %333 = vmatpush.bf16.msra.mxu0 %v258
    %334 = vmatpush.bf16.msra.mxu0 %v254
    %335 = vmatpush.bf16.msra.mxu0 %v250
    %336 = vmatpush.bf16.msra.mxu0 %v246
    %337 = vmatpush.bf16.msra.mxu0 %v242
    %338 = vmatmul.bf16.gmra.mxu0 0
    %v339 = vpop.f32.mrf.mxu0
    %v340 = vadd.f32 0.0, %v339
    %v341 = vpop.f32.mrf.mxu0
    %342 = vdwg.mxu0
    %343 = vmatpush.bf16.msra.mxu0 %v271
    %344 = vmatpush.bf16.msra.mxu0 %v267
    %345 = vmatpush.bf16.msra.mxu0 %v263
    %346 = vmatpush.bf16.msra.mxu0 %v259
    %347 = vmatpush.bf16.msra.mxu0 %v255
    %348 = vmatpush.bf16.msra.mxu0 %v251
    %349 = vmatpush.bf16.msra.mxu0 %v247
    %350 = vmatpush.bf16.msra.mxu0 %v243
    %351 = vmatmul.bf16.gmra.mxu0 0
    %v352 = vpop.f32.mrf.mxu0
    %v353 = vadd.f32 0.0, %v352
    %v354 = vpop.f32.mrf.mxu0
    %355 = vdwg.mxu0
    %v360 = vrot.slane %v327, 6
    %v361 = vrot.slane %v340, 4
    %v362 = vrot.slane %v353, 2
    %vm363 = vcmask 1041408
    %v364 = vsel %vm363, %v314, %v360
    %vm365 = vcmask 1045508
    %v366 = vsel %vm365, %v361, %v362
    %vm367 = vcmask 1043456
    %v368 = vsel %vm367, %v364, %v366
    %v370 = vadd.f32 %v111, %v368
    %v371 = vtanh.pop %v370
    %v372 = vmul.f32 %v371, 0.5
    %v373 = vadd.f32 %v372, 0.5
    %v375 = vrot.slane %v371, 2
    %v377 = vmul.f32 %v375, 0.5
    %v378 = vadd.f32 %v377, 0.5
    %v379 = vrot.slane %v371, 6
    %v381 = vmul.f32 %v379, 0.5
    %v382 = vadd.f32 %v381, 0.5
    %v383 = vmul.f32 %v378, 0.0
    %v384 = vrot.slane %v371, 4
    %v386 = vmul.f32 %v373, %v384
    %v387 = vadd.f32 %v383, %v386
    %v388 = vtanh.pop %v387
    %v389 = vmul.f32 %v382, %v388
    %v390 = vpack.c.bf16 %v389, %v389
    %v391 = vld [vmem:[#allocation7] sm:$0xff]
    %v392 = vld [vmem:[#allocation7 + $0x8] sm:$0xff]
    %v393 = vld [vmem:[#allocation7 + $0x10] sm:$0xff]
    %v394 = vld [vmem:[#allocation7 + $0x18] sm:$0xff]
    %v395 = vld [vmem:[#allocation7 + $0x20] sm:$0xff]
    %v396 = vld [vmem:[#allocation7 + $0x28] sm:$0xff]
    %v397 = vld [vmem:[#allocation7 + $0x30] sm:$0xff]
    %v398 = vld [vmem:[#allocation7 + $0x38] sm:$0xff]
    %v399 = vld [vmem:[#allocation7 + $0x40] sm:$0xff]
    %v400 = vld [vmem:[#allocation7 + $0x48] sm:$0xff]
    %v401 = vld [vmem:[#allocation7 + $0x50] sm:$0xff]
    %v402 = vld [vmem:[#allocation7 + $0x58] sm:$0xff]
    %v403 = vld [vmem:[#allocation7 + $0x60] sm:$0xff]
    %v404 = vld [vmem:[#allocation7 + $0x68] sm:$0xff]
    %v405 = vld [vmem:[#allocation7 + $0x70] sm:$0xff]
    %v406 = vld [vmem:[#allocation7 + $0x78] sm:$0xff]
    %v407 = vld [vmem:[#allocation7 + $0x80] sm:$0xff]
    %v408 = vld [vmem:[#allocation7 + $0x88] sm:$0xff]
    %v409 = vld [vmem:[#allocation7 + $0x90] sm:$0xff]
    %v410 = vld [vmem:[#allocation7 + $0x98] sm:$0xff]
    %v411 = vld [vmem:[#allocation7 + $0xa0] sm:$0xff]
    %v412 = vld [vmem:[#allocation7 + $0xa8] sm:$0xff]
    %v413 = vld [vmem:[#allocation7 + $0xb0] sm:$0xff]
    %v414 = vld [vmem:[#allocation7 + $0xb8] sm:$0xff]
    %v415 = vld [vmem:[#allocation7 + $0xc0] sm:$0xff]
    %v416 = vld [vmem:[#allocation7 + $0xc8] sm:$0xff]
    %v417 = vld [vmem:[#allocation7 + $0xd0] sm:$0xff]
    %v418 = vld [vmem:[#allocation7 + $0xd8] sm:$0xff]
    %v419 = vld [vmem:[#allocation7 + $0xe0] sm:$0xff]
    %v420 = vld [vmem:[#allocation7 + $0xe8] sm:$0xff]
    %v421 = vld [vmem:[#allocation7 + $0xf0] sm:$0xff]
    %v422 = vld [vmem:[#allocation7 + $0xf8] sm:$0xff]
    %v423 = vld [vmem:[#allocation7 + $0x100] sm:$0xff]
    %v424 = vld [vmem:[#allocation7 + $0x108] sm:$0xff]
    %v425 = vld [vmem:[#allocation7 + $0x110] sm:$0xff]
    %v426 = vld [vmem:[#allocation7 + $0x118] sm:$0xff]
    %v427 = vld [vmem:[#allocation7 + $0x120] sm:$0xff]
    %v428 = vld [vmem:[#allocation7 + $0x128] sm:$0xff]
    %v429 = vld [vmem:[#allocation7 + $0x130] sm:$0xff]
    %v430 = vld [vmem:[#allocation7 + $0x138] sm:$0xff]
    %v431 = vld [vmem:[#allocation7 + $0x140] sm:$0xff]
    %v432 = vld [vmem:[#allocation7 + $0x148] sm:$0xff]
    %v433 = vld [vmem:[#allocation7 + $0x150] sm:$0xff]
    %v434 = vld [vmem:[#allocation7 + $0x158] sm:$0xff]
    %v435 = vld [vmem:[#allocation7 + $0x160] sm:$0xff]
    %v436 = vld [vmem:[#allocation7 + $0x168] sm:$0xff]
    %v437 = vld [vmem:[#allocation7 + $0x170] sm:$0xff]
    %v438 = vld [vmem:[#allocation7 + $0x178] sm:$0xff]
    %v439 = vld [vmem:[#allocation7 + $0x180] sm:$0xff]
    %v440 = vld [vmem:[#allocation7 + $0x188] sm:$0xff]
    %v441 = vld [vmem:[#allocation7 + $0x190] sm:$0xff]
    %v442 = vld [vmem:[#allocation7 + $0x198] sm:$0xff]
    %v443 = vld [vmem:[#allocation7 + $0x1a0] sm:$0xff]
    %v444 = vld [vmem:[#allocation7 + $0x1a8] sm:$0xff]
    %v445 = vld [vmem:[#allocation7 + $0x1b0] sm:$0xff]
    %v446 = vld [vmem:[#allocation7 + $0x1b8] sm:$0xff]
    %v447 = vld [vmem:[#allocation7 + $0x1c0] sm:$0xff]
    %v448 = vld [vmem:[#allocation7 + $0x1c8] sm:$0xff]
    %v449 = vld [vmem:[#allocation7 + $0x1d0] sm:$0xff]
    %v450 = vld [vmem:[#allocation7 + $0x1d8] sm:$0xff]
    %v451 = vld [vmem:[#allocation7 + $0x1e0] sm:$0xff]
    %v452 = vld [vmem:[#allocation7 + $0x1e8] sm:$0xff]
    %v453 = vld [vmem:[#allocation7 + $0x1f0] sm:$0xff]
    %v454 = vld [vmem:[#allocation7 + $0x1f8] sm:$0xff]
    %v519 = vunpack.c.l.b16 %v391
    %v520 = vunpack.c.h.b16 %v391
    %v521 = vunpack.c.l.b16 %v392
    %v522 = vunpack.c.h.b16 %v392
    %v523 = vunpack.c.l.b16 %v393
    %v524 = vunpack.c.h.b16 %v393
    %v525 = vunpack.c.l.b16 %v394
    %v526 = vunpack.c.h.b16 %v394
    %v527 = vunpack.c.l.b16 %v395
    %v528 = vunpack.c.h.b16 %v395
    %v529 = vunpack.c.l.b16 %v396
    %v530 = vunpack.c.h.b16 %v396
    %v531 = vunpack.c.l.b16 %v397
    %v532 = vunpack.c.h.b16 %v397
    %v533 = vunpack.c.l.b16 %v398
    %v534 = vunpack.c.h.b16 %v398
    %v535 = vunpack.c.l.b16 %v399
    %v536 = vunpack.c.h.b16 %v399
    %v537 = vunpack.c.l.b16 %v400
    %v538 = vunpack.c.h.b16 %v400
    %v539 = vunpack.c.l.b16 %v401
    %v540 = vunpack.c.h.b16 %v401
    %v541 = vunpack.c.l.b16 %v402
    %v542 = vunpack.c.h.b16 %v402
    %v543 = vunpack.c.l.b16 %v403
    %v544 = vunpack.c.h.b16 %v403
    %v545 = vunpack.c.l.b16 %v404
    %v546 = vunpack.c.h.b16 %v404
    %v547 = vunpack.c.l.b16 %v405
    %v548 = vunpack.c.h.b16 %v405
    %v549 = vunpack.c.l.b16 %v406
    %v550 = vunpack.c.h.b16 %v406
    %v551 = vunpack.c.l.b16 %v407
    %v552 = vunpack.c.h.b16 %v407
    %v553 = vunpack.c.l.b16 %v408
    %v554 = vunpack.c.h.b16 %v408
    %v555 = vunpack.c.l.b16 %v409
    %v556 = vunpack.c.h.b16 %v409
    %v557 = vunpack.c.l.b16 %v410
    %v558 = vunpack.c.h.b16 %v410
    %v559 = vunpack.c.l.b16 %v411
    %v560 = vunpack.c.h.b16 %v411
    %v561 = vunpack.c.l.b16 %v412
    %v562 = vunpack.c.h.b16 %v412
    %v563 = vunpack.c.l.b16 %v413
    %v564 = vunpack.c.h.b16 %v413
    %v565 = vunpack.c.l.b16 %v414
    %v566 = vunpack.c.h.b16 %v414
    %v567 = vunpack.c.l.b16 %v415
    %v568 = vunpack.c.h.b16 %v415
    %v569 = vunpack.c.l.b16 %v416
    %v570 = vunpack.c.h.b16 %v416
    %v571 = vunpack.c.l.b16 %v417
    %v572 = vunpack.c.h.b16 %v417
    %v573 = vunpack.c.l.b16 %v418
    %v574 = vunpack.c.h.b16 %v418
    %v575 = vunpack.c.l.b16 %v419
    %v576 = vunpack.c.h.b16 %v419
    %v577 = vunpack.c.l.b16 %v420
    %v578 = vunpack.c.h.b16 %v420
    %v579 = vunpack.c.l.b16 %v421
    %v580 = vunpack.c.h.b16 %v421
    %v581 = vunpack.c.l.b16 %v422
    %v582 = vunpack.c.h.b16 %v422
    %v583 = vunpack.c.l.b16 %v423
    %v584 = vunpack.c.h.b16 %v423
    %v585 = vunpack.c.l.b16 %v424
    %v586 = vunpack.c.h.b16 %v424
    %v587 = vunpack.c.l.b16 %v425
    %v588 = vunpack.c.h.b16 %v425
    %v589 = vunpack.c.l.b16 %v426
    %v590 = vunpack.c.h.b16 %v426
    %v591 = vunpack.c.l.b16 %v427
    %v592 = vunpack.c.h.b16 %v427
    %v593 = vunpack.c.l.b16 %v428
    %v594 = vunpack.c.h.b16 %v428
    %v595 = vunpack.c.l.b16 %v429
    %v596 = vunpack.c.h.b16 %v429
    %v597 = vunpack.c.l.b16 %v430
    %v598 = vunpack.c.h.b16 %v430
    %v599 = vunpack.c.l.b16 %v431
    %v600 = vunpack.c.h.b16 %v431
    %v601 = vunpack.c.l.b16 %v432
    %v602 = vunpack.c.h.b16 %v432
    %v603 = vunpack.c.l.b16 %v433
    %v604 = vunpack.c.h.b16 %v433
    %v605 = vunpack.c.l.b16 %v434
    %v606 = vunpack.c.h.b16 %v434
    %v607 = vunpack.c.l.b16 %v435
    %v608 = vunpack.c.h.b16 %v435
    %v609 = vunpack.c.l.b16 %v436
    %v610 = vunpack.c.h.b16 %v436
    %v611 = vunpack.c.l.b16 %v437
    %v612 = vunpack.c.h.b16 %v437
    %v613 = vunpack.c.l.b16 %v438
    %v614 = vunpack.c.h.b16 %v438
    %v615 = vunpack.c.l.b16 %v439
    %v616 = vunpack.c.h.b16 %v439
    %v617 = vunpack.c.l.b16 %v440
    %v618 = vunpack.c.h.b16 %v440
    %v619 = vunpack.c.l.b16 %v441
    %v620 = vunpack.c.h.b16 %v441
    %v621 = vunpack.c.l.b16 %v442
    %v622 = vunpack.c.h.b16 %v442
    %v623 = vunpack.c.l.b16 %v443
    %v624 = vunpack.c.h.b16 %v443
    %v625 = vunpack.c.l.b16 %v444
    %v626 = vunpack.c.h.b16 %v444
    %v627 = vunpack.c.l.b16 %v445
    %v628 = vunpack.c.h.b16 %v445
    %v629 = vunpack.c.l.b16 %v446
    %v630 = vunpack.c.h.b16 %v446
    %v631 = vunpack.c.l.b16 %v447
    %v632 = vunpack.c.h.b16 %v447
    %v633 = vunpack.c.l.b16 %v448
    %v634 = vunpack.c.h.b16 %v448
    %v635 = vunpack.c.l.b16 %v449
    %v636 = vunpack.c.h.b16 %v449
    %v637 = vunpack.c.l.b16 %v450
    %v638 = vunpack.c.h.b16 %v450
    %v639 = vunpack.c.l.b16 %v451
    %v640 = vunpack.c.h.b16 %v451
    %v641 = vunpack.c.l.b16 %v452
    %v642 = vunpack.c.h.b16 %v452
    %v643 = vunpack.c.l.b16 %v453
    %v644 = vunpack.c.h.b16 %v453
    %v645 = vunpack.c.l.b16 %v454
    %v646 = vunpack.c.h.b16 %v454
    %v647 = vpack.c.b16 %v523, %v519
    %v648 = vpack.c.b16 %v524, %v520
    %v649 = vpack.c.b16 %v525, %v521
    %v650 = vpack.c.b16 %v526, %v522
    %v651 = vpack.c.b16 %v531, %v527
    %v652 = vpack.c.b16 %v532, %v528
    %v653 = vpack.c.b16 %v533, %v529
    %v654 = vpack.c.b16 %v534, %v530
    %v655 = vpack.c.b16 %v539, %v535
    %v656 = vpack.c.b16 %v540, %v536
    %v657 = vpack.c.b16 %v541, %v537
    %v658 = vpack.c.b16 %v542, %v538
    %v659 = vpack.c.b16 %v547, %v543
    %v660 = vpack.c.b16 %v548, %v544
    %v661 = vpack.c.b16 %v549, %v545
    %v662 = vpack.c.b16 %v550, %v546
    %v663 = vpack.c.b16 %v555, %v551
    %v664 = vpack.c.b16 %v556, %v552
    %v665 = vpack.c.b16 %v557, %v553
    %v666 = vpack.c.b16 %v558, %v554
    %v667 = vpack.c.b16 %v563, %v559
    %v668 = vpack.c.b16 %v564, %v560
    %v669 = vpack.c.b16 %v565, %v561
    %v670 = vpack.c.b16 %v566, %v562
    %v671 = vpack.c.b16 %v571, %v567
    %v672 = vpack.c.b16 %v572, %v568
    %v673 = vpack.c.b16 %v573, %v569
    %v674 = vpack.c.b16 %v574, %v570
    %v675 = vpack.c.b16 %v579, %v575
    %v676 = vpack.c.b16 %v580, %v576
    %v677 = vpack.c.b16 %v581, %v577
    %v678 = vpack.c.b16 %v582, %v578
    %v679 = vpack.c.b16 %v587, %v583
    %v680 = vpack.c.b16 %v588, %v584
    %v681 = vpack.c.b16 %v589, %v585
    %v682 = vpack.c.b16 %v590, %v586
    %v683 = vpack.c.b16 %v595, %v591
    %v684 = vpack.c.b16 %v596, %v592
    %v685 = vpack.c.b16 %v597, %v593
    %v686 = vpack.c.b16 %v598, %v594
    %v687 = vpack.c.b16 %v603, %v599
    %v688 = vpack.c.b16 %v604, %v600
    %v689 = vpack.c.b16 %v605, %v601
    %v690 = vpack.c.b16 %v606, %v602
    %v691 = vpack.c.b16 %v611, %v607
    %v692 = vpack.c.b16 %v612, %v608
    %v693 = vpack.c.b16 %v613, %v609
    %v694 = vpack.c.b16 %v614, %v610
    %v695 = vpack.c.b16 %v619, %v615
    %v696 = vpack.c.b16 %v620, %v616
    %v697 = vpack.c.b16 %v621, %v617
    %v698 = vpack.c.b16 %v622, %v618
    %v699 = vpack.c.b16 %v627, %v623
    %v700 = vpack.c.b16 %v628, %v624
    %v701 = vpack.c.b16 %v629, %v625
    %v702 = vpack.c.b16 %v630, %v626
    %v703 = vpack.c.b16 %v635, %v631
    %v704 = vpack.c.b16 %v636, %v632
    %v705 = vpack.c.b16 %v637, %v633
    %v706 = vpack.c.b16 %v638, %v634
    %v707 = vpack.c.b16 %v643, %v639
    %v708 = vpack.c.b16 %v644, %v640
    %v709 = vpack.c.b16 %v645, %v641
    %v710 = vpack.c.b16 %v646, %v642
    %775 = vmatpush.bf16.msra.mxu0 %v675
    %776 = vmatpush.bf16.msra.mxu0 %v671
    %777 = vmatpush.bf16.msra.mxu0 %v667
    %778 = vmatpush.bf16.msra.mxu0 %v663
    %779 = vmatpush.bf16.msra.mxu0 %v659
    %780 = vmatpush.bf16.msra.mxu0 %v655
    %781 = vmatpush.bf16.msra.mxu0 %v651
    %782 = vmatpush.bf16.msra.mxu0 %v647
    %783 = vmatmul.bf16.gmra.mxu0 %v390
    %v784 = vpop.f32.mrf.mxu0
    %v785 = vadd.f32 %v103, %v784
    %v786 = vpop.f32.mrf.mxu0
    %787 = vdwg.mxu0
    %788 = vmatpush.bf16.msra.mxu0 %v707
    %789 = vmatpush.bf16.msra.mxu0 %v703
    %790 = vmatpush.bf16.msra.mxu0 %v699
    %791 = vmatpush.bf16.msra.mxu0 %v695
    %792 = vmatpush.bf16.msra.mxu0 %v691
    %793 = vmatpush.bf16.msra.mxu0 %v687
    %794 = vmatpush.bf16.msra.mxu0 %v683
    %795 = vmatpush.bf16.msra.mxu0 %v679
    %796 = vmatmul.bf16.gmra.mxu0 0
    %v797 = vpop.f32.mrf.mxu0
    %v798 = vadd.f32 %v785, %v797
    %v799 = vpop.f32.mrf.mxu0
    %800 = vdwg.mxu0
    %801 = vmatpush.bf16.msra.mxu0 %v676
    %802 = vmatpush.bf16.msra.mxu0 %v672
    %803 = vmatpush.bf16.msra.mxu0 %v668
    %804 = vmatpush.bf16.msra.mxu0 %v664
    %805 = vmatpush.bf16.msra.mxu0 %v660
    %806 = vmatpush.bf16.msra.mxu0 %v656
    %807 = vmatpush.bf16.msra.mxu0 %v652
    %808 = vmatpush.bf16.msra.mxu0 %v648
    %809 = vmatmul.bf16.gmra.mxu0 %v390
    %v810 = vpop.f32.mrf.mxu0
    %v811 = vadd.f32 %v104, %v810
    %v812 = vpop.f32.mrf.mxu0
    %813 = vdwg.mxu0
    %814 = vmatpush.bf16.msra.mxu0 %v708
    %815 = vmatpush.bf16.msra.mxu0 %v704
    %816 = vmatpush.bf16.msra.mxu0 %v700
    %817 = vmatpush.bf16.msra.mxu0 %v696
    %818 = vmatpush.bf16.msra.mxu0 %v692
    %819 = vmatpush.bf16.msra.mxu0 %v688
    %820 = vmatpush.bf16.msra.mxu0 %v684
    %821 = vmatpush.bf16.msra.mxu0 %v680
    %822 = vmatmul.bf16.gmra.mxu0 0
    %v823 = vpop.f32.mrf.mxu0
    %v824 = vadd.f32 %v811, %v823
    %v825 = vpop.f32.mrf.mxu0
    %826 = vdwg.mxu0
    %827 = vmatpush.bf16.msra.mxu0 %v677
    %828 = vmatpush.bf16.msra.mxu0 %v673
    %829 = vmatpush.bf16.msra.mxu0 %v669
    %830 = vmatpush.bf16.msra.mxu0 %v665
    %831 = vmatpush.bf16.msra.mxu0 %v661
    %832 = vmatpush.bf16.msra.mxu0 %v657
    %833 = vmatpush.bf16.msra.mxu0 %v653
    %834 = vmatpush.bf16.msra.mxu0 %v649
    %835 = vmatmul.bf16.gmra.mxu0 %v390
    %v836 = vpop.f32.mrf.mxu0
    %v837 = vadd.f32 %v105, %v836
    %v838 = vpop.f32.mrf.mxu0
    %839 = vdwg.mxu0
    %840 = vmatpush.bf16.msra.mxu0 %v709
    %841 = vmatpush.bf16.msra.mxu0 %v705
    %842 = vmatpush.bf16.msra.mxu0 %v701
    %843 = vmatpush.bf16.msra.mxu0 %v697
    %844 = vmatpush.bf16.msra.mxu0 %v693
    %845 = vmatpush.bf16.msra.mxu0 %v689
    %846 = vmatpush.bf16.msra.mxu0 %v685
    %847 = vmatpush.bf16.msra.mxu0 %v681
    %848 = vmatmul.bf16.gmra.mxu0 0
    %v849 = vpop.f32.mrf.mxu0
    %v850 = vadd.f32 %v837, %v849
    %v851 = vpop.f32.mrf.mxu0
    %852 = vdwg.mxu0
    %853 = vmatpush.bf16.msra.mxu0 %v678
    %854 = vmatpush.bf16.msra.mxu0 %v674
    %855 = vmatpush.bf16.msra.mxu0 %v670
    %856 = vmatpush.bf16.msra.mxu0 %v666
    %857 = vmatpush.bf16.msra.mxu0 %v662
    %858 = vmatpush.bf16.msra.mxu0 %v658
    %859 = vmatpush.bf16.msra.mxu0 %v654
    %860 = vmatpush.bf16.msra.mxu0 %v650
    %861 = vmatmul.bf16.gmra.mxu0 %v390
    %v862 = vpop.f32.mrf.mxu0
    %v863 = vadd.f32 %v106, %v862
    %v864 = vpop.f32.mrf.mxu0
    %865 = vdwg.mxu0
    %866 = vmatpush.bf16.msra.mxu0 %v710
    %867 = vmatpush.bf16.msra.mxu0 %v706
    %868 = vmatpush.bf16.msra.mxu0 %v702
    %869 = vmatpush.bf16.msra.mxu0 %v698
    %870 = vmatpush.bf16.msra.mxu0 %v694
    %871 = vmatpush.bf16.msra.mxu0 %v690
    %872 = vmatpush.bf16.msra.mxu0 %v686
    %873 = vmatpush.bf16.msra.mxu0 %v682
    %874 = vmatmul.bf16.gmra.mxu0 0
    %v875 = vpop.f32.mrf.mxu0
    %v876 = vadd.f32 %v863, %v875
    %v877 = vpop.f32.mrf.mxu0
    %878 = vdwg.mxu0
    %v879 = vtanh.pop %v798
    %v880 = vtanh.pop %v824
    %v881 = vtanh.pop %v850
    %v882 = vtanh.pop %v876
    %v883 = vmul.f32 %v879, 0.5
    %v884 = vadd.f32 %v883, 0.5
    %v885 = vmul.f32 %v880, 0.5
    %v886 = vadd.f32 %v885, 0.5
    %v887 = vmul.f32 %v882, 0.5
    %v888 = vadd.f32 %v887, 0.5
    %v889 = vmul.f32 %v886, 0.0
    %v890 = vmul.f32 %v884, %v881
    %v891 = vadd.f32 %v889, %v890
    %v892 = vtanh.pop %v891
    %v893 = vmul.f32 %v888, %v892
    %v894 = vpack.c.bf16 %v893, %v893
    %s895 = scalar_lea.vmem [#allocation2], 8
    %v896 = vld [vmem:[%s895] sm:$0xff]
    %897 = vmatpush.bf16.msra.mxu0 %v268
    %898 = vmatpush.bf16.msra.mxu0 %v264
    %899 = vmatpush.bf16.msra.mxu0 %v260
    %900 = vmatpush.bf16.msra.mxu0 %v256
    %901 = vmatpush.bf16.msra.mxu0 %v252
    %902 = vmatpush.bf16.msra.mxu0 %v248
    %903 = vmatpush.bf16.msra.mxu0 %v244
    %904 = vmatpush.bf16.msra.mxu0 %v240
    %905 = vmatmul.bf16.gmra.mxu0 %v390
    %v906 = vpop.f32.mrf.mxu0
    %v907 = vadd.f32 0.0, %v906
    %v908 = vpop.f32.mrf.mxu0
    %909 = vdwg.mxu0
    %910 = vmatpush.bf16.msra.mxu0 %v269
    %911 = vmatpush.bf16.msra.mxu0 %v265
    %912 = vmatpush.bf16.msra.mxu0 %v261
    %913 = vmatpush.bf16.msra.mxu0 %v257
    %914 = vmatpush.bf16.msra.mxu0 %v253
    %915 = vmatpush.bf16.msra.mxu0 %v249
    %916 = vmatpush.bf16.msra.mxu0 %v245
    %917 = vmatpush.bf16.msra.mxu0 %v241
    %918 = vmatmul.bf16.gmra.mxu0 %v390
    %v919 = vpop.f32.mrf.mxu0
    %v920 = vadd.f32 0.0, %v919
    %v921 = vpop.f32.mrf.mxu0
    %922 = vdwg.mxu0
    %923 = vmatpush.bf16.msra.mxu0 %v270
    %924 = vmatpush.bf16.msra.mxu0 %v266
    %925 = vmatpush.bf16.msra.mxu0 %v262
    %926 = vmatpush.bf16.msra.mxu0 %v258
    %927 = vmatpush.bf16.msra.mxu0 %v254
    %928 = vmatpush.bf16.msra.mxu0 %v250
    %929 = vmatpush.bf16.msra.mxu0 %v246
    %930 = vmatpush.bf16.msra.mxu0 %v242
    %931 = vmatmul.bf16.gmra.mxu0 %v390
    %v932 = vpop.f32.mrf.mxu0
    %v933 = vadd.f32 0.0, %v932
    %v934 = vpop.f32.mrf.mxu0
    %935 = vdwg.mxu0
    %936 = vmatpush.bf16.msra.mxu0 %v271
    %937 = vmatpush.bf16.msra.mxu0 %v267
    %938 = vmatpush.bf16.msra.mxu0 %v263
    %939 = vmatpush.bf16.msra.mxu0 %v259
    %940 = vmatpush.bf16.msra.mxu0 %v255
    %941 = vmatpush.bf16.msra.mxu0 %v251
    %942 = vmatpush.bf16.msra.mxu0 %v247
    %943 = vmatpush.bf16.msra.mxu0 %v243
    %944 = vmatmul.bf16.gmra.mxu0 %v390
    %v945 = vpop.f32.mrf.mxu0
    %v946 = vadd.f32 0.0, %v945
    %v947 = vpop.f32.mrf.mxu0
    %948 = vdwg.mxu0
    %v953 = vrot.slane %v920, 6
    %v954 = vrot.slane %v933, 4
    %v955 = vrot.slane %v946, 2
    %v956 = vsel %vm363, %v907, %v953
    %v957 = vsel %vm365, %v954, %v955
    %v958 = vsel %vm367, %v956, %v957
    %v960 = vadd.f32 %v896, %v958
    %v961 = vtanh.pop %v960
    %v962 = vmul.f32 %v961, 0.5
    %v963 = vadd.f32 %v962, 0.5
    %v965 = vrot.slane %v961, 2
    %v967 = vmul.f32 %v965, 0.5
    %v968 = vadd.f32 %v967, 0.5
    %v969 = vrot.slane %v961, 6
    %v971 = vmul.f32 %v969, 0.5
    %v972 = vadd.f32 %v971, 0.5
    %v973 = vmul.f32 %v968, %v387
    %v974 = vrot.slane %v961, 4
    %v976 = vmul.f32 %v963, %v974
    %v977 = vadd.f32 %v973, %v976
    %v978 = vtanh.pop %v977
    %v979 = vmul.f32 %v972, %v978
    %v980 = vpack.c.bf16 %v979, %v979
    %981 = vmatpush.bf16.msra.mxu0 %v675
    %982 = vmatpush.bf16.msra.mxu0 %v671
    %983 = vmatpush.bf16.msra.mxu0 %v667
    %984 = vmatpush.bf16.msra.mxu0 %v663
    %985 = vmatpush.bf16.msra.mxu0 %v659
    %986 = vmatpush.bf16.msra.mxu0 %v655
    %987 = vmatpush.bf16.msra.mxu0 %v651
    %988 = vmatpush.bf16.msra.mxu0 %v647
    %989 = vmatmul.bf16.gmra.mxu0 %v980
    %v990 = vpop.f32.mrf.mxu0
    %v991 = vadd.f32 %v103, %v990
    %v992 = vpop.f32.mrf.mxu0
    %993 = vdwg.mxu0
    %994 = vmatpush.bf16.msra.mxu0 %v707
    %995 = vmatpush.bf16.msra.mxu0 %v703
    %996 = vmatpush.bf16.msra.mxu0 %v699
    %997 = vmatpush.bf16.msra.mxu0 %v695
    %998 = vmatpush.bf16.msra.mxu0 %v691
    %999 = vmatpush.bf16.msra.mxu0 %v687
    %1000 = vmatpush.bf16.msra.mxu0 %v683
    %1001 = vmatpush.bf16.msra.mxu0 %v679
    %1002 = vmatmul.bf16.gmra.mxu0 %v894
    %v1003 = vpop.f32.mrf.mxu0
    %v1004 = vadd.f32 %v991, %v1003
    %v1005 = vpop.f32.mrf.mxu0
    %1006 = vdwg.mxu0
    %1007 = vmatpush.bf16.msra.mxu0 %v676
    %1008 = vmatpush.bf16.msra.mxu0 %v672
    %1009 = vmatpush.bf16.msra.mxu0 %v668
    %1010 = vmatpush.bf16.msra.mxu0 %v664
    %1011 = vmatpush.bf16.msra.mxu0 %v660
    %1012 = vmatpush.bf16.msra.mxu0 %v656
    %1013 = vmatpush.bf16.msra.mxu0 %v652
    %1014 = vmatpush.bf16.msra.mxu0 %v648
    %1015 = vmatmul.bf16.gmra.mxu0 %v980
    %v1016 = vpop.f32.mrf.mxu0
    %v1017 = vadd.f32 %v104, %v1016
    %v1018 = vpop.f32.mrf.mxu0
    %1019 = vdwg.mxu0
    %1020 = vmatpush.bf16.msra.mxu0 %v708
    %1021 = vmatpush.bf16.msra.mxu0 %v704
    %1022 = vmatpush.bf16.msra.mxu0 %v700
    %1023 = vmatpush.bf16.msra.mxu0 %v696
    %1024 = vmatpush.bf16.msra.mxu0 %v692
    %1025 = vmatpush.bf16.msra.mxu0 %v688
    %1026 = vmatpush.bf16.msra.mxu0 %v684
    %1027 = vmatpush.bf16.msra.mxu0 %v680
    %1028 = vmatmul.bf16.gmra.mxu0 %v894
    %v1029 = vpop.f32.mrf.mxu0
    %v1030 = vadd.f32 %v1017, %v1029
    %v1031 = vpop.f32.mrf.mxu0
    %1032 = vdwg.mxu0
    %1033 = vmatpush.bf16.msra.mxu0 %v677
    %1034 = vmatpush.bf16.msra.mxu0 %v673
    %1035 = vmatpush.bf16.msra.mxu0 %v669
    %1036 = vmatpush.bf16.msra.mxu0 %v665
    %1037 = vmatpush.bf16.msra.mxu0 %v661
    %1038 = vmatpush.bf16.msra.mxu0 %v657
    %1039 = vmatpush.bf16.msra.mxu0 %v653
    %1040 = vmatpush.bf16.msra.mxu0 %v649
    %1041 = vmatmul.bf16.gmra.mxu0 %v980
    %v1042 = vpop.f32.mrf.mxu0
    %v1043 = vadd.f32 %v105, %v1042
    %v1044 = vpop.f32.mrf.mxu0
    %1045 = vdwg.mxu0
    %1046 = vmatpush.bf16.msra.mxu0 %v709
    %1047 = vmatpush.bf16.msra.mxu0 %v705
    %1048 = vmatpush.bf16.msra.mxu0 %v701
    %1049 = vmatpush.bf16.msra.mxu0 %v697
    %1050 = vmatpush.bf16.msra.mxu0 %v693
    %1051 = vmatpush.bf16.msra.mxu0 %v689
    %1052 = vmatpush.bf16.msra.mxu0 %v685
    %1053 = vmatpush.bf16.msra.mxu0 %v681
    %1054 = vmatmul.bf16.gmra.mxu0 %v894
    %v1055 = vpop.f32.mrf.mxu0
    %v1056 = vadd.f32 %v1043, %v1055
    %v1057 = vpop.f32.mrf.mxu0
    %1058 = vdwg.mxu0
    %1059 = vmatpush.bf16.msra.mxu0 %v678
    %1060 = vmatpush.bf16.msra.mxu0 %v674
    %1061 = vmatpush.bf16.msra.mxu0 %v670
    %1062 = vmatpush.bf16.msra.mxu0 %v666
    %1063 = vmatpush.bf16.msra.mxu0 %v662
    %1064 = vmatpush.bf16.msra.mxu0 %v658
    %1065 = vmatpush.bf16.msra.mxu0 %v654
    %1066 = vmatpush.bf16.msra.mxu0 %v650
    %1067 = vmatmul.bf16.gmra.mxu0 %v980
    %v1068 = vpop.f32.mrf.mxu0
    %v1069 = vadd.f32 %v106, %v1068
    %v1070 = vpop.f32.mrf.mxu0
    %1071 = vdwg.mxu0
    %1072 = vmatpush.bf16.msra.mxu0 %v710
    %1073 = vmatpush.bf16.msra.mxu0 %v706
    %1074 = vmatpush.bf16.msra.mxu0 %v702
    %1075 = vmatpush.bf16.msra.mxu0 %v698
    %1076 = vmatpush.bf16.msra.mxu0 %v694
    %1077 = vmatpush.bf16.msra.mxu0 %v690
    %1078 = vmatpush.bf16.msra.mxu0 %v686
    %1079 = vmatpush.bf16.msra.mxu0 %v682
    %1080 = vmatmul.bf16.gmra.mxu0 %v894
    %v1081 = vpop.f32.mrf.mxu0
    %v1082 = vadd.f32 %v1069, %v1081
    %v1083 = vpop.f32.mrf.mxu0
    %1084 = vdwg.mxu0
    %v1085 = vtanh.pop %v1004
    %v1086 = vtanh.pop %v1030
    %v1087 = vtanh.pop %v1056
    %v1088 = vtanh.pop %v1082
    %v1089 = vmul.f32 %v1085, 0.5
    %v1090 = vadd.f32 %v1089, 0.5
    %v1091 = vmul.f32 %v1086, 0.5
    %v1092 = vadd.f32 %v1091, 0.5
    %v1093 = vmul.f32 %v1088, 0.5
    %v1094 = vadd.f32 %v1093, 0.5
    %v1095 = vmul.f32 %v1092, %v891
    %v1096 = vmul.f32 %v1090, %v1087
    %v1097 = vadd.f32 %v1095, %v1096
    %v1098 = vtanh.pop %v1097
    %v1099 = vmul.f32 %v1094, %v1098
    %v1100 = vpack.c.bf16 %v1099, %v1099
    %s1101 = scalar_lea.vmem [#allocation2], 16
    %v1102 = vld [vmem:[%s1101] sm:$0xff]
    %1103 = vmatpush.bf16.msra.mxu0 %v268
    %1104 = vmatpush.bf16.msra.mxu0 %v264
    %1105 = vmatpush.bf16.msra.mxu0 %v260
    %1106 = vmatpush.bf16.msra.mxu0 %v256
    %1107 = vmatpush.bf16.msra.mxu0 %v252
    %1108 = vmatpush.bf16.msra.mxu0 %v248
    %1109 = vmatpush.bf16.msra.mxu0 %v244
    %1110 = vmatpush.bf16.msra.mxu0 %v240
    %1111 = vmatmul.bf16.gmra.mxu0 %v980
    %v1112 = vpop.f32.mrf.mxu0
    %v1113 = vadd.f32 0.0, %v1112
    %v1114 = vpop.f32.mrf.mxu0
    %1115 = vdwg.mxu0
    %1116 = vmatpush.bf16.msra.mxu0 %v269
    %1117 = vmatpush.bf16.msra.mxu0 %v265
    %1118 = vmatpush.bf16.msra.mxu0 %v261
    %1119 = vmatpush.bf16.msra.mxu0 %v257
    %1120 = vmatpush.bf16.msra.mxu0 %v253
    %1121 = vmatpush.bf16.msra.mxu0 %v249
    %1122 = vmatpush.bf16.msra.mxu0 %v245
    %1123 = vmatpush.bf16.msra.mxu0 %v241
    %1124 = vmatmul.bf16.gmra.mxu0 %v980
    %v1125 = vpop.f32.mrf.mxu0
    %v1126 = vadd.f32 0.0, %v1125
    %v1127 = vpop.f32.mrf.mxu0
    %1128 = vdwg.mxu0
    %1129 = vmatpush.bf16.msra.mxu0 %v270
    %1130 = vmatpush.bf16.msra.mxu0 %v266
    %1131 = vmatpush.bf16.msra.mxu0 %v262
    %1132 = vmatpush.bf16.msra.mxu0 %v258
    %1133 = vmatpush.bf16.msra.mxu0 %v254
    %1134 = vmatpush.bf16.msra.mxu0 %v250
    %1135 = vmatpush.bf16.msra.mxu0 %v246
    %1136 = vmatpush.bf16.msra.mxu0 %v242
    %1137 = vmatmul.bf16.gmra.mxu0 %v980
    %v1138 = vpop.f32.mrf.mxu0
    %v1139 = vadd.f32 0.0, %v1138
    %v1140 = vpop.f32.mrf.mxu0
    %1141 = vdwg.mxu0
    %1142 = vmatpush.bf16.msra.mxu0 %v271
    %1143 = vmatpush.bf16.msra.mxu0 %v267
    %1144 = vmatpush.bf16.msra.mxu0 %v263
    %1145 = vmatpush.bf16.msra.mxu0 %v259
    %1146 = vmatpush.bf16.msra.mxu0 %v255
    %1147 = vmatpush.bf16.msra.mxu0 %v251
    %1148 = vmatpush.bf16.msra.mxu0 %v247
    %1149 = vmatpush.bf16.msra.mxu0 %v243
    %1150 = vmatmul.bf16.gmra.mxu0 %v980
    %v1151 = vpop.f32.mrf.mxu0
    %v1152 = vadd.f32 0.0, %v1151
    %v1153 = vpop.f32.mrf.mxu0
    %1154 = vdwg.mxu0
    %v1159 = vrot.slane %v1126, 6
    %v1160 = vrot.slane %v1139, 4
    %v1161 = vrot.slane %v1152, 2
    %v1162 = vsel %vm363, %v1113, %v1159
    %v1163 = vsel %vm365, %v1160, %v1161
    %v1164 = vsel %vm367, %v1162, %v1163
    %v1166 = vadd.f32 %v1102, %v1164
    %v1167 = vtanh.pop %v1166
    %v1168 = vmul.f32 %v1167, 0.5
    %v1169 = vadd.f32 %v1168, 0.5
    %v1171 = vrot.slane %v1167, 2
    %v1173 = vmul.f32 %v1171, 0.5
    %v1174 = vadd.f32 %v1173, 0.5
    %v1175 = vrot.slane %v1167, 6
    %v1177 = vmul.f32 %v1175, 0.5
    %v1178 = vadd.f32 %v1177, 0.5
    %v1179 = vmul.f32 %v1174, %v977
    %v1180 = vrot.slane %v1167, 4
    %v1182 = vmul.f32 %v1169, %v1180
    %v1183 = vadd.f32 %v1179, %v1182
    %v1184 = vtanh.pop %v1183
    %v1185 = vmul.f32 %v1178, %v1184
    %v1186 = vpack.c.bf16 %v1185, %v1185
    %1187 = vmatpush.bf16.msra.mxu0 %v675
    %1188 = vmatpush.bf16.msra.mxu0 %v671
    %1189 = vmatpush.bf16.msra.mxu0 %v667
    %1190 = vmatpush.bf16.msra.mxu0 %v663
    %1191 = vmatpush.bf16.msra.mxu0 %v659
    %1192 = vmatpush.bf16.msra.mxu0 %v655
    %1193 = vmatpush.bf16.msra.mxu0 %v651
    %1194 = vmatpush.bf16.msra.mxu0 %v647
    %1195 = vmatmul.bf16.gmra.mxu0 %v1186
    %v1196 = vpop.f32.mrf.mxu0
    %v1197 = vadd.f32 %v103, %v1196
    %v1198 = vpop.f32.mrf.mxu0
    %1199 = vdwg.mxu0
    %1200 = vmatpush.bf16.msra.mxu0 %v707
    %1201 = vmatpush.bf16.msra.mxu0 %v703
    %1202 = vmatpush.bf16.msra.mxu0 %v699
    %1203 = vmatpush.bf16.msra.mxu0 %v695
    %1204 = vmatpush.bf16.msra.mxu0 %v691
    %1205 = vmatpush.bf16.msra.mxu0 %v687
    %1206 = vmatpush.bf16.msra.mxu0 %v683
    %1207 = vmatpush.bf16.msra.mxu0 %v679
    %1208 = vmatmul.bf16.gmra.mxu0 %v1100
    %v1209 = vpop.f32.mrf.mxu0
    %v1210 = vadd.f32 %v1197, %v1209
    %v1211 = vpop.f32.mrf.mxu0
    %1212 = vdwg.mxu0
    %1213 = vmatpush.bf16.msra.mxu0 %v676
    %1214 = vmatpush.bf16.msra.mxu0 %v672
    %1215 = vmatpush.bf16.msra.mxu0 %v668
    %1216 = vmatpush.bf16.msra.mxu0 %v664
    %1217 = vmatpush.bf16.msra.mxu0 %v660
    %1218 = vmatpush.bf16.msra.mxu0 %v656
    %1219 = vmatpush.bf16.msra.mxu0 %v652
    %1220 = vmatpush.bf16.msra.mxu0 %v648
    %1221 = vmatmul.bf16.gmra.mxu0 %v1186
    %v1222 = vpop.f32.mrf.mxu0
    %v1223 = vadd.f32 %v104, %v1222
    %v1224 = vpop.f32.mrf.mxu0
    %1225 = vdwg.mxu0
    %1226 = vmatpush.bf16.msra.mxu0 %v708
    %1227 = vmatpush.bf16.msra.mxu0 %v704
    %1228 = vmatpush.bf16.msra.mxu0 %v700
    %1229 = vmatpush.bf16.msra.mxu0 %v696
    %1230 = vmatpush.bf16.msra.mxu0 %v692
    %1231 = vmatpush.bf16.msra.mxu0 %v688
    %1232 = vmatpush.bf16.msra.mxu0 %v684
    %1233 = vmatpush.bf16.msra.mxu0 %v680
    %1234 = vmatmul.bf16.gmra.mxu0 %v1100
    %v1235 = vpop.f32.mrf.mxu0
    %v1236 = vadd.f32 %v1223, %v1235
    %v1237 = vpop.f32.mrf.mxu0
    %1238 = vdwg.mxu0
    %1239 = vmatpush.bf16.msra.mxu0 %v677
    %1240 = vmatpush.bf16.msra.mxu0 %v673
    %1241 = vmatpush.bf16.msra.mxu0 %v669
    %1242 = vmatpush.bf16.msra.mxu0 %v665
    %1243 = vmatpush.bf16.msra.mxu0 %v661
    %1244 = vmatpush.bf16.msra.mxu0 %v657
    %1245 = vmatpush.bf16.msra.mxu0 %v653
    %1246 = vmatpush.bf16.msra.mxu0 %v649
    %1247 = vmatmul.bf16.gmra.mxu0 %v1186
    %v1248 = vpop.f32.mrf.mxu0
    %v1249 = vadd.f32 %v105, %v1248
    %v1250 = vpop.f32.mrf.mxu0
    %1251 = vdwg.mxu0
    %1252 = vmatpush.bf16.msra.mxu0 %v709
    %1253 = vmatpush.bf16.msra.mxu0 %v705
    %1254 = vmatpush.bf16.msra.mxu0 %v701
    %1255 = vmatpush.bf16.msra.mxu0 %v697
    %1256 = vmatpush.bf16.msra.mxu0 %v693
    %1257 = vmatpush.bf16.msra.mxu0 %v689
    %1258 = vmatpush.bf16.msra.mxu0 %v685
    %1259 = vmatpush.bf16.msra.mxu0 %v681
    %1260 = vmatmul.bf16.gmra.mxu0 %v1100
    %v1261 = vpop.f32.mrf.mxu0
    %v1262 = vadd.f32 %v1249, %v1261
    %v1263 = vpop.f32.mrf.mxu0
    %1264 = vdwg.mxu0
    %1265 = vmatpush.bf16.msra.mxu0 %v678
    %1266 = vmatpush.bf16.msra.mxu0 %v674
    %1267 = vmatpush.bf16.msra.mxu0 %v670
    %1268 = vmatpush.bf16.msra.mxu0 %v666
    %1269 = vmatpush.bf16.msra.mxu0 %v662
    %1270 = vmatpush.bf16.msra.mxu0 %v658
    %1271 = vmatpush.bf16.msra.mxu0 %v654
    %1272 = vmatpush.bf16.msra.mxu0 %v650
    %1273 = vmatmul.bf16.gmra.mxu0 %v1186
    %v1274 = vpop.f32.mrf.mxu0
    %v1275 = vadd.f32 %v106, %v1274
    %v1276 = vpop.f32.mrf.mxu0
    %1277 = vdwg.mxu0
    %1278 = vmatpush.bf16.msra.mxu0 %v710
    %1279 = vmatpush.bf16.msra.mxu0 %v706
    %1280 = vmatpush.bf16.msra.mxu0 %v702
    %1281 = vmatpush.bf16.msra.mxu0 %v698
    %1282 = vmatpush.bf16.msra.mxu0 %v694
    %1283 = vmatpush.bf16.msra.mxu0 %v690
    %1284 = vmatpush.bf16.msra.mxu0 %v686
    %1285 = vmatpush.bf16.msra.mxu0 %v682
    %1286 = vmatmul.bf16.gmra.mxu0 %v1100
    %v1287 = vpop.f32.mrf.mxu0
    %v1288 = vadd.f32 %v1275, %v1287
    %v1289 = vpop.f32.mrf.mxu0
    %1290 = vdwg.mxu0
    %v1291 = vtanh.pop %v1210
    %v1292 = vtanh.pop %v1236
    %v1293 = vtanh.pop %v1262
    %v1294 = vtanh.pop %v1288
    %v1295 = vmul.f32 %v1291, 0.5
    %v1296 = vadd.f32 %v1295, 0.5
    %v1297 = vmul.f32 %v1292, 0.5
    %v1298 = vadd.f32 %v1297, 0.5
    %v1299 = vmul.f32 %v1294, 0.5
    %v1300 = vadd.f32 %v1299, 0.5
    %v1301 = vmul.f32 %v1298, %v1097
    %v1302 = vmul.f32 %v1296, %v1293
    %v1303 = vadd.f32 %v1301, %v1302
    %v1304 = vtanh.pop %v1303
    %v1305 = vmul.f32 %v1300, %v1304
    %v1306 = vpack.c.bf16 %v1305, %v1305
    %s1307 = scalar_lea.vmem [#allocation2], 24
    %v1308 = vld [vmem:[%s1307] sm:$0xff]
    %1309 = vmatpush.bf16.msra.mxu0 %v268
    %1310 = vmatpush.bf16.msra.mxu0 %v264
    %1311 = vmatpush.bf16.msra.mxu0 %v260
    %1312 = vmatpush.bf16.msra.mxu0 %v256
    %1313 = vmatpush.bf16.msra.mxu0 %v252
    %1314 = vmatpush.bf16.msra.mxu0 %v248
    %1315 = vmatpush.bf16.msra.mxu0 %v244
    %1316 = vmatpush.bf16.msra.mxu0 %v240
    %1317 = vmatmul.bf16.gmra.mxu0 %v1186
    %v1318 = vpop.f32.mrf.mxu0
    %v1319 = vadd.f32 0.0, %v1318
    %v1320 = vpop.f32.mrf.mxu0
    %1321 = vdwg.mxu0
    %1322 = vmatpush.bf16.msra.mxu0 %v269
    %1323 = vmatpush.bf16.msra.mxu0 %v265
    %1324 = vmatpush.bf16.msra.mxu0 %v261
    %1325 = vmatpush.bf16.msra.mxu0 %v257
    %1326 = vmatpush.bf16.msra.mxu0 %v253
    %1327 = vmatpush.bf16.msra.mxu0 %v249
    %1328 = vmatpush.bf16.msra.mxu0 %v245
    %1329 = vmatpush.bf16.msra.mxu0 %v241
    %1330 = vmatmul.bf16.gmra.mxu0 %v1186
    %v1331 = vpop.f32.mrf.mxu0
    %v1332 = vadd.f32 0.0, %v1331
    %v1333 = vpop.f32.mrf.mxu0
    %1334 = vdwg.mxu0
    %1335 = vmatpush.bf16.msra.mxu0 %v270
    %1336 = vmatpush.bf16.msra.mxu0 %v266
    %1337 = vmatpush.bf16.msra.mxu0 %v262
    %1338 = vmatpush.bf16.msra.mxu0 %v258
    %1339 = vmatpush.bf16.msra.mxu0 %v254
    %1340 = vmatpush.bf16.msra.mxu0 %v250
    %1341 = vmatpush.bf16.msra.mxu0 %v246
    %1342 = vmatpush.bf16.msra.mxu0 %v242
    %1343 = vmatmul.bf16.gmra.mxu0 %v1186
    %v1344 = vpop.f32.mrf.mxu0
    %v1345 = vadd.f32 0.0, %v1344
    %v1346 = vpop.f32.mrf.mxu0
    %1347 = vdwg.mxu0
    %1348 = vmatpush.bf16.msra.mxu0 %v271
    %1349 = vmatpush.bf16.msra.mxu0 %v267
    %1350 = vmatpush.bf16.msra.mxu0 %v263
    %1351 = vmatpush.bf16.msra.mxu0 %v259
    %1352 = vmatpush.bf16.msra.mxu0 %v255
    %1353 = vmatpush.bf16.msra.mxu0 %v251
    %1354 = vmatpush.bf16.msra.mxu0 %v247
    %1355 = vmatpush.bf16.msra.mxu0 %v243
    %1356 = vmatmul.bf16.gmra.mxu0 %v1186
    %v1357 = vpop.f32.mrf.mxu0
    %v1358 = vadd.f32 0.0, %v1357
    %v1359 = vpop.f32.mrf.mxu0
    %1360 = vdwg.mxu0
    %v1365 = vrot.slane %v1332, 6
    %v1366 = vrot.slane %v1345, 4
    %v1367 = vrot.slane %v1358, 2
    %v1368 = vsel %vm363, %v1319, %v1365
    %v1369 = vsel %vm365, %v1366, %v1367
    %v1370 = vsel %vm367, %v1368, %v1369
    %v1372 = vadd.f32 %v1308, %v1370
    %v1373 = vtanh.pop %v1372
    %v1374 = vmul.f32 %v1373, 0.5
    %v1375 = vadd.f32 %v1374, 0.5
    %v1377 = vrot.slane %v1373, 2
    %v1379 = vmul.f32 %v1377, 0.5
    %v1380 = vadd.f32 %v1379, 0.5
    %v1381 = vrot.slane %v1373, 6
    %v1383 = vmul.f32 %v1381, 0.5
    %v1384 = vadd.f32 %v1383, 0.5
    %v1385 = vmul.f32 %v1380, %v1183
    %v1386 = vrot.slane %v1373, 4
    %v1388 = vmul.f32 %v1375, %v1386
    %v1389 = vadd.f32 %v1385, %v1388
    %v1390 = vtanh.pop %v1389
    %v1391 = vmul.f32 %v1384, %v1390
    %v1392 = vpack.c.bf16 %v1391, %v1391
    %1393 = vmatpush.bf16.msra.mxu0 %v675
    %1394 = vmatpush.bf16.msra.mxu0 %v671
    %1395 = vmatpush.bf16.msra.mxu0 %v667
    %1396 = vmatpush.bf16.msra.mxu0 %v663
    %1397 = vmatpush.bf16.msra.mxu0 %v659
    %1398 = vmatpush.bf16.msra.mxu0 %v655
    %1399 = vmatpush.bf16.msra.mxu0 %v651
    %1400 = vmatpush.bf16.msra.mxu0 %v647
    %1401 = vmatmul.bf16.gmra.mxu0 %v1392
    %v1402 = vpop.f32.mrf.mxu0
    %v1403 = vadd.f32 %v103, %v1402
    %v1404 = vpop.f32.mrf.mxu0
    %1405 = vdwg.mxu0
    %1406 = vmatpush.bf16.msra.mxu0 %v707
    %1407 = vmatpush.bf16.msra.mxu0 %v703
    %1408 = vmatpush.bf16.msra.mxu0 %v699
    %1409 = vmatpush.bf16.msra.mxu0 %v695
    %1410 = vmatpush.bf16.msra.mxu0 %v691
    %1411 = vmatpush.bf16.msra.mxu0 %v687
    %1412 = vmatpush.bf16.msra.mxu0 %v683
    %1413 = vmatpush.bf16.msra.mxu0 %v679
    %1414 = vmatmul.bf16.gmra.mxu0 %v1306
    %v1415 = vpop.f32.mrf.mxu0
    %v1416 = vadd.f32 %v1403, %v1415
    %v1417 = vpop.f32.mrf.mxu0
    %1418 = vdwg.mxu0
    %1419 = vmatpush.bf16.msra.mxu0 %v676
    %1420 = vmatpush.bf16.msra.mxu0 %v672
    %1421 = vmatpush.bf16.msra.mxu0 %v668
    %1422 = vmatpush.bf16.msra.mxu0 %v664
    %1423 = vmatpush.bf16.msra.mxu0 %v660
    %1424 = vmatpush.bf16.msra.mxu0 %v656
    %1425 = vmatpush.bf16.msra.mxu0 %v652
    %1426 = vmatpush.bf16.msra.mxu0 %v648
    %1427 = vmatmul.bf16.gmra.mxu0 %v1392
    %v1428 = vpop.f32.mrf.mxu0
    %v1429 = vadd.f32 %v104, %v1428
    %v1430 = vpop.f32.mrf.mxu0
    %1431 = vdwg.mxu0
    %1432 = vmatpush.bf16.msra.mxu0 %v708
    %1433 = vmatpush.bf16.msra.mxu0 %v704
    %1434 = vmatpush.bf16.msra.mxu0 %v700
    %1435 = vmatpush.bf16.msra.mxu0 %v696
    %1436 = vmatpush.bf16.msra.mxu0 %v692
    %1437 = vmatpush.bf16.msra.mxu0 %v688
    %1438 = vmatpush.bf16.msra.mxu0 %v684
    %1439 = vmatpush.bf16.msra.mxu0 %v680
    %1440 = vmatmul.bf16.gmra.mxu0 %v1306
    %v1441 = vpop.f32.mrf.mxu0
    %v1442 = vadd.f32 %v1429, %v1441
    %v1443 = vpop.f32.mrf.mxu0
    %1444 = vdwg.mxu0
    %1445 = vmatpush.bf16.msra.mxu0 %v677
    %1446 = vmatpush.bf16.msra.mxu0 %v673
    %1447 = vmatpush.bf16.msra.mxu0 %v669
    %1448 = vmatpush.bf16.msra.mxu0 %v665
    %1449 = vmatpush.bf16.msra.mxu0 %v661
    %1450 = vmatpush.bf16.msra.mxu0 %v657
    %1451 = vmatpush.bf16.msra.mxu0 %v653
    %1452 = vmatpush.bf16.msra.mxu0 %v649
    %1453 = vmatmul.bf16.gmra.mxu0 %v1392
    %v1454 = vpop.f32.mrf.mxu0
    %v1455 = vadd.f32 %v105, %v1454
    %v1456 = vpop.f32.mrf.mxu0
    %1457 = vdwg.mxu0
    %1458 = vmatpush.bf16.msra.mxu0 %v709
    %1459 = vmatpush.bf16.msra.mxu0 %v705
    %1460 = vmatpush.bf16.msra.mxu0 %v701
    %1461 = vmatpush.bf16.msra.mxu0 %v697
    %1462 = vmatpush.bf16.msra.mxu0 %v693
    %1463 = vmatpush.bf16.msra.mxu0 %v689
    %1464 = vmatpush.bf16.msra.mxu0 %v685
    %1465 = vmatpush.bf16.msra.mxu0 %v681
    %1466 = vmatmul.bf16.gmra.mxu0 %v1306
    %v1467 = vpop.f32.mrf.mxu0
    %v1468 = vadd.f32 %v1455, %v1467
    %v1469 = vpop.f32.mrf.mxu0
    %1470 = vdwg.mxu0
    %1471 = vmatpush.bf16.msra.mxu0 %v678
    %1472 = vmatpush.bf16.msra.mxu0 %v674
    %1473 = vmatpush.bf16.msra.mxu0 %v670
    %1474 = vmatpush.bf16.msra.mxu0 %v666
    %1475 = vmatpush.bf16.msra.mxu0 %v662
    %1476 = vmatpush.bf16.msra.mxu0 %v658
    %1477 = vmatpush.bf16.msra.mxu0 %v654
    %1478 = vmatpush.bf16.msra.mxu0 %v650
    %1479 = vmatmul.bf16.gmra.mxu0 %v1392
    %v1480 = vpop.f32.mrf.mxu0
    %v1481 = vadd.f32 %v106, %v1480
    %v1482 = vpop.f32.mrf.mxu0
    %1483 = vdwg.mxu0
    %1484 = vmatpush.bf16.msra.mxu0 %v710
    %1485 = vmatpush.bf16.msra.mxu0 %v706
    %1486 = vmatpush.bf16.msra.mxu0 %v702
    %1487 = vmatpush.bf16.msra.mxu0 %v698
    %1488 = vmatpush.bf16.msra.mxu0 %v694
    %1489 = vmatpush.bf16.msra.mxu0 %v690
    %1490 = vmatpush.bf16.msra.mxu0 %v686
    %1491 = vmatpush.bf16.msra.mxu0 %v682
    %1492 = vmatmul.bf16.gmra.mxu0 %v1306
    %v1493 = vpop.f32.mrf.mxu0
    %v1494 = vadd.f32 %v1481, %v1493
    %v1495 = vpop.f32.mrf.mxu0
    %1496 = vdwg.mxu0
    %v1497 = vtanh.pop %v1416
    %v1498 = vtanh.pop %v1442
    %v1499 = vtanh.pop %v1468
    %v1500 = vtanh.pop %v1494
    %v1501 = vmul.f32 %v1497, 0.5
    %v1502 = vadd.f32 %v1501, 0.5
    %v1503 = vmul.f32 %v1498, 0.5
    %v1504 = vadd.f32 %v1503, 0.5
    %v1505 = vmul.f32 %v1500, 0.5
    %v1506 = vadd.f32 %v1505, 0.5
    %v1507 = vmul.f32 %v1504, %v1303
    %v1508 = vmul.f32 %v1502, %v1499
    %v1509 = vadd.f32 %v1507, %v1508
    %v1510 = vtanh.pop %v1509
    %v1511 = vmul.f32 %v1506, %v1510
    %v1512 = vpack.c.bf16 %v1511, %v1511
    %s1513 = scalar_lea.vmem [#allocation2], 32
    %v1514 = vld [vmem:[%s1513] sm:$0xff]
    %1515 = vmatpush.bf16.msra.mxu0 %v268
    %1516 = vmatpush.bf16.msra.mxu0 %v264
    %1517 = vmatpush.bf16.msra.mxu0 %v260
    %1518 = vmatpush.bf16.msra.mxu0 %v256
    %1519 = vmatpush.bf16.msra.mxu0 %v252
    %1520 = vmatpush.bf16.msra.mxu0 %v248
    %1521 = vmatpush.bf16.msra.mxu0 %v244
    %1522 = vmatpush.bf16.msra.mxu0 %v240
    %1523 = vmatmul.bf16.gmra.mxu0 %v1392
    %v1524 = vpop.f32.mrf.mxu0
    %v1525 = vadd.f32 0.0, %v1524
    %v1526 = vpop.f32.mrf.mxu0
    %1527 = vdwg.mxu0
    %1528 = vmatpush.bf16.msra.mxu0 %v269
    %1529 = vmatpush.bf16.msra.mxu0 %v265
    %1530 = vmatpush.bf16.msra.mxu0 %v261
    %1531 = vmatpush.bf16.msra.mxu0 %v257
    %1532 = vmatpush.bf16.msra.mxu0 %v253
    %1533 = vmatpush.bf16.msra.mxu0 %v249
    %1534 = vmatpush.bf16.msra.mxu0 %v245
    %1535 = vmatpush.bf16.msra.mxu0 %v241
    %1536 = vmatmul.bf16.gmra.mxu0 %v1392
    %v1537 = vpop.f32.mrf.mxu0
    %v1538 = vadd.f32 0.0, %v1537
    %v1539 = vpop.f32.mrf.mxu0
    %1540 = vdwg.mxu0
    %1541 = vmatpush.bf16.msra.mxu0 %v270
    %1542 = vmatpush.bf16.msra.mxu0 %v266
    %1543 = vmatpush.bf16.msra.mxu0 %v262
    %1544 = vmatpush.bf16.msra.mxu0 %v258
    %1545 = vmatpush.bf16.msra.mxu0 %v254
    %1546 = vmatpush.bf16.msra.mxu0 %v250
    %1547 = vmatpush.bf16.msra.mxu0 %v246
    %1548 = vmatpush.bf16.msra.mxu0 %v242
    %1549 = vmatmul.bf16.gmra.mxu0 %v1392
    %v1550 = vpop.f32.mrf.mxu0
    %v1551 = vadd.f32 0.0, %v1550
    %v1552 = vpop.f32.mrf.mxu0
    %1553 = vdwg.mxu0
    %1554 = vmatpush.bf16.msra.mxu0 %v271
    %1555 = vmatpush.bf16.msra.mxu0 %v267
    %1556 = vmatpush.bf16.msra.mxu0 %v263
    %1557 = vmatpush.bf16.msra.mxu0 %v259
    %1558 = vmatpush.bf16.msra.mxu0 %v255
    %1559 = vmatpush.bf16.msra.mxu0 %v251
    %1560 = vmatpush.bf16.msra.mxu0 %v247
    %1561 = vmatpush.bf16.msra.mxu0 %v243
    %1562 = vmatmul.bf16.gmra.mxu0 %v1392
    %v1563 = vpop.f32.mrf.mxu0
    %v1564 = vadd.f32 0.0, %v1563
    %v1565 = vpop.f32.mrf.mxu0
    %1566 = vdwg.mxu0
    %v1571 = vrot.slane %v1538, 6
    %v1572 = vrot.slane %v1551, 4
    %v1573 = vrot.slane %v1564, 2
    %v1574 = vsel %vm363, %v1525, %v1571
    %v1575 = vsel %vm365, %v1572, %v1573
    %v1576 = vsel %vm367, %v1574, %v1575
    %v1578 = vadd.f32 %v1514, %v1576
    %v1579 = vtanh.pop %v1578
    %v1580 = vmul.f32 %v1579, 0.5
    %v1581 = vadd.f32 %v1580, 0.5
    %v1583 = vrot.slane %v1579, 2
    %v1585 = vmul.f32 %v1583, 0.5
    %v1586 = vadd.f32 %v1585, 0.5
    %v1587 = vrot.slane %v1579, 6
    %v1589 = vmul.f32 %v1587, 0.5
    %v1590 = vadd.f32 %v1589, 0.5
    %v1591 = vmul.f32 %v1586, %v1389
    %v1592 = vrot.slane %v1579, 4
    %v1594 = vmul.f32 %v1581, %v1592
    %v1595 = vadd.f32 %v1591, %v1594
    %v1596 = vtanh.pop %v1595
    %v1597 = vmul.f32 %v1590, %v1596
    %v1598 = vpack.c.bf16 %v1597, %v1597
    %1599 = vmatpush.bf16.msra.mxu0 %v675
    %1600 = vmatpush.bf16.msra.mxu0 %v671
    %1601 = vmatpush.bf16.msra.mxu0 %v667
    %1602 = vmatpush.bf16.msra.mxu0 %v663
    %1603 = vmatpush.bf16.msra.mxu0 %v659
    %1604 = vmatpush.bf16.msra.mxu0 %v655
    %1605 = vmatpush.bf16.msra.mxu0 %v651
    %1606 = vmatpush.bf16.msra.mxu0 %v647
    %1607 = vmatmul.bf16.gmra.mxu0 %v1598
    %v1608 = vpop.f32.mrf.mxu0
    %v1609 = vadd.f32 %v103, %v1608
    %v1610 = vpop.f32.mrf.mxu0
    %1611 = vdwg.mxu0
    %1612 = vmatpush.bf16.msra.mxu0 %v707
    %1613 = vmatpush.bf16.msra.mxu0 %v703
    %1614 = vmatpush.bf16.msra.mxu0 %v699
    %1615 = vmatpush.bf16.msra.mxu0 %v695
    %1616 = vmatpush.bf16.msra.mxu0 %v691
    %1617 = vmatpush.bf16.msra.mxu0 %v687
    %1618 = vmatpush.bf16.msra.mxu0 %v683
    %1619 = vmatpush.bf16.msra.mxu0 %v679
    %1620 = vmatmul.bf16.gmra.mxu0 %v1512
    %v1621 = vpop.f32.mrf.mxu0
    %v1622 = vadd.f32 %v1609, %v1621
    %v1623 = vpop.f32.mrf.mxu0
    %1624 = vdwg.mxu0
    %1625 = vmatpush.bf16.msra.mxu0 %v676
    %1626 = vmatpush.bf16.msra.mxu0 %v672
    %1627 = vmatpush.bf16.msra.mxu0 %v668
    %1628 = vmatpush.bf16.msra.mxu0 %v664
    %1629 = vmatpush.bf16.msra.mxu0 %v660
    %1630 = vmatpush.bf16.msra.mxu0 %v656
    %1631 = vmatpush.bf16.msra.mxu0 %v652
    %1632 = vmatpush.bf16.msra.mxu0 %v648
    %1633 = vmatmul.bf16.gmra.mxu0 %v1598
    %v1634 = vpop.f32.mrf.mxu0
    %v1635 = vadd.f32 %v104, %v1634
    %v1636 = vpop.f32.mrf.mxu0
    %1637 = vdwg.mxu0
    %1638 = vmatpush.bf16.msra.mxu0 %v708
    %1639 = vmatpush.bf16.msra.mxu0 %v704
    %1640 = vmatpush.bf16.msra.mxu0 %v700
    %1641 = vmatpush.bf16.msra.mxu0 %v696
    %1642 = vmatpush.bf16.msra.mxu0 %v692
    %1643 = vmatpush.bf16.msra.mxu0 %v688
    %1644 = vmatpush.bf16.msra.mxu0 %v684
    %1645 = vmatpush.bf16.msra.mxu0 %v680
    %1646 = vmatmul.bf16.gmra.mxu0 %v1512
    %v1647 = vpop.f32.mrf.mxu0
    %v1648 = vadd.f32 %v1635, %v1647
    %v1649 = vpop.f32.mrf.mxu0
    %1650 = vdwg.mxu0
    %1651 = vmatpush.bf16.msra.mxu0 %v677
    %1652 = vmatpush.bf16.msra.mxu0 %v673
    %1653 = vmatpush.bf16.msra.mxu0 %v669
    %1654 = vmatpush.bf16.msra.mxu0 %v665
    %1655 = vmatpush.bf16.msra.mxu0 %v661
    %1656 = vmatpush.bf16.msra.mxu0 %v657
    %1657 = vmatpush.bf16.msra.mxu0 %v653
    %1658 = vmatpush.bf16.msra.mxu0 %v649
    %1659 = vmatmul.bf16.gmra.mxu0 %v1598
    %v1660 = vpop.f32.mrf.mxu0
    %v1661 = vadd.f32 %v105, %v1660
    %v1662 = vpop.f32.mrf.mxu0
    %1663 = vdwg.mxu0
    %1664 = vmatpush.bf16.msra.mxu0 %v709
    %1665 = vmatpush.bf16.msra.mxu0 %v705
    %1666 = vmatpush.bf16.msra.mxu0 %v701
    %1667 = vmatpush.bf16.msra.mxu0 %v697
    %1668 = vmatpush.bf16.msra.mxu0 %v693
    %1669 = vmatpush.bf16.msra.mxu0 %v689
    %1670 = vmatpush.bf16.msra.mxu0 %v685
    %1671 = vmatpush.bf16.msra.mxu0 %v681
    %1672 = vmatmul.bf16.gmra.mxu0 %v1512
    %v1673 = vpop.f32.mrf.mxu0
    %v1674 = vadd.f32 %v1661, %v1673
    %v1675 = vpop.f32.mrf.mxu0
    %1676 = vdwg.mxu0
    %1677 = vmatpush.bf16.msra.mxu0 %v678
    %1678 = vmatpush.bf16.msra.mxu0 %v674
    %1679 = vmatpush.bf16.msra.mxu0 %v670
    %1680 = vmatpush.bf16.msra.mxu0 %v666
    %1681 = vmatpush.bf16.msra.mxu0 %v662
    %1682 = vmatpush.bf16.msra.mxu0 %v658
    %1683 = vmatpush.bf16.msra.mxu0 %v654
    %1684 = vmatpush.bf16.msra.mxu0 %v650
    %1685 = vmatmul.bf16.gmra.mxu0 %v1598
    %v1686 = vpop.f32.mrf.mxu0
    %v1687 = vadd.f32 %v106, %v1686
    %v1688 = vpop.f32.mrf.mxu0
    %1689 = vdwg.mxu0
    %1690 = vmatpush.bf16.msra.mxu0 %v710
    %1691 = vmatpush.bf16.msra.mxu0 %v706
    %1692 = vmatpush.bf16.msra.mxu0 %v702
    %1693 = vmatpush.bf16.msra.mxu0 %v698
    %1694 = vmatpush.bf16.msra.mxu0 %v694
    %1695 = vmatpush.bf16.msra.mxu0 %v690
    %1696 = vmatpush.bf16.msra.mxu0 %v686
    %1697 = vmatpush.bf16.msra.mxu0 %v682
    %1698 = vmatmul.bf16.gmra.mxu0 %v1512
    %v1699 = vpop.f32.mrf.mxu0
    %v1700 = vadd.f32 %v1687, %v1699
    %v1701 = vpop.f32.mrf.mxu0
    %1702 = vdwg.mxu0
    %v1703 = vtanh.pop %v1622
    %v1704 = vtanh.pop %v1648
    %v1705 = vtanh.pop %v1674
    %v1706 = vtanh.pop %v1700
    %v1707 = vmul.f32 %v1703, 0.5
    %v1708 = vadd.f32 %v1707, 0.5
    %v1709 = vmul.f32 %v1704, 0.5
    %v1710 = vadd.f32 %v1709, 0.5
    %v1711 = vmul.f32 %v1706, 0.5
    %v1712 = vadd.f32 %v1711, 0.5
    %v1713 = vmul.f32 %v1710, %v1509
    %v1714 = vmul.f32 %v1708, %v1705
    %v1715 = vadd.f32 %v1713, %v1714
    %v1716 = vtanh.pop %v1715
    %v1717 = vmul.f32 %v1712, %v1716
    %v1718 = vpack.c.bf16 %v1717, %v1717
    %s1719 = scalar_lea.vmem [#allocation2], 40
    %v1720 = vld [vmem:[%s1719] sm:$0xff]
    %1721 = vmatpush.bf16.msra.mxu0 %v268
    %1722 = vmatpush.bf16.msra.mxu0 %v264
    %1723 = vmatpush.bf16.msra.mxu0 %v260
    %1724 = vmatpush.bf16.msra.mxu0 %v256
    %1725 = vmatpush.bf16.msra.mxu0 %v252
    %1726 = vmatpush.bf16.msra.mxu0 %v248
    %1727 = vmatpush.bf16.msra.mxu0 %v244
    %1728 = vmatpush.bf16.msra.mxu0 %v240
    %1729 = vmatmul.bf16.gmra.mxu0 %v1598
    %v1730 = vpop.f32.mrf.mxu0
    %v1731 = vadd.f32 0.0, %v1730
    %v1732 = vpop.f32.mrf.mxu0
    %1733 = vdwg.mxu0
    %1734 = vmatpush.bf16.msra.mxu0 %v269
    %1735 = vmatpush.bf16.msra.mxu0 %v265
    %1736 = vmatpush.bf16.msra.mxu0 %v261
    %1737 = vmatpush.bf16.msra.mxu0 %v257
    %1738 = vmatpush.bf16.msra.mxu0 %v253
    %1739 = vmatpush.bf16.msra.mxu0 %v249
    %1740 = vmatpush.bf16.msra.mxu0 %v245
    %1741 = vmatpush.bf16.msra.mxu0 %v241
    %1742 = vmatmul.bf16.gmra.mxu0 %v1598
    %v1743 = vpop.f32.mrf.mxu0
    %v1744 = vadd.f32 0.0, %v1743
    %v1745 = vpop.f32.mrf.mxu0
    %1746 = vdwg.mxu0
    %1747 = vmatpush.bf16.msra.mxu0 %v270
    %1748 = vmatpush.bf16.msra.mxu0 %v266
    %1749 = vmatpush.bf16.msra.mxu0 %v262
    %1750 = vmatpush.bf16.msra.mxu0 %v258
    %1751 = vmatpush.bf16.msra.mxu0 %v254
    %1752 = vmatpush.bf16.msra.mxu0 %v250
    %1753 = vmatpush.bf16.msra.mxu0 %v246
    %1754 = vmatpush.bf16.msra.mxu0 %v242
    %1755 = vmatmul.bf16.gmra.mxu0 %v1598
    %v1756 = vpop.f32.mrf.mxu0
    %v1757 = vadd.f32 0.0, %v1756
    %v1758 = vpop.f32.mrf.mxu0
    %1759 = vdwg.mxu0
    %1760 = vmatpush.bf16.msra.mxu0 %v271
    %1761 = vmatpush.bf16.msra.mxu0 %v267
    %1762 = vmatpush.bf16.msra.mxu0 %v263
    %1763 = vmatpush.bf16.msra.mxu0 %v259
    %1764 = vmatpush.bf16.msra.mxu0 %v255
    %1765 = vmatpush.bf16.msra.mxu0 %v251
    %1766 = vmatpush.bf16.msra.mxu0 %v247
    %1767 = vmatpush.bf16.msra.mxu0 %v243
    %1768 = vmatmul.bf16.gmra.mxu0 %v1598
    %v1769 = vpop.f32.mrf.mxu0
    %v1770 = vadd.f32 0.0, %v1769
    %v1771 = vpop.f32.mrf.mxu0
    %1772 = vdwg.mxu0
    %v1777 = vrot.slane %v1744, 6
    %v1778 = vrot.slane %v1757, 4
    %v1779 = vrot.slane %v1770, 2
    %v1780 = vsel %vm363, %v1731, %v1777
    %v1781 = vsel %vm365, %v1778, %v1779
    %v1782 = vsel %vm367, %v1780, %v1781
    %v1784 = vadd.f32 %v1720, %v1782
    %v1785 = vtanh.pop %v1784
    %v1786 = vmul.f32 %v1785, 0.5
    %v1787 = vadd.f32 %v1786, 0.5
    %v1789 = vrot.slane %v1785, 2
    %v1791 = vmul.f32 %v1789, 0.5
    %v1792 = vadd.f32 %v1791, 0.5
    %v1793 = vrot.slane %v1785, 6
    %v1795 = vmul.f32 %v1793, 0.5
    %v1796 = vadd.f32 %v1795, 0.5
    %v1797 = vmul.f32 %v1792, %v1595
    %v1798 = vrot.slane %v1785, 4
    %v1800 = vmul.f32 %v1787, %v1798
    %v1801 = vadd.f32 %v1797, %v1800
    %v1802 = vtanh.pop %v1801
    %v1803 = vmul.f32 %v1796, %v1802
    %v1804 = vpack.c.bf16 %v1803, %v1803
    %1805 = vmatpush.bf16.msra.mxu0 %v675
    %1806 = vmatpush.bf16.msra.mxu0 %v671
    %1807 = vmatpush.bf16.msra.mxu0 %v667
    %1808 = vmatpush.bf16.msra.mxu0 %v663
    %1809 = vmatpush.bf16.msra.mxu0 %v659
    %1810 = vmatpush.bf16.msra.mxu0 %v655
    %1811 = vmatpush.bf16.msra.mxu0 %v651
    %1812 = vmatpush.bf16.msra.mxu0 %v647
    %1813 = vmatmul.bf16.gmra.mxu0 %v1804
    %v1814 = vpop.f32.mrf.mxu0
    %v1815 = vadd.f32 %v103, %v1814
    %v1816 = vpop.f32.mrf.mxu0
    %1817 = vdwg.mxu0
    %1818 = vmatpush.bf16.msra.mxu0 %v707
    %1819 = vmatpush.bf16.msra.mxu0 %v703
    %1820 = vmatpush.bf16.msra.mxu0 %v699
    %1821 = vmatpush.bf16.msra.mxu0 %v695
    %1822 = vmatpush.bf16.msra.mxu0 %v691
    %1823 = vmatpush.bf16.msra.mxu0 %v687
    %1824 = vmatpush.bf16.msra.mxu0 %v683
    %1825 = vmatpush.bf16.msra.mxu0 %v679
    %1826 = vmatmul.bf16.gmra.mxu0 %v1718
    %v1827 = vpop.f32.mrf.mxu0
    %v1828 = vadd.f32 %v1815, %v1827
    %v1829 = vpop.f32.mrf.mxu0
    %1830 = vdwg.mxu0
    %1831 = vmatpush.bf16.msra.mxu0 %v676
    %1832 = vmatpush.bf16.msra.mxu0 %v672
    %1833 = vmatpush.bf16.msra.mxu0 %v668
    %1834 = vmatpush.bf16.msra.mxu0 %v664
    %1835 = vmatpush.bf16.msra.mxu0 %v660
    %1836 = vmatpush.bf16.msra.mxu0 %v656
    %1837 = vmatpush.bf16.msra.mxu0 %v652
    %1838 = vmatpush.bf16.msra.mxu0 %v648
    %1839 = vmatmul.bf16.gmra.mxu0 %v1804
    %v1840 = vpop.f32.mrf.mxu0
    %v1841 = vadd.f32 %v104, %v1840
    %v1842 = vpop.f32.mrf.mxu0
    %1843 = vdwg.mxu0
    %1844 = vmatpush.bf16.msra.mxu0 %v708
    %1845 = vmatpush.bf16.msra.mxu0 %v704
    %1846 = vmatpush.bf16.msra.mxu0 %v700
    %1847 = vmatpush.bf16.msra.mxu0 %v696
    %1848 = vmatpush.bf16.msra.mxu0 %v692
    %1849 = vmatpush.bf16.msra.mxu0 %v688
    %1850 = vmatpush.bf16.msra.mxu0 %v684
    %1851 = vmatpush.bf16.msra.mxu0 %v680
    %1852 = vmatmul.bf16.gmra.mxu0 %v1718
    %v1853 = vpop.f32.mrf.mxu0
    %v1854 = vadd.f32 %v1841, %v1853
    %v1855 = vpop.f32.mrf.mxu0
    %1856 = vdwg.mxu0
    %1857 = vmatpush.bf16.msra.mxu0 %v677
    %1858 = vmatpush.bf16.msra.mxu0 %v673
    %1859 = vmatpush.bf16.msra.mxu0 %v669
    %1860 = vmatpush.bf16.msra.mxu0 %v665
    %1861 = vmatpush.bf16.msra.mxu0 %v661
    %1862 = vmatpush.bf16.msra.mxu0 %v657
    %1863 = vmatpush.bf16.msra.mxu0 %v653
    %1864 = vmatpush.bf16.msra.mxu0 %v649
    %1865 = vmatmul.bf16.gmra.mxu0 %v1804
    %v1866 = vpop.f32.mrf.mxu0
    %v1867 = vadd.f32 %v105, %v1866
    %v1868 = vpop.f32.mrf.mxu0
    %1869 = vdwg.mxu0
    %1870 = vmatpush.bf16.msra.mxu0 %v709
    %1871 = vmatpush.bf16.msra.mxu0 %v705
    %1872 = vmatpush.bf16.msra.mxu0 %v701
    %1873 = vmatpush.bf16.msra.mxu0 %v697
    %1874 = vmatpush.bf16.msra.mxu0 %v693
    %1875 = vmatpush.bf16.msra.mxu0 %v689
    %1876 = vmatpush.bf16.msra.mxu0 %v685
    %1877 = vmatpush.bf16.msra.mxu0 %v681
    %1878 = vmatmul.bf16.gmra.mxu0 %v1718
    %v1879 = vpop.f32.mrf.mxu0
    %v1880 = vadd.f32 %v1867, %v1879
    %v1881 = vpop.f32.mrf.mxu0
    %1882 = vdwg.mxu0
    %1883 = vmatpush.bf16.msra.mxu0 %v678
    %1884 = vmatpush.bf16.msra.mxu0 %v674
    %1885 = vmatpush.bf16.msra.mxu0 %v670
    %1886 = vmatpush.bf16.msra.mxu0 %v666
    %1887 = vmatpush.bf16.msra.mxu0 %v662
    %1888 = vmatpush.bf16.msra.mxu0 %v658
    %1889 = vmatpush.bf16.msra.mxu0 %v654
    %1890 = vmatpush.bf16.msra.mxu0 %v650
    %1891 = vmatmul.bf16.gmra.mxu0 %v1804
    %v1892 = vpop.f32.mrf.mxu0
    %v1893 = vadd.f32 %v106, %v1892
    %v1894 = vpop.f32.mrf.mxu0
    %1895 = vdwg.mxu0
    %1896 = vmatpush.bf16.msra.mxu0 %v710
    %1897 = vmatpush.bf16.msra.mxu0 %v706
    %1898 = vmatpush.bf16.msra.mxu0 %v702
    %1899 = vmatpush.bf16.msra.mxu0 %v698
    %1900 = vmatpush.bf16.msra.mxu0 %v694
    %1901 = vmatpush.bf16.msra.mxu0 %v690
    %1902 = vmatpush.bf16.msra.mxu0 %v686
    %1903 = vmatpush.bf16.msra.mxu0 %v682
    %1904 = vmatmul.bf16.gmra.mxu0 %v1718
    %v1905 = vpop.f32.mrf.mxu0
    %v1906 = vadd.f32 %v1893, %v1905
    %v1907 = vpop.f32.mrf.mxu0
    %1908 = vdwg.mxu0
    %v1909 = vtanh.pop %v1828
    %v1910 = vtanh.pop %v1854
    %v1911 = vtanh.pop %v1880
    %v1912 = vtanh.pop %v1906
    %v1913 = vmul.f32 %v1909, 0.5
    %v1914 = vadd.f32 %v1913, 0.5
    %v1915 = vmul.f32 %v1910, 0.5
    %v1916 = vadd.f32 %v1915, 0.5
    %v1917 = vmul.f32 %v1912, 0.5
    %v1918 = vadd.f32 %v1917, 0.5
    %v1919 = vmul.f32 %v1916, %v1715
    %v1920 = vmul.f32 %v1914, %v1911
    %v1921 = vadd.f32 %v1919, %v1920
    %v1922 = vtanh.pop %v1921
    %v1923 = vmul.f32 %v1918, %v1922
    %v1924 = vpack.c.bf16 %v1923, %v1923
    %s1925 = scalar_lea.vmem [#allocation2], 48
    %v1926 = vld [vmem:[%s1925] sm:$0xff]
    %1927 = vmatpush.bf16.msra.mxu0 %v268
    %1928 = vmatpush.bf16.msra.mxu0 %v264
    %1929 = vmatpush.bf16.msra.mxu0 %v260
    %1930 = vmatpush.bf16.msra.mxu0 %v256
    %1931 = vmatpush.bf16.msra.mxu0 %v252
    %1932 = vmatpush.bf16.msra.mxu0 %v248
    %1933 = vmatpush.bf16.msra.mxu0 %v244
    %1934 = vmatpush.bf16.msra.mxu0 %v240
    %1935 = vmatmul.bf16.gmra.mxu0 %v1804
    %v1936 = vpop.f32.mrf.mxu0
    %v1937 = vadd.f32 0.0, %v1936
    %v1938 = vpop.f32.mrf.mxu0
    %1939 = vdwg.mxu0
    %1940 = vmatpush.bf16.msra.mxu0 %v269
    %1941 = vmatpush.bf16.msra.mxu0 %v265
    %1942 = vmatpush.bf16.msra.mxu0 %v261
    %1943 = vmatpush.bf16.msra.mxu0 %v257
    %1944 = vmatpush.bf16.msra.mxu0 %v253
    %1945 = vmatpush.bf16.msra.mxu0 %v249
    %1946 = vmatpush.bf16.msra.mxu0 %v245
    %1947 = vmatpush.bf16.msra.mxu0 %v241
    %1948 = vmatmul.bf16.gmra.mxu0 %v1804
    %v1949 = vpop.f32.mrf.mxu0
    %v1950 = vadd.f32 0.0, %v1949
    %v1951 = vpop.f32.mrf.mxu0
    %1952 = vdwg.mxu0
    %1953 = vmatpush.bf16.msra.mxu0 %v270
    %1954 = vmatpush.bf16.msra.mxu0 %v266
    %1955 = vmatpush.bf16.msra.mxu0 %v262
    %1956 = vmatpush.bf16.msra.mxu0 %v258
    %1957 = vmatpush.bf16.msra.mxu0 %v254
    %1958 = vmatpush.bf16.msra.mxu0 %v250
    %1959 = vmatpush.bf16.msra.mxu0 %v246
    %1960 = vmatpush.bf16.msra.mxu0 %v242
    %1961 = vmatmul.bf16.gmra.mxu0 %v1804
    %v1962 = vpop.f32.mrf.mxu0
    %v1963 = vadd.f32 0.0, %v1962
    %v1964 = vpop.f32.mrf.mxu0
    %1965 = vdwg.mxu0
    %1966 = vmatpush.bf16.msra.mxu0 %v271
    %1967 = vmatpush.bf16.msra.mxu0 %v267
    %1968 = vmatpush.bf16.msra.mxu0 %v263
    %1969 = vmatpush.bf16.msra.mxu0 %v259
    %1970 = vmatpush.bf16.msra.mxu0 %v255
    %1971 = vmatpush.bf16.msra.mxu0 %v251
    %1972 = vmatpush.bf16.msra.mxu0 %v247
    %1973 = vmatpush.bf16.msra.mxu0 %v243
    %1974 = vmatmul.bf16.gmra.mxu0 %v1804
    %v1975 = vpop.f32.mrf.mxu0
    %v1976 = vadd.f32 0.0, %v1975
    %v1977 = vpop.f32.mrf.mxu0
    %1978 = vdwg.mxu0
    %v1983 = vrot.slane %v1950, 6
    %v1984 = vrot.slane %v1963, 4
    %v1985 = vrot.slane %v1976, 2
    %v1986 = vsel %vm363, %v1937, %v1983
    %v1987 = vsel %vm365, %v1984, %v1985
    %v1988 = vsel %vm367, %v1986, %v1987
    %v1990 = vadd.f32 %v1926, %v1988
    %v1991 = vtanh.pop %v1990
    %v1992 = vmul.f32 %v1991, 0.5
    %v1993 = vadd.f32 %v1992, 0.5
    %v1995 = vrot.slane %v1991, 2
    %v1997 = vmul.f32 %v1995, 0.5
    %v1998 = vadd.f32 %v1997, 0.5
    %v1999 = vrot.slane %v1991, 6
    %v2001 = vmul.f32 %v1999, 0.5
    %v2002 = vadd.f32 %v2001, 0.5
    %v2003 = vmul.f32 %v1998, %v1801
    %v2004 = vrot.slane %v1991, 4
    %v2006 = vmul.f32 %v1993, %v2004
    %v2007 = vadd.f32 %v2003, %v2006
    %v2008 = vtanh.pop %v2007
    %v2009 = vmul.f32 %v2002, %v2008
    %v2010 = vpack.c.bf16 %v2009, %v2009
    %2011 = vmatpush.bf16.msra.mxu0 %v675
    %2012 = vmatpush.bf16.msra.mxu0 %v671
    %2013 = vmatpush.bf16.msra.mxu0 %v667
    %2014 = vmatpush.bf16.msra.mxu0 %v663
    %2015 = vmatpush.bf16.msra.mxu0 %v659
    %2016 = vmatpush.bf16.msra.mxu0 %v655
    %2017 = vmatpush.bf16.msra.mxu0 %v651
    %2018 = vmatpush.bf16.msra.mxu0 %v647
    %2019 = vmatmul.bf16.gmra.mxu0 %v2010
    %v2020 = vpop.f32.mrf.mxu0
    %v2021 = vadd.f32 %v103, %v2020
    %v2022 = vpop.f32.mrf.mxu0
    %2023 = vdwg.mxu0
    %2024 = vmatpush.bf16.msra.mxu0 %v707
    %2025 = vmatpush.bf16.msra.mxu0 %v703
    %2026 = vmatpush.bf16.msra.mxu0 %v699
    %2027 = vmatpush.bf16.msra.mxu0 %v695
    %2028 = vmatpush.bf16.msra.mxu0 %v691
    %2029 = vmatpush.bf16.msra.mxu0 %v687
    %2030 = vmatpush.bf16.msra.mxu0 %v683
    %2031 = vmatpush.bf16.msra.mxu0 %v679
    %2032 = vmatmul.bf16.gmra.mxu0 %v1924
    %v2033 = vpop.f32.mrf.mxu0
    %v2034 = vadd.f32 %v2021, %v2033
    %v2035 = vpop.f32.mrf.mxu0
    %2036 = vdwg.mxu0
    %2037 = vmatpush.bf16.msra.mxu0 %v676
    %2038 = vmatpush.bf16.msra.mxu0 %v672
    %2039 = vmatpush.bf16.msra.mxu0 %v668
    %2040 = vmatpush.bf16.msra.mxu0 %v664
    %2041 = vmatpush.bf16.msra.mxu0 %v660
    %2042 = vmatpush.bf16.msra.mxu0 %v656
    %2043 = vmatpush.bf16.msra.mxu0 %v652
    %2044 = vmatpush.bf16.msra.mxu0 %v648
    %2045 = vmatmul.bf16.gmra.mxu0 %v2010
    %v2046 = vpop.f32.mrf.mxu0
    %v2047 = vadd.f32 %v104, %v2046
    %v2048 = vpop.f32.mrf.mxu0
    %2049 = vdwg.mxu0
    %2050 = vmatpush.bf16.msra.mxu0 %v708
    %2051 = vmatpush.bf16.msra.mxu0 %v704
    %2052 = vmatpush.bf16.msra.mxu0 %v700
    %2053 = vmatpush.bf16.msra.mxu0 %v696
    %2054 = vmatpush.bf16.msra.mxu0 %v692
    %2055 = vmatpush.bf16.msra.mxu0 %v688
    %2056 = vmatpush.bf16.msra.mxu0 %v684
    %2057 = vmatpush.bf16.msra.mxu0 %v680
    %2058 = vmatmul.bf16.gmra.mxu0 %v1924
    %v2059 = vpop.f32.mrf.mxu0
    %v2060 = vadd.f32 %v2047, %v2059
    %v2061 = vpop.f32.mrf.mxu0
    %2062 = vdwg.mxu0
    %2063 = vmatpush.bf16.msra.mxu0 %v677
    %2064 = vmatpush.bf16.msra.mxu0 %v673
    %2065 = vmatpush.bf16.msra.mxu0 %v669
    %2066 = vmatpush.bf16.msra.mxu0 %v665
    %2067 = vmatpush.bf16.msra.mxu0 %v661
    %2068 = vmatpush.bf16.msra.mxu0 %v657
    %2069 = vmatpush.bf16.msra.mxu0 %v653
    %2070 = vmatpush.bf16.msra.mxu0 %v649
    %2071 = vmatmul.bf16.gmra.mxu0 %v2010
    %v2072 = vpop.f32.mrf.mxu0
    %v2073 = vadd.f32 %v105, %v2072
    %v2074 = vpop.f32.mrf.mxu0
    %2075 = vdwg.mxu0
    %2076 = vmatpush.bf16.msra.mxu0 %v709
    %2077 = vmatpush.bf16.msra.mxu0 %v705
    %2078 = vmatpush.bf16.msra.mxu0 %v701
    %2079 = vmatpush.bf16.msra.mxu0 %v697
    %2080 = vmatpush.bf16.msra.mxu0 %v693
    %2081 = vmatpush.bf16.msra.mxu0 %v689
    %2082 = vmatpush.bf16.msra.mxu0 %v685
    %2083 = vmatpush.bf16.msra.mxu0 %v681
    %2084 = vmatmul.bf16.gmra.mxu0 %v1924
    %v2085 = vpop.f32.mrf.mxu0
    %v2086 = vadd.f32 %v2073, %v2085
    %v2087 = vpop.f32.mrf.mxu0
    %2088 = vdwg.mxu0
    %2089 = vmatpush.bf16.msra.mxu0 %v678
    %2090 = vmatpush.bf16.msra.mxu0 %v674
    %2091 = vmatpush.bf16.msra.mxu0 %v670
    %2092 = vmatpush.bf16.msra.mxu0 %v666
    %2093 = vmatpush.bf16.msra.mxu0 %v662
    %2094 = vmatpush.bf16.msra.mxu0 %v658
    %2095 = vmatpush.bf16.msra.mxu0 %v654
    %2096 = vmatpush.bf16.msra.mxu0 %v650
    %2097 = vmatmul.bf16.gmra.mxu0 %v2010
    %v2098 = vpop.f32.mrf.mxu0
    %v2099 = vadd.f32 %v106, %v2098
    %v2100 = vpop.f32.mrf.mxu0
    %2101 = vdwg.mxu0
    %2102 = vmatpush.bf16.msra.mxu0 %v710
    %2103 = vmatpush.bf16.msra.mxu0 %v706
    %2104 = vmatpush.bf16.msra.mxu0 %v702
    %2105 = vmatpush.bf16.msra.mxu0 %v698
    %2106 = vmatpush.bf16.msra.mxu0 %v694
    %2107 = vmatpush.bf16.msra.mxu0 %v690
    %2108 = vmatpush.bf16.msra.mxu0 %v686
    %2109 = vmatpush.bf16.msra.mxu0 %v682
    %2110 = vmatmul.bf16.gmra.mxu0 %v1924
    %v2111 = vpop.f32.mrf.mxu0
    %v2112 = vadd.f32 %v2099, %v2111
    %v2113 = vpop.f32.mrf.mxu0
    %2114 = vdwg.mxu0
    %v2115 = vtanh.pop %v2034
    %v2116 = vtanh.pop %v2060
    %v2117 = vtanh.pop %v2086
    %v2118 = vtanh.pop %v2112
    %v2119 = vmul.f32 %v2115, 0.5
    %v2120 = vadd.f32 %v2119, 0.5
    %v2121 = vmul.f32 %v2116, 0.5
    %v2122 = vadd.f32 %v2121, 0.5
    %v2123 = vmul.f32 %v2118, 0.5
    %v2124 = vadd.f32 %v2123, 0.5
    %v2125 = vmul.f32 %v2122, %v1921
    %v2126 = vmul.f32 %v2120, %v2117
    %v2127 = vadd.f32 %v2125, %v2126
    %v2128 = vtanh.pop %v2127
    %v2129 = vmul.f32 %v2124, %v2128
    %v2130 = vpack.c.bf16 %v2129, %v2129
    %s2131 = scalar_lea.vmem [#allocation2], 56
    %v2132 = vld [vmem:[%s2131] sm:$0xff]
    %2133 = vmatpush.bf16.msra.mxu0 %v268
    %2134 = vmatpush.bf16.msra.mxu0 %v264
    %2135 = vmatpush.bf16.msra.mxu0 %v260
    %2136 = vmatpush.bf16.msra.mxu0 %v256
    %2137 = vmatpush.bf16.msra.mxu0 %v252
    %2138 = vmatpush.bf16.msra.mxu0 %v248
    %2139 = vmatpush.bf16.msra.mxu0 %v244
    %2140 = vmatpush.bf16.msra.mxu0 %v240
    %2141 = vmatmul.bf16.gmra.mxu0 %v2010
    %v2142 = vpop.f32.mrf.mxu0
    %v2143 = vadd.f32 0.0, %v2142
    %v2144 = vpop.f32.mrf.mxu0
    %2145 = vdwg.mxu0
    %2146 = vmatpush.bf16.msra.mxu0 %v269
    %2147 = vmatpush.bf16.msra.mxu0 %v265
    %2148 = vmatpush.bf16.msra.mxu0 %v261
    %2149 = vmatpush.bf16.msra.mxu0 %v257
    %2150 = vmatpush.bf16.msra.mxu0 %v253
    %2151 = vmatpush.bf16.msra.mxu0 %v249
    %2152 = vmatpush.bf16.msra.mxu0 %v245
    %2153 = vmatpush.bf16.msra.mxu0 %v241
    %2154 = vmatmul.bf16.gmra.mxu0 %v2010
    %v2155 = vpop.f32.mrf.mxu0
    %v2156 = vadd.f32 0.0, %v2155
    %v2157 = vpop.f32.mrf.mxu0
    %2158 = vdwg.mxu0
    %2159 = vmatpush.bf16.msra.mxu0 %v270
    %2160 = vmatpush.bf16.msra.mxu0 %v266
    %2161 = vmatpush.bf16.msra.mxu0 %v262
    %2162 = vmatpush.bf16.msra.mxu0 %v258
    %2163 = vmatpush.bf16.msra.mxu0 %v254
    %2164 = vmatpush.bf16.msra.mxu0 %v250
    %2165 = vmatpush.bf16.msra.mxu0 %v246
    %2166 = vmatpush.bf16.msra.mxu0 %v242
    %2167 = vmatmul.bf16.gmra.mxu0 %v2010
    %v2168 = vpop.f32.mrf.mxu0
    %v2169 = vadd.f32 0.0, %v2168
    %v2170 = vpop.f32.mrf.mxu0
    %2171 = vdwg.mxu0
    %2172 = vmatpush.bf16.msra.mxu0 %v271
    %2173 = vmatpush.bf16.msra.mxu0 %v267
    %2174 = vmatpush.bf16.msra.mxu0 %v263
    %2175 = vmatpush.bf16.msra.mxu0 %v259
    %2176 = vmatpush.bf16.msra.mxu0 %v255
    %2177 = vmatpush.bf16.msra.mxu0 %v251
    %2178 = vmatpush.bf16.msra.mxu0 %v247
    %2179 = vmatpush.bf16.msra.mxu0 %v243
    %2180 = vmatmul.bf16.gmra.mxu0 %v2010
    %v2181 = vpop.f32.mrf.mxu0
    %v2182 = vadd.f32 0.0, %v2181
    %v2183 = vpop.f32.mrf.mxu0
    %2184 = vdwg.mxu0
    %v2189 = vrot.slane %v2156, 6
    %v2190 = vrot.slane %v2169, 4
    %v2191 = vrot.slane %v2182, 2
    %v2192 = vsel %vm363, %v2143, %v2189
    %v2193 = vsel %vm365, %v2190, %v2191
    %v2194 = vsel %vm367, %v2192, %v2193
    %v2196 = vadd.f32 %v2132, %v2194
    %v2197 = vtanh.pop %v2196
    %v2198 = vmul.f32 %v2197, 0.5
    %v2199 = vadd.f32 %v2198, 0.5
    %v2201 = vrot.slane %v2197, 2
    %v2203 = vmul.f32 %v2201, 0.5
    %v2204 = vadd.f32 %v2203, 0.5
    %v2205 = vrot.slane %v2197, 6
    %v2207 = vmul.f32 %v2205, 0.5
    %v2208 = vadd.f32 %v2207, 0.5
    %v2209 = vmul.f32 %v2204, %v2007
    %v2210 = vrot.slane %v2197, 4
    %v2212 = vmul.f32 %v2199, %v2210
    %v2213 = vadd.f32 %v2209, %v2212
    %v2214 = vtanh.pop %v2213
    %v2215 = vmul.f32 %v2208, %v2214
    %v2216 = vpack.c.bf16 %v2215, %v2215
    %2217 = vmatpush.bf16.msra.mxu0 %v675
    %2218 = vmatpush.bf16.msra.mxu0 %v671
    %2219 = vmatpush.bf16.msra.mxu0 %v667
    %2220 = vmatpush.bf16.msra.mxu0 %v663
    %2221 = vmatpush.bf16.msra.mxu0 %v659
    %2222 = vmatpush.bf16.msra.mxu0 %v655
    %2223 = vmatpush.bf16.msra.mxu0 %v651
    %2224 = vmatpush.bf16.msra.mxu0 %v647
    %2225 = vmatmul.bf16.gmra.mxu0 %v2216
    %v2226 = vpop.f32.mrf.mxu0
    %v2227 = vadd.f32 %v103, %v2226
    %v2228 = vpop.f32.mrf.mxu0
    %2229 = vdwg.mxu0
    %2230 = vmatpush.bf16.msra.mxu0 %v707
    %2231 = vmatpush.bf16.msra.mxu0 %v703
    %2232 = vmatpush.bf16.msra.mxu0 %v699
    %2233 = vmatpush.bf16.msra.mxu0 %v695
    %2234 = vmatpush.bf16.msra.mxu0 %v691
    %2235 = vmatpush.bf16.msra.mxu0 %v687
    %2236 = vmatpush.bf16.msra.mxu0 %v683
    %2237 = vmatpush.bf16.msra.mxu0 %v679
    %2238 = vmatmul.bf16.gmra.mxu0 %v2130
    %v2239 = vpop.f32.mrf.mxu0
    %v2240 = vadd.f32 %v2227, %v2239
    %v2241 = vpop.f32.mrf.mxu0
    %2242 = vdwg.mxu0
    %2243 = vmatpush.bf16.msra.mxu0 %v676
    %2244 = vmatpush.bf16.msra.mxu0 %v672
    %2245 = vmatpush.bf16.msra.mxu0 %v668
    %2246 = vmatpush.bf16.msra.mxu0 %v664
    %2247 = vmatpush.bf16.msra.mxu0 %v660
    %2248 = vmatpush.bf16.msra.mxu0 %v656
    %2249 = vmatpush.bf16.msra.mxu0 %v652
    %2250 = vmatpush.bf16.msra.mxu0 %v648
    %2251 = vmatmul.bf16.gmra.mxu0 %v2216
    %v2252 = vpop.f32.mrf.mxu0
    %v2253 = vadd.f32 %v104, %v2252
    %v2254 = vpop.f32.mrf.mxu0
    %2255 = vdwg.mxu0
    %2256 = vmatpush.bf16.msra.mxu0 %v708
    %2257 = vmatpush.bf16.msra.mxu0 %v704
    %2258 = vmatpush.bf16.msra.mxu0 %v700
    %2259 = vmatpush.bf16.msra.mxu0 %v696
    %2260 = vmatpush.bf16.msra.mxu0 %v692
    %2261 = vmatpush.bf16.msra.mxu0 %v688
    %2262 = vmatpush.bf16.msra.mxu0 %v684
    %2263 = vmatpush.bf16.msra.mxu0 %v680
    %2264 = vmatmul.bf16.gmra.mxu0 %v2130
    %v2265 = vpop.f32.mrf.mxu0
    %v2266 = vadd.f32 %v2253, %v2265
    %v2267 = vpop.f32.mrf.mxu0
    %2268 = vdwg.mxu0
    %2269 = vmatpush.bf16.msra.mxu0 %v677
    %2270 = vmatpush.bf16.msra.mxu0 %v673
    %2271 = vmatpush.bf16.msra.mxu0 %v669
    %2272 = vmatpush.bf16.msra.mxu0 %v665
    %2273 = vmatpush.bf16.msra.mxu0 %v661
    %2274 = vmatpush.bf16.msra.mxu0 %v657
    %2275 = vmatpush.bf16.msra.mxu0 %v653
    %2276 = vmatpush.bf16.msra.mxu0 %v649
    %2277 = vmatmul.bf16.gmra.mxu0 %v2216
    %v2278 = vpop.f32.mrf.mxu0
    %v2279 = vadd.f32 %v105, %v2278
    %v2280 = vpop.f32.mrf.mxu0
    %2281 = vdwg.mxu0
    %2282 = vmatpush.bf16.msra.mxu0 %v709
    %2283 = vmatpush.bf16.msra.mxu0 %v705
    %2284 = vmatpush.bf16.msra.mxu0 %v701
    %2285 = vmatpush.bf16.msra.mxu0 %v697
    %2286 = vmatpush.bf16.msra.mxu0 %v693
    %2287 = vmatpush.bf16.msra.mxu0 %v689
    %2288 = vmatpush.bf16.msra.mxu0 %v685
    %2289 = vmatpush.bf16.msra.mxu0 %v681
    %2290 = vmatmul.bf16.gmra.mxu0 %v2130
    %v2291 = vpop.f32.mrf.mxu0
    %v2292 = vadd.f32 %v2279, %v2291
    %v2293 = vpop.f32.mrf.mxu0
    %2294 = vdwg.mxu0
    %2295 = vmatpush.bf16.msra.mxu0 %v678
    %2296 = vmatpush.bf16.msra.mxu0 %v674
    %2297 = vmatpush.bf16.msra.mxu0 %v670
    %2298 = vmatpush.bf16.msra.mxu0 %v666
    %2299 = vmatpush.bf16.msra.mxu0 %v662
    %2300 = vmatpush.bf16.msra.mxu0 %v658
    %2301 = vmatpush.bf16.msra.mxu0 %v654
    %2302 = vmatpush.bf16.msra.mxu0 %v650
    %2303 = vmatmul.bf16.gmra.mxu0 %v2216
    %v2304 = vpop.f32.mrf.mxu0
    %v2305 = vadd.f32 %v106, %v2304
    %v2306 = vpop.f32.mrf.mxu0
    %2307 = vdwg.mxu0
    %2308 = vmatpush.bf16.msra.mxu0 %v710
    %2309 = vmatpush.bf16.msra.mxu0 %v706
    %2310 = vmatpush.bf16.msra.mxu0 %v702
    %2311 = vmatpush.bf16.msra.mxu0 %v698
    %2312 = vmatpush.bf16.msra.mxu0 %v694
    %2313 = vmatpush.bf16.msra.mxu0 %v690
    %2314 = vmatpush.bf16.msra.mxu0 %v686
    %2315 = vmatpush.bf16.msra.mxu0 %v682
    %2316 = vmatmul.bf16.gmra.mxu0 %v2130
    %v2317 = vpop.f32.mrf.mxu0
    %v2318 = vadd.f32 %v2305, %v2317
    %v2319 = vpop.f32.mrf.mxu0
    %2320 = vdwg.mxu0
    %v2321 = vtanh.pop %v2240
    %v2322 = vtanh.pop %v2266
    %v2323 = vtanh.pop %v2292
    %v2324 = vtanh.pop %v2318
    %v2325 = vmul.f32 %v2321, 0.5
    %v2326 = vadd.f32 %v2325, 0.5
    %v2327 = vmul.f32 %v2322, 0.5
    %v2328 = vadd.f32 %v2327, 0.5
    %v2329 = vmul.f32 %v2324, 0.5
    %v2330 = vadd.f32 %v2329, 0.5
    %v2331 = vmul.f32 %v2328, %v2127
    %v2332 = vmul.f32 %v2326, %v2323
    %v2333 = vadd.f32 %v2331, %v2332
    %v2334 = vtanh.pop %v2333
    %v2335 = vmul.f32 %v2330, %v2334
    %v2336 = vpack.c.bf16 %v2335, %v2335
    %v2337 = vld [vmem:[#allocation10] sm:$0xf]
    %v2338 = vld [vmem:[#allocation10 + $0x4] sm:$0xf]
    %v2339 = vld [vmem:[#allocation10 + $0x8] sm:$0xf]
    %v2340 = vld [vmem:[#allocation10 + $0xc] sm:$0xf]
    %v2341 = vld [vmem:[#allocation10 + $0x10] sm:$0xf]
    %v2342 = vld [vmem:[#allocation10 + $0x14] sm:$0xf]
    %v2343 = vld [vmem:[#allocation10 + $0x18] sm:$0xf]
    %v2344 = vld [vmem:[#allocation10 + $0x1c] sm:$0xf]
    %v2345 = vld [vmem:[#allocation10 + $0x20] sm:$0xf]
    %v2346 = vld [vmem:[#allocation10 + $0x24] sm:$0xf]
    %v2347 = vld [vmem:[#allocation10 + $0x28] sm:$0xf]
    %v2348 = vld [vmem:[#allocation10 + $0x2c] sm:$0xf]
    %v2349 = vld [vmem:[#allocation10 + $0x30] sm:$0xf]
    %v2350 = vld [vmem:[#allocation10 + $0x34] sm:$0xf]
    %v2351 = vld [vmem:[#allocation10 + $0x38] sm:$0xf]
    %v2352 = vld [vmem:[#allocation10 + $0x3c] sm:$0xf]
    %v2353 = vld [vmem:[%s5] sm:$0x1]
    %v2355 = vperm.slane %v2353, 0
    %v2373 = vunpack.c.l.b16 %v2337
    %v2374 = vunpack.c.l.b16 %v2338
    %v2375 = vunpack.c.l.b16 %v2339
    %v2376 = vunpack.c.l.b16 %v2340
    %v2377 = vunpack.c.l.b16 %v2341
    %v2378 = vunpack.c.l.b16 %v2342
    %v2379 = vunpack.c.l.b16 %v2343
    %v2380 = vunpack.c.l.b16 %v2344
    %v2381 = vunpack.c.l.b16 %v2345
    %v2382 = vunpack.c.l.b16 %v2346
    %v2383 = vunpack.c.l.b16 %v2347
    %v2384 = vunpack.c.l.b16 %v2348
    %v2385 = vunpack.c.l.b16 %v2349
    %v2386 = vunpack.c.l.b16 %v2350
    %v2387 = vunpack.c.l.b16 %v2351
    %v2388 = vunpack.c.l.b16 %v2352
    %v2389 = vpack.c.b16 %v2374, %v2373
    %v2390 = vpack.c.b16 %v2376, %v2375
    %v2391 = vpack.c.b16 %v2378, %v2377
    %v2392 = vpack.c.b16 %v2380, %v2379
    %v2393 = vpack.c.b16 %v2382, %v2381
    %v2394 = vpack.c.b16 %v2384, %v2383
    %v2395 = vpack.c.b16 %v2386, %v2385
    %v2396 = vpack.c.b16 %v2388, %v2387
    %2405 = vmatpush.bf16.msra.mxu0 %v2396
    %2406 = vmatpush.bf16.msra.mxu0 %v2395
    %2407 = vmatpush.bf16.msra.mxu0 %v2394
    %2408 = vmatpush.bf16.msra.mxu0 %v2393
    %2409 = vmatpush.bf16.msra.mxu0 %v2392
    %2410 = vmatpush.bf16.msra.mxu0 %v2391
    %2411 = vmatpush.bf16.msra.mxu0 %v2390
    %2412 = vmatpush.bf16.msra.mxu0 %v2389
    %2413 = vmatmul.bf16.gmra.mxu0 %v2336
    %v2414 = vpop.f32.mrf.mxu0
    %v2415 = vadd.f32 %v2355, %v2414
    %v2416 = vpop.f32.mrf.mxu0
    %2417 = vdwg.mxu0
    %2418 = vst [vmem:[#allocation11] sm:$0x3] %v2415
    // Predicated region
    $region46: #{tpu_custom_call.1} parent=1 // pred_check
      _
    $region47: #{tpu_custom_call.1} parent=1 // pred_check_branch
      %2420 = sbr.rel (0) target = $region49
    $region48: #{tpu_custom_call.1} parent=1 // pred_region
      %2422 = vsyncadd [#allocation4], 0
      %s2424 = sshll.u32 [#allocation11], 4
      %s2425 = int_to_ptr.vmem [resolvable:$true] %s2424
      %s2426 = sshll.u32 %s6, 4
      %s2427 = int_to_ptr.hbm [resolvable:$true] %s2426
      %2429 = dma.vmem_to_hbm [thread:$0]  %s2425, 32, %s2427, [#allocation4]
    $region49: #{tpu_custom_call.1} parent=1 // pred_fallthru
      _
    // Predicated region
    $region50: #{tpu_custom_call.1} parent=1 // pred_check
      _
    $region51: #{tpu_custom_call.1} parent=1 // pred_check_branch
      %2431 = sbr.rel (0) target = $region53
    $region52: #{tpu_custom_call.1} parent=1 // pred_region
      %2433 = dma.done [#allocation4], 32
    $region53: #{tpu_custom_call.1} parent=1 // pred_fallthru
      _
    %2434 = vsyncpa [#allocation3], 1
    %2435 = vsyncpa [#allocation6], 1
    %2436 = vsyncpa [#allocation9], 1
    %2437 = vsyncpa [#allocation4], 1

</llo_original>
